<compile_context>
chip_gen: v6e
topology: v6e:2x2x1
jax: 0.10.0
libtpu: 0.0.40
codegen_flags: <defaults>
</compile_context>

<pallas_src>
import functools

import jax
import jax.numpy as jnp
from jax.experimental import pallas as pl
from jax.experimental.pallas import tpu as pltpu


# ----------------------------------------------------------------------------
# Pallas kernels
# ----------------------------------------------------------------------------

def _fused_layer_kernel(adj_w_ref, adj_bin_ref, x_ref, m_ref,
                        wl_ref, wr_ref, b_ref, wrel_ref, wroot_ref, bs_ref,
                        h_ref, s_ref, *, gb):
    """Fused SAGEConv (edge-weighted mean) + SAGPooling score GraphConv (unweighted add)
    for `gb` graphs per grid step.

    Per graph g (bf16 MXU matmuls, f32 accumulation):
      ab    = adj_bin[g] * m[g]                  # mask src columns w/ previous pooling sel
      deg   = ab.sum(-1)                         # count-based mean denominator
      h     = (adj_w[g] @ (x[g] @ Wl)) / max(deg,1) + x[g] @ Wr + b
      score = ab @ (h @ Wrel) + h @ Wroot + bs
    Rows belonging to non-selected / padded dst nodes are finite garbage; they are
    masked out downstream exactly as in the reference model.
    """
    wl = wl_ref[...].astype(jnp.bfloat16)
    wr = wr_ref[...].astype(jnp.bfloat16)
    wrel = wrel_ref[...].astype(jnp.bfloat16)
    wroot = wroot_ref[...].astype(jnp.bfloat16)
    b = b_ref[...]          # [1, H] f32
    bs = bs_ref[...]        # [1, 1] f32

    for g in range(gb):     # static unroll over the graphs of this block
        aw = adj_w_ref[g]                                    # [N, N]   bf16
        mg = m_ref[g].astype(jnp.bfloat16)                   # [1, N]
        ab = adj_bin_ref[g] * mg                             # [N, N]   bf16
        xg = x_ref[g]                                        # [N, Fin] bf16

        deg = jnp.sum(ab.astype(jnp.float32), axis=-1, keepdims=True)    # [N, 1]
        rdeg = pl.reciprocal(jnp.maximum(deg, 1.0), approx=True)

        # SAGEConv: project-then-aggregate (H <= Fin shrinks the NxN matmul feat dim).
        xp = jnp.dot(xg, wl, preferred_element_type=jnp.float32).astype(jnp.bfloat16)
        agg = jnp.dot(aw, xp, preferred_element_type=jnp.float32)        # [N, H]
        hg = (agg * rdeg
              + jnp.dot(xg, wr, preferred_element_type=jnp.float32)
              + b)                                                       # [N, H] f32
        h_ref[g] = hg

        # SAGPooling score GNN (GraphConv, unweighted add aggregation) on fresh h.
        hb = hg.astype(jnp.bfloat16)
        sp = jnp.dot(hb, wrel, preferred_element_type=jnp.float32).astype(jnp.bfloat16)
        sg = (jnp.dot(ab, sp, preferred_element_type=jnp.float32)
              + jnp.dot(hb, wroot, preferred_element_type=jnp.float32)
              + bs)                                                      # [N, 1] f32
        s_ref[g] = sg


def _mlp_kernel(x_ref, w1_ref, b1_ref, w2_ref, b2_ref, out_ref):
    """relu(relu(x @ W1 + b1) @ W2 + b2) over the whole (small) batch."""
    h = jnp.dot(x_ref[...], w1_ref[...], preferred_element_type=jnp.float32) + b1_ref[...]
    h = jnp.maximum(h, 0.0)
    o = jnp.dot(h, w2_ref[...], preferred_element_type=jnp.float32) + b2_ref[...]
    out_ref[...] = jnp.maximum(o, 0.0)


# ----------------------------------------------------------------------------
# Pallas wrappers
# ----------------------------------------------------------------------------

def fused_sage_sag_layer(adj_w_bf, adj_bin_bf, x, mask,
                         wl, wr, b, wrel, wroot, bs, gb):
    """Returns (h [B,N,H] f32, score [B,N] f32) for the fused SAGE+score layer."""
    B, N, fin = x.shape
    H = wl.shape[1]
    assert B % gb == 0
    x_bf = x.astype(jnp.bfloat16)
    m_row = mask.astype(jnp.float32).reshape(B, 1, N)

    h, s = pl.pallas_call(
        functools.partial(_fused_layer_kernel, gb=gb),
        out_shape=(jax.ShapeDtypeStruct((B, N, H), jnp.float32),
                   jax.ShapeDtypeStruct((B, N, 1), jnp.float32)),
        grid=(B // gb,),
        in_specs=[
            pl.BlockSpec((gb, N, N), lambda i: (i, 0, 0)),      # adj_w   (bf16)
            pl.BlockSpec((gb, N, N), lambda i: (i, 0, 0)),      # adj_bin (bf16)
            pl.BlockSpec((gb, N, fin), lambda i: (i, 0, 0)),    # x       (bf16)
            pl.BlockSpec((gb, 1, N), lambda i: (i, 0, 0)),      # src mask (f32)
            pl.BlockSpec((fin, H), lambda i: (0, 0)),           # Wl
            pl.BlockSpec((fin, H), lambda i: (0, 0)),           # Wr
            pl.BlockSpec((1, H), lambda i: (0, 0)),             # b
            pl.BlockSpec((H, 1), lambda i: (0, 0)),             # Wrel
            pl.BlockSpec((H, 1), lambda i: (0, 0)),             # Wroot
            pl.BlockSpec((1, 1), lambda i: (0, 0)),             # bs
        ],
        out_specs=(pl.BlockSpec((gb, N, H), lambda i: (i, 0, 0)),
                   pl.BlockSpec((gb, N, 1), lambda i: (i, 0, 0))),
        compiler_params=pltpu.CompilerParams(
            dimension_semantics=("parallel",)),   # graphs independent (2 TCs on v7x)
    )(adj_w_bf, adj_bin_bf, x_bf, m_row, wl, wr, b, wrel, wroot, bs)
    return h, s[..., 0]


def mlp(x, w1, b1, w2, b2):
    B, din = x.shape
    dh = w1.shape[1]
    dout = w2.shape[1]
    return pl.pallas_call(
        _mlp_kernel,
        out_shape=jax.ShapeDtypeStruct((B, dout), jnp.float32),
        grid=(1,),
        in_specs=[
            pl.BlockSpec((B, din), lambda i: (0, 0)),
            pl.BlockSpec((din, dh), lambda i: (0, 0)),
            pl.BlockSpec((1, dh), lambda i: (0, 0)),
            pl.BlockSpec((dh, dout), lambda i: (0, 0)),
            pl.BlockSpec((1, dout), lambda i: (0, 0)),
        ],
        out_specs=pl.BlockSpec((B, dout), lambda i: (0, 0)),
    )(x, w1, b1, w2, b2)


# ----------------------------------------------------------------------------
# JAX glue (densification, top-k pooling selection, sort pooling)
# ----------------------------------------------------------------------------

def to_dense(x, edge_index, edge_weights, batch, num_graphs, max_nodes):
    """COO graph batch -> dense padded [B, N, ...] tensors (batch assumed sorted)."""
    num_nodes = x.shape[0]
    counts = jnp.bincount(batch, length=num_graphs)
    offsets = jnp.concatenate(
        [jnp.zeros((1,), counts.dtype), jnp.cumsum(counts)[:-1]])
    local = jnp.arange(num_nodes, dtype=jnp.int32) - offsets[batch].astype(jnp.int32)

    xd = jnp.zeros((num_graphs, max_nodes, x.shape[1]), jnp.float32)
    xd = xd.at[batch, local].set(x)
    mask = jnp.zeros((num_graphs, max_nodes), bool).at[batch, local].set(True)

    src, dst = edge_index[0], edge_index[1]
    eb = batch[src]
    adj_bin = jnp.zeros((num_graphs, max_nodes, max_nodes), jnp.float32)
    adj_bin = adj_bin.at[eb, local[dst], local[src]].set(1.0)
    adj_w = jnp.zeros((num_graphs, max_nodes, max_nodes), jnp.float32)
    adj_w = adj_w.at[eb, local[dst], local[src]].add(edge_weights)
    return xd, adj_bin, adj_w, mask


def topk_select(score, mask, ratio=0.5):
    """SAGPooling node selection: keep top ceil(ratio*n) nodes per graph."""
    n = jnp.sum(mask, axis=1)
    k = (n + 1) // 2 if ratio == 0.5 else jnp.ceil(ratio * n).astype(jnp.int32)
    masked = jnp.where(mask, score, -jnp.inf)
    # TODO(synk): per-graph top-k node selection has no clean Pallas equivalent;
    # done with argsort in plain JAX.
    order = jnp.argsort(-masked, axis=1)
    rank = jnp.argsort(order, axis=1)
    return (rank < k[:, None]) & mask


def global_sort_pool(xd, mask, k):
    """Sort nodes per graph by last channel (descending), take k, zero-pad."""
    B, N, D = xd.shape
    key = jnp.where(mask, xd[..., -1], -jnp.inf)
    # TODO(synk): sorting/gather is done in plain JAX (no clean Pallas sort primitive).
    order = jnp.argsort(-key, axis=1)
    gathered = jnp.take_along_axis(xd, order[..., None], axis=1)
    gmask = jnp.take_along_axis(mask, order, axis=1)
    if N >= k:
        top = gathered[:, :k]
        tmask = gmask[:, :k]
    else:
        pad = k - N
        top = jnp.concatenate([gathered, jnp.zeros((B, pad, D), xd.dtype)], axis=1)
        tmask = jnp.concatenate([gmask, jnp.zeros((B, pad), bool)], axis=1)
    top = jnp.where(tmask[..., None], top, 0.0)
    return top.reshape(B, k * D)


# ----------------------------------------------------------------------------
# Parameter init + full forward
# ----------------------------------------------------------------------------

def init_params(key, feat_in, n_classes):
    first_hidden = max(feat_in // 2, 1)
    second_hidden = max(feat_in // 4, 1)
    ks = jax.random.split(key, 16)

    def lin(k, fin, fout):
        return (jax.random.normal(k, (fin, fout), jnp.float32)
                / jnp.sqrt(jnp.float32(fin)))

    return {
        # sage1
        "sage1_wl": lin(ks[0], feat_in, first_hidden),
        "sage1_wr": lin(ks[1], feat_in, first_hidden),
        "sage1_b": jnp.zeros((1, first_hidden), jnp.float32),
        # pooling1 score GNN (GraphConv -> 1)
        "pool1_wrel": lin(ks[2], first_hidden, 1),
        "pool1_wroot": lin(ks[3], first_hidden, 1),
        "pool1_b": jnp.zeros((1, 1), jnp.float32),
        # sage2
        "sage2_wl": lin(ks[4], first_hidden, second_hidden),
        "sage2_wr": lin(ks[5], first_hidden, second_hidden),
        "sage2_b": jnp.zeros((1, second_hidden), jnp.float32),
        # pooling2 score GNN
        "pool2_wrel": lin(ks[6], second_hidden, 1),
        "pool2_wroot": lin(ks[7], second_hidden, 1),
        "pool2_b": jnp.zeros((1, 1), jnp.float32),
        # final MLP: global_sort_pool with k=10, D=second_hidden
        "lin1_w": lin(ks[8], 10 * second_hidden, 100),
        "lin1_b": jnp.zeros((1, 100), jnp.float32),
        "lin2_w": lin(ks[9], 100, n_classes),
        "lin2_b": jnp.zeros((1, n_classes), jnp.float32),
    }


@functools.partial(jax.jit,
                   static_argnames=("num_graphs", "max_nodes", "graphs_per_block"))
def align_sage_forward(params, x, edge_index, edge_weights, batch,
                       num_graphs, max_nodes, graphs_per_block=8):
    gb = max(1, min(graphs_per_block, num_graphs))
    b_pad = ((num_graphs + gb - 1) // gb) * gb     # pad batch to a multiple of gb

    xd, adj_bin, adj_w, mask = to_dense(
        x, edge_index, edge_weights, batch, b_pad, max_nodes)
    # cast the heavy [B,N,N] adjacency once; both layers reuse the bf16 copies
    adj_w_bf = adj_w.astype(jnp.bfloat16)
    adj_bin_bf = adj_bin.astype(jnp.bfloat16)

    # sage1 + pooling1 score (fused Pallas kernel)
    h1, s1 = fused_sage_sag_layer(
        adj_w_bf, adj_bin_bf, xd, mask,
        params["sage1_wl"], params["sage1_wr"], params["sage1_b"],
        params["pool1_wrel"], params["pool1_wroot"], params["pool1_b"], gb)
    sel1 = topk_select(s1, mask)
    h1 = jnp.where(sel1[..., None], h1 * jnp.tanh(s1)[..., None], 0.0)
    # dropout (eval mode -> identity)

    # sage2 + pooling2 score (fused); edge filtering of pooling1 is folded into the
    # kernel via the `sel1` src-column mask (x rows of dropped nodes are already zero).
    h2, s2 = fused_sage_sag_layer(
        adj_w_bf, adj_bin_bf, h1, sel1,
        params["sage2_wl"], params["sage2_wr"], params["sage2_b"],
        params["pool2_wrel"], params["pool2_wroot"], params["pool2_b"], gb)
    sel2 = topk_select(s2, sel1)
    h2 = jnp.where(sel2[..., None], h2 * jnp.tanh(s2)[..., None], 0.0)
    # dropout (eval mode -> identity)

    pooled = global_sort_pool(h2, sel2, k=10)      # [B_pad, 10 * second_hidden]
    out = mlp(pooled, params["lin1_w"], params["lin1_b"],
              params["lin2_w"], params["lin2_b"])
    return out[:num_graphs]


# ----------------------------------------------------------------------------
# main
# ----------------------------------------------------------------------------

if __name__ == "__main__":
    FEAT_IN = 4        # => first_hidden=2, second_hidden=1, lin1 input = 10*1 = 10
    N_CLASSES = 3
    MAX_NODES = 45

    params = init_params(jax.random.PRNGKey(0), FEAT_IN, N_CLASSES)

    key = jax.random.PRNGKey(0)
    kx, kw = jax.random.split(key)

    # 2 graphs: graph 0 has 6 nodes (0..5), graph 1 has 5 nodes (6..10)
    num_nodes = 11
    x = jax.random.normal(kx, (num_nodes, FEAT_IN), jnp.float32)
    src = jnp.array([0, 1, 1, 2, 2, 3, 4, 5, 0, 3, 6, 7, 7, 8, 9, 10], jnp.int32)
    dst = jnp.array([1, 0, 2, 1, 3, 4, 5, 0, 3, 0, 7, 6, 8, 9, 10, 6], jnp.int32)
    edge_index = jnp.stack([src, dst])                       # [2, 16]
    edge_weights = jax.random.uniform(kw, (src.shape[0],), jnp.float32, 0.5, 1.5)
    batch = jnp.array([0] * 6 + [1] * 5, jnp.int32)          # [11]

    out = align_sage_forward(params, x, edge_index, edge_weights, batch,
                             num_graphs=2, max_nodes=MAX_NODES)
    out = jax.block_until_ready(out)
    assert out.shape == (2, N_CLASSES), out.shape
    assert jnp.all(jnp.isfinite(out))
    print("KERNEL_OK")
</pallas_src>

<mosaic_0001>
module attributes {stable_mosaic.version = 11 : i64} {
  func.func private @main(%arg0: i32) attributes {dimension_semantics = [#tpu.dimension_semantics<core_parallel>], iteration_bounds = array<i64: 2>, tpu.core_type = #tpu.core_type<sc_scalar_subcore>, window_params = []} {
    return
  }
}

module attributes {stable_mosaic.version = 11 : i64} {
  func.func private @main(%arg0: i32) attributes {dimension_semantics = [#tpu.dimension_semantics<core_parallel>], iteration_bounds = array<i64: 2>, tpu.core_type = #tpu.core_type<sc_scalar_subcore>, window_params = []} {
    return
  }
}

module attributes {stable_mosaic.version = 11 : i64} {
  func.func @_fused_layer_kernel(%arg0: i32, %arg1: memref<2x45x45xbf16, #tpu.memory_space<vmem>>, %arg2: memref<2x45x45xbf16, #tpu.memory_space<vmem>>, %arg3: memref<2x45x4xbf16, #tpu.memory_space<vmem>>, %arg4: memref<2x1x45xf32, #tpu.memory_space<vmem>>, %arg5: memref<4x2xf32, #tpu.memory_space<vmem>>, %arg6: memref<4x2xf32, #tpu.memory_space<vmem>>, %arg7: memref<1x2xf32, #tpu.memory_space<vmem>>, %arg8: memref<2x1xf32, #tpu.memory_space<vmem>>, %arg9: memref<2x1xf32, #tpu.memory_space<vmem>>, %arg10: memref<1x1xf32, #tpu.memory_space<vmem>>, %arg11: memref<2x45x2xf32, #tpu.memory_space<vmem>>, %arg12: memref<2x45x1xf32, #tpu.memory_space<vmem>>) attributes {dimension_semantics = [#tpu.dimension_semantics<parallel>], iteration_bounds = array<i64: 1>, scalar_prefetch = 0 : i64, scratch_operands = 0 : i64, tpu.core_type = #tpu.core_type<tc>, window_params = [{transform_indices = @transform_0, window_bounds = array<i64: 2, 45, 45>}, {transform_indices = @transform_1, window_bounds = array<i64: 2, 45, 45>}, {transform_indices = @transform_2, window_bounds = array<i64: 2, 45, 4>}, {transform_indices = @transform_3, window_bounds = array<i64: 2, 1, 45>}, {pipeline_mode = #tpu.pipeline_mode<synchronous>, transform_indices = @transform_4, window_bounds = array<i64: 4, 2>}, {pipeline_mode = #tpu.pipeline_mode<synchronous>, transform_indices = @transform_5, window_bounds = array<i64: 4, 2>}, {pipeline_mode = #tpu.pipeline_mode<synchronous>, transform_indices = @transform_6, window_bounds = array<i64: 1, 2>}, {pipeline_mode = #tpu.pipeline_mode<synchronous>, transform_indices = @transform_7, window_bounds = array<i64: 2, 1>}, {pipeline_mode = #tpu.pipeline_mode<synchronous>, transform_indices = @transform_8, window_bounds = array<i64: 2, 1>}, {pipeline_mode = #tpu.pipeline_mode<synchronous>, transform_indices = @transform_9, window_bounds = array<i64: 1, 1>}, {transform_indices = @transform_10, window_bounds = array<i64: 2, 45, 2>}, {transform_indices = @transform_11, window_bounds = array<i64: 2, 45, 1>}]} {
    %c0 = arith.constant 0 : index
    %c0_0 = arith.constant 0 : index
    %0 = vector.load %arg5[%c0, %c0_0] : memref<4x2xf32, #tpu.memory_space<vmem>>, vector<4x2xf32>
    %1 = arith.truncf %0 : vector<4x2xf32> to vector<4x2xbf16>
    %c0_1 = arith.constant 0 : index
    %c0_2 = arith.constant 0 : index
    %2 = vector.load %arg6[%c0_1, %c0_2] : memref<4x2xf32, #tpu.memory_space<vmem>>, vector<4x2xf32>
    %3 = arith.truncf %2 : vector<4x2xf32> to vector<4x2xbf16>
    %c0_3 = arith.constant 0 : index
    %c0_4 = arith.constant 0 : index
    %4 = vector.load %arg8[%c0_3, %c0_4] : memref<2x1xf32, #tpu.memory_space<vmem>>, vector<2x1xf32>
    %5 = arith.truncf %4 : vector<2x1xf32> to vector<2x1xbf16>
    %c0_5 = arith.constant 0 : index
    %c0_6 = arith.constant 0 : index
    %6 = vector.load %arg9[%c0_5, %c0_6] : memref<2x1xf32, #tpu.memory_space<vmem>>, vector<2x1xf32>
    %7 = arith.truncf %6 : vector<2x1xf32> to vector<2x1xbf16>
    %c0_7 = arith.constant 0 : index
    %c0_8 = arith.constant 0 : index
    %8 = vector.load %arg7[%c0_7, %c0_8] : memref<1x2xf32, #tpu.memory_space<vmem>>, vector<1x2xf32>
    %c0_9 = arith.constant 0 : index
    %c0_10 = arith.constant 0 : index
    %9 = vector.load %arg10[%c0_9, %c0_10] : memref<1x1xf32, #tpu.memory_space<vmem>>, vector<1x1xf32>
    %c0_11 = arith.constant 0 : index
    %c0_12 = arith.constant 0 : index
    %c0_13 = arith.constant 0 : index
    %10 = vector.load %arg1[%c0_11, %c0_12, %c0_13] : memref<2x45x45xbf16, #tpu.memory_space<vmem>>, vector<1x45x45xbf16>
    %11 = vector.shape_cast %10 : vector<1x45x45xbf16> to vector<45x45xbf16>
    %c0_14 = arith.constant 0 : index
    %c0_15 = arith.constant 0 : index
    %c0_16 = arith.constant 0 : index
    %12 = vector.load %arg4[%c0_14, %c0_15, %c0_16] : memref<2x1x45xf32, #tpu.memory_space<vmem>>, vector<1x1x45xf32>
    %13 = vector.shape_cast %12 : vector<1x1x45xf32> to vector<1x45xf32>
    %14 = arith.truncf %13 : vector<1x45xf32> to vector<1x45xbf16>
    %c0_17 = arith.constant 0 : index
    %c0_18 = arith.constant 0 : index
    %c0_19 = arith.constant 0 : index
    %15 = vector.load %arg2[%c0_17, %c0_18, %c0_19] : memref<2x45x45xbf16, #tpu.memory_space<vmem>>, vector<1x45x45xbf16>
    %16 = vector.shape_cast %15 : vector<1x45x45xbf16> to vector<45x45xbf16>
    %17 = vector.broadcast %14 : vector<1x45xbf16> to vector<45x45xbf16>
    %18 = arith.mulf %16, %17 : vector<45x45xbf16>
    %c0_20 = arith.constant 0 : index
    %c0_21 = arith.constant 0 : index
    %c0_22 = arith.constant 0 : index
    %19 = vector.load %arg3[%c0_20, %c0_21, %c0_22] : memref<2x45x4xbf16, #tpu.memory_space<vmem>>, vector<1x45x4xbf16>
    %20 = vector.shape_cast %19 : vector<1x45x4xbf16> to vector<45x4xbf16>
    %21 = arith.extf %18 : vector<45x45xbf16> to vector<45x45xf32>
    %cst = arith.constant dense<0.000000e+00> : vector<45xf32>
    %22 = vector.multi_reduction <add>, %21, %cst [1] : vector<45x45xf32> to vector<45xf32>
    %23 = vector.shape_cast %22 : vector<45xf32> to vector<45x1xf32>
    %cst_23 = arith.constant 1.000000e+00 : f32
    %24 = vector.broadcast %cst_23 : f32 to vector<45x1xf32>
    %25 = arith.maximumf %23, %24 : vector<45x1xf32>
    %26 = tpu.reciprocal %25 {approx = true} : vector<45x1xf32> -> vector<45x1xf32>
    %cst_24 = arith.constant dense<0.000000e+00> : vector<45x2xf32>
    %27 = tpu.matmul %20, %1, %cst_24 {dimension_numbers = #tpu.dot_dimension_numbers<[1], [0], [0], [1], [0, 0, 1, 1], [], []>} : vector<45x4xbf16>, vector<4x2xbf16>, vector<45x2xf32> -> vector<45x2xf32>
    %28 = arith.truncf %27 : vector<45x2xf32> to vector<45x2xbf16>
    %cst_25 = arith.constant dense<0.000000e+00> : vector<45x2xf32>
    %29 = tpu.matmul %11, %28, %cst_25 {dimension_numbers = #tpu.dot_dimension_numbers<[1], [0], [0], [1], [0, 0, 1, 1], [], []>} : vector<45x45xbf16>, vector<45x2xbf16>, vector<45x2xf32> -> vector<45x2xf32>
    %30 = vector.broadcast %26 : vector<45x1xf32> to vector<45x2xf32>
    %31 = arith.mulf %29, %30 : vector<45x2xf32>
    %cst_26 = arith.constant dense<0.000000e+00> : vector<45x2xf32>
    %32 = tpu.matmul %20, %3, %cst_26 {dimension_numbers = #tpu.dot_dimension_numbers<[1], [0], [0], [1], [0, 0, 1, 1], [], []>} : vector<45x4xbf16>, vector<4x2xbf16>, vector<45x2xf32> -> vector<45x2xf32>
    %33 = arith.addf %31, %32 : vector<45x2xf32>
    %34 = vector.broadcast %8 : vector<1x2xf32> to vector<45x2xf32>
    %35 = arith.addf %33, %34 : vector<45x2xf32>
    %c0_27 = arith.constant 0 : index
    %c0_28 = arith.constant 0 : index
    %c0_29 = arith.constant 0 : index
    %36 = vector.load %arg11[%c0_27, %c0_28, %c0_29] : memref<2x45x2xf32, #tpu.memory_space<vmem>>, vector<1x45x2xf32>
    %37 = vector.shape_cast %36 : vector<1x45x2xf32> to vector<45x2xf32>
    %38 = vector.shape_cast %35 : vector<45x2xf32> to vector<1x45x2xf32>
    tpu.vector_store %arg11[%c0_27, %c0_28, %c0_29], %38 {strides = array<i32>} : memref<2x45x2xf32, #tpu.memory_space<vmem>>, vector<1x45x2xf32>,
    %39 = arith.truncf %35 : vector<45x2xf32> to vector<45x2xbf16>
    %cst_30 = arith.constant dense<0.000000e+00> : vector<45x1xf32>
    %40 = tpu.matmul %39, %5, %cst_30 {dimension_numbers = #tpu.dot_dimension_numbers<[1], [0], [0], [1], [0, 0, 1, 1], [], []>} : vector<45x2xbf16>, vector<2x1xbf16>, vector<45x1xf32> -> vector<45x1xf32>
    %41 = arith.truncf %40 : vector<45x1xf32> to vector<45x1xbf16>
    %cst_31 = arith.constant dense<0.000000e+00> : vector<45x1xf32>
    %42 = tpu.matmul %18, %41, %cst_31 {dimension_numbers = #tpu.dot_dimension_numbers<[1], [0], [0], [1], [0, 0, 1, 1], [], []>} : vector<45x45xbf16>, vector<45x1xbf16>, vector<45x1xf32> -> vector<45x1xf32>
    %cst_32 = arith.constant dense<0.000000e+00> : vector<45x1xf32>
    %43 = tpu.matmul %39, %7, %cst_32 {dimension_numbers = #tpu.dot_dimension_numbers<[1], [0], [0], [1], [0, 0, 1, 1], [], []>} : vector<45x2xbf16>, vector<2x1xbf16>, vector<45x1xf32> -> vector<45x1xf32>
    %44 = arith.addf %42, %43 : vector<45x1xf32>
    %45 = vector.broadcast %9 : vector<1x1xf32> to vector<45x1xf32>
    %46 = arith.addf %44, %45 : vector<45x1xf32>
    %c0_33 = arith.constant 0 : index
    %c0_34 = arith.constant 0 : index
    %c0_35 = arith.constant 0 : index
    %47 = vector.load %arg12[%c0_33, %c0_34, %c0_35] : memref<2x45x1xf32, #tpu.memory_space<vmem>>, vector<1x45x1xf32>
    %48 = vector.shape_cast %47 : vector<1x45x1xf32> to vector<45x1xf32>
    %49 = vector.shape_cast %46 : vector<45x1xf32> to vector<1x45x1xf32>
    tpu.vector_store %arg12[%c0_33, %c0_34, %c0_35], %49 {strides = array<i32>} : memref<2x45x1xf32, #tpu.memory_space<vmem>>, vector<1x45x1xf32>,
    %c1 = arith.constant 1 : index
    %c0_36 = arith.constant 0 : index
    %c0_37 = arith.constant 0 : index
    %50 = vector.load %arg1[%c1, %c0_36, %c0_37] : memref<2x45x45xbf16, #tpu.memory_space<vmem>>, vector<1x45x45xbf16>
    %51 = vector.shape_cast %50 : vector<1x45x45xbf16> to vector<45x45xbf16>
    %c1_38 = arith.constant 1 : index
    %c0_39 = arith.constant 0 : index
    %c0_40 = arith.constant 0 : index
    %52 = vector.load %arg4[%c1_38, %c0_39, %c0_40] : memref<2x1x45xf32, #tpu.memory_space<vmem>>, vector<1x1x45xf32>
    %53 = vector.shape_cast %52 : vector<1x1x45xf32> to vector<1x45xf32>
    %54 = arith.truncf %53 : vector<1x45xf32> to vector<1x45xbf16>
    %c1_41 = arith.constant 1 : index
    %c0_42 = arith.constant 0 : index
    %c0_43 = arith.constant 0 : index
    %55 = vector.load %arg2[%c1_41, %c0_42, %c0_43] : memref<2x45x45xbf16, #tpu.memory_space<vmem>>, vector<1x45x45xbf16>
    %56 = vector.shape_cast %55 : vector<1x45x45xbf16> to vector<45x45xbf16>
    %57 = vector.broadcast %54 : vector<1x45xbf16> to vector<45x45xbf16>
    %58 = arith.mulf %56, %57 : vector<45x45xbf16>
    %c1_44 = arith.constant 1 : index
    %c0_45 = arith.constant 0 : index
    %c0_46 = arith.constant 0 : index
    %59 = vector.load %arg3[%c1_44, %c0_45, %c0_46] : memref<2x45x4xbf16, #tpu.memory_space<vmem>>, vector<1x45x4xbf16>
    %60 = vector.shape_cast %59 : vector<1x45x4xbf16> to vector<45x4xbf16>
    %61 = arith.extf %58 : vector<45x45xbf16> to vector<45x45xf32>
    %cst_47 = arith.constant dense<0.000000e+00> : vector<45xf32>
    %62 = vector.multi_reduction <add>, %61, %cst_47 [1] : vector<45x45xf32> to vector<45xf32>
    %63 = vector.shape_cast %62 : vector<45xf32> to vector<45x1xf32>
    %cst_48 = arith.constant 1.000000e+00 : f32
    %64 = vector.broadcast %cst_48 : f32 to vector<45x1xf32>
    %65 = arith.maximumf %63, %64 : vector<45x1xf32>
    %66 = tpu.reciprocal %65 {approx = true} : vector<45x1xf32> -> vector<45x1xf32>
    %cst_49 = arith.constant dense<0.000000e+00> : vector<45x2xf32>
    %67 = tpu.matmul %60, %1, %cst_49 {dimension_numbers = #tpu.dot_dimension_numbers<[1], [0], [0], [1], [0, 0, 1, 1], [], []>} : vector<45x4xbf16>, vector<4x2xbf16>, vector<45x2xf32> -> vector<45x2xf32>
    %68 = arith.truncf %67 : vector<45x2xf32> to vector<45x2xbf16>
    %cst_50 = arith.constant dense<0.000000e+00> : vector<45x2xf32>
    %69 = tpu.matmul %51, %68, %cst_50 {dimension_numbers = #tpu.dot_dimension_numbers<[1], [0], [0], [1], [0, 0, 1, 1], [], []>} : vector<45x45xbf16>, vector<45x2xbf16>, vector<45x2xf32> -> vector<45x2xf32>
    %70 = vector.broadcast %66 : vector<45x1xf32> to vector<45x2xf32>
    %71 = arith.mulf %69, %70 : vector<45x2xf32>
    %cst_51 = arith.constant dense<0.000000e+00> : vector<45x2xf32>
    %72 = tpu.matmul %60, %3, %cst_51 {dimension_numbers = #tpu.dot_dimension_numbers<[1], [0], [0], [1], [0, 0, 1, 1], [], []>} : vector<45x4xbf16>, vector<4x2xbf16>, vector<45x2xf32> -> vector<45x2xf32>
    %73 = arith.addf %71, %72 : vector<45x2xf32>
    %74 = vector.broadcast %8 : vector<1x2xf32> to vector<45x2xf32>
    %75 = arith.addf %73, %74 : vector<45x2xf32>
    %c1_52 = arith.constant 1 : index
    %c0_53 = arith.constant 0 : index
    %c0_54 = arith.constant 0 : index
    %76 = vector.load %arg11[%c1_52, %c0_53, %c0_54] : memref<2x45x2xf32, #tpu.memory_space<vmem>>, vector<1x45x2xf32>
    %77 = vector.shape_cast %76 : vector<1x45x2xf32> to vector<45x2xf32>
    %78 = vector.shape_cast %75 : vector<45x2xf32> to vector<1x45x2xf32>
    tpu.vector_store %arg11[%c1_52, %c0_53, %c0_54], %78 {strides = array<i32>} : memref<2x45x2xf32, #tpu.memory_space<vmem>>, vector<1x45x2xf32>,
    %79 = arith.truncf %75 : vector<45x2xf32> to vector<45x2xbf16>
    %cst_55 = arith.constant dense<0.000000e+00> : vector<45x1xf32>
    %80 = tpu.matmul %79, %5, %cst_55 {dimension_numbers = #tpu.dot_dimension_numbers<[1], [0], [0], [1], [0, 0, 1, 1], [], []>} : vector<45x2xbf16>, vector<2x1xbf16>, vector<45x1xf32> -> vector<45x1xf32>
    %81 = arith.truncf %80 : vector<45x1xf32> to vector<45x1xbf16>
    %cst_56 = arith.constant dense<0.000000e+00> : vector<45x1xf32>
    %82 = tpu.matmul %58, %81, %cst_56 {dimension_numbers = #tpu.dot_dimension_numbers<[1], [0], [0], [1], [0, 0, 1, 1], [], []>} : vector<45x45xbf16>, vector<45x1xbf16>, vector<45x1xf32> -> vector<45x1xf32>
    %cst_57 = arith.constant dense<0.000000e+00> : vector<45x1xf32>
    %83 = tpu.matmul %79, %7, %cst_57 {dimension_numbers = #tpu.dot_dimension_numbers<[1], [0], [0], [1], [0, 0, 1, 1], [], []>} : vector<45x2xbf16>, vector<2x1xbf16>, vector<45x1xf32> -> vector<45x1xf32>
    %84 = arith.addf %82, %83 : vector<45x1xf32>
    %85 = vector.broadcast %9 : vector<1x1xf32> to vector<45x1xf32>
    %86 = arith.addf %84, %85 : vector<45x1xf32>
    %c1_58 = arith.constant 1 : index
    %c0_59 = arith.constant 0 : index
    %c0_60 = arith.constant 0 : index
    %87 = vector.load %arg12[%c1_58, %c0_59, %c0_60] : memref<2x45x1xf32, #tpu.memory_space<vmem>>, vector<1x45x1xf32>
    %88 = vector.shape_cast %87 : vector<1x45x1xf32> to vector<45x1xf32>
    %89 = vector.shape_cast %86 : vector<45x1xf32> to vector<1x45x1xf32>
    tpu.vector_store %arg12[%c1_58, %c0_59, %c0_60], %89 {strides = array<i32>} : memref<2x45x1xf32, #tpu.memory_space<vmem>>, vector<1x45x1xf32>,
    return
  }
  func.func @transform_0(%arg0: i32) -> (i32, i32, i32) {
    %c0_i32 = arith.constant 0 : i32
    %c0_i32_0 = arith.constant 0 : i32
    %c0_i32_1 = arith.constant 0 : i32
    return %arg0, %c0_i32, %c0_i32_0 : i32, i32, i32
  }
  func.func @transform_1(%arg0: i32) -> (i32, i32, i32) {
    %c0_i32 = arith.constant 0 : i32
    %c0_i32_0 = arith.constant 0 : i32
    %c0_i32_1 = arith.constant 0 : i32
    return %arg0, %c0_i32, %c0_i32_0 : i32, i32, i32
  }
  func.func @transform_2(%arg0: i32) -> (i32, i32, i32) {
    %c0_i32 = arith.constant 0 : i32
    %c0_i32_0 = arith.constant 0 : i32
    %c0_i32_1 = arith.constant 0 : i32
    return %arg0, %c0_i32, %c0_i32_0 : i32, i32, i32
  }
  func.func @transform_3(%arg0: i32) -> (i32, i32, i32) {
    %c0_i32 = arith.constant 0 : i32
    %c0_i32_0 = arith.constant 0 : i32
    %c0_i32_1 = arith.constant 0 : i32
    return %arg0, %c0_i32, %c0_i32_0 : i32, i32, i32
  }
  func.func @transform_4(%arg0: i32) -> (i32, i32) {
    %c0_i32 = arith.constant 0 : i32
    %c0_i32_0 = arith.constant 0 : i32
    %c0_i32_1 = arith.constant 0 : i32
    return %c0_i32, %c0_i32_0 : i32, i32
  }
  func.func @transform_5(%arg0: i32) -> (i32, i32) {
    %c0_i32 = arith.constant 0 : i32
    %c0_i32_0 = arith.constant 0 : i32
    %c0_i32_1 = arith.constant 0 : i32
    return %c0_i32, %c0_i32_0 : i32, i32
  }
  func.func @transform_6(%arg0: i32) -> (i32, i32) {
    %c0_i32 = arith.constant 0 : i32
    %c0_i32_0 = arith.constant 0 : i32
    %c0_i32_1 = arith.constant 0 : i32
    return %c0_i32, %c0_i32_0 : i32, i32
  }
  func.func @transform_7(%arg0: i32) -> (i32, i32) {
    %c0_i32 = arith.constant 0 : i32
    %c0_i32_0 = arith.constant 0 : i32
    %c0_i32_1 = arith.constant 0 : i32
    return %c0_i32, %c0_i32_0 : i32, i32
  }
  func.func @transform_8(%arg0: i32) -> (i32, i32) {
    %c0_i32 = arith.constant 0 : i32
    %c0_i32_0 = arith.constant 0 : i32
    %c0_i32_1 = arith.constant 0 : i32
    return %c0_i32, %c0_i32_0 : i32, i32
  }
  func.func @transform_9(%arg0: i32) -> (i32, i32) {
    %c0_i32 = arith.constant 0 : i32
    %c0_i32_0 = arith.constant 0 : i32
    %c0_i32_1 = arith.constant 0 : i32
    return %c0_i32, %c0_i32_0 : i32, i32
  }
  func.func @transform_10(%arg0: i32) -> (i32, i32, i32) {
    %c0_i32 = arith.constant 0 : i32
    %c0_i32_0 = arith.constant 0 : i32
    %c0_i32_1 = arith.constant 0 : i32
    return %arg0, %c0_i32, %c0_i32_0 : i32, i32, i32
  }
  func.func @transform_11(%arg0: i32) -> (i32, i32, i32) {
    %c0_i32 = arith.constant 0 : i32
    %c0_i32_0 = arith.constant 0 : i32
    %c0_i32_1 = arith.constant 0 : i32
    return %arg0, %c0_i32, %c0_i32_0 : i32, i32, i32
  }
}

module attributes {stable_mosaic.version = 11 : i64} {
  func.func @_fused_layer_kernel(%arg0: i32, %arg1: memref<2x45x45xbf16, #tpu.memory_space<vmem>>, %arg2: memref<2x45x45xbf16, #tpu.memory_space<vmem>>, %arg3: memref<2x45x2xbf16, #tpu.memory_space<vmem>>, %arg4: memref<2x1x45xf32, #tpu.memory_space<vmem>>, %arg5: memref<2x1xf32, #tpu.memory_space<vmem>>, %arg6: memref<2x1xf32, #tpu.memory_space<vmem>>, %arg7: memref<1x1xf32, #tpu.memory_space<vmem>>, %arg8: memref<1x1xf32, #tpu.memory_space<vmem>>, %arg9: memref<1x1xf32, #tpu.memory_space<vmem>>, %arg10: memref<1x1xf32, #tpu.memory_space<vmem>>, %arg11: memref<2x45x1xf32, #tpu.memory_space<vmem>>, %arg12: memref<2x45x1xf32, #tpu.memory_space<vmem>>) attributes {dimension_semantics = [#tpu.dimension_semantics<parallel>], iteration_bounds = array<i64: 1>, scalar_prefetch = 0 : i64, scratch_operands = 0 : i64, tpu.core_type = #tpu.core_type<tc>, window_params = [{transform_indices = @transform_0, window_bounds = array<i64: 2, 45, 45>}, {transform_indices = @transform_1, window_bounds = array<i64: 2, 45, 45>}, {transform_indices = @transform_2, window_bounds = array<i64: 2, 45, 2>}, {transform_indices = @transform_3, window_bounds = array<i64: 2, 1, 45>}, {pipeline_mode = #tpu.pipeline_mode<synchronous>, transform_indices = @transform_4, window_bounds = array<i64: 2, 1>}, {pipeline_mode = #tpu.pipeline_mode<synchronous>, transform_indices = @transform_5, window_bounds = array<i64: 2, 1>}, {pipeline_mode = #tpu.pipeline_mode<synchronous>, transform_indices = @transform_6, window_bounds = array<i64: 1, 1>}, {pipeline_mode = #tpu.pipeline_mode<synchronous>, transform_indices = @transform_7, window_bounds = array<i64: 1, 1>}, {pipeline_mode = #tpu.pipeline_mode<synchronous>, transform_indices = @transform_8, window_bounds = array<i64: 1, 1>}, {pipeline_mode = #tpu.pipeline_mode<synchronous>, transform_indices = @transform_9, window_bounds = array<i64: 1, 1>}, {transform_indices = @transform_10, window_bounds = array<i64: 2, 45, 1>}, {transform_indices = @transform_11, window_bounds = array<i64: 2, 45, 1>}]} {
    %c0 = arith.constant 0 : index
    %c0_0 = arith.constant 0 : index
    %0 = vector.load %arg5[%c0, %c0_0] : memref<2x1xf32, #tpu.memory_space<vmem>>, vector<2x1xf32>
    %1 = arith.truncf %0 : vector<2x1xf32> to vector<2x1xbf16>
    %c0_1 = arith.constant 0 : index
    %c0_2 = arith.constant 0 : index
    %2 = vector.load %arg6[%c0_1, %c0_2] : memref<2x1xf32, #tpu.memory_space<vmem>>, vector<2x1xf32>
    %3 = arith.truncf %2 : vector<2x1xf32> to vector<2x1xbf16>
    %c0_3 = arith.constant 0 : index
    %c0_4 = arith.constant 0 : index
    %4 = vector.load %arg8[%c0_3, %c0_4] : memref<1x1xf32, #tpu.memory_space<vmem>>, vector<1x1xf32>
    %5 = arith.truncf %4 : vector<1x1xf32> to vector<1x1xbf16>
    %c0_5 = arith.constant 0 : index
    %c0_6 = arith.constant 0 : index
    %6 = vector.load %arg9[%c0_5, %c0_6] : memref<1x1xf32, #tpu.memory_space<vmem>>, vector<1x1xf32>
    %7 = arith.truncf %6 : vector<1x1xf32> to vector<1x1xbf16>
    %c0_7 = arith.constant 0 : index
    %c0_8 = arith.constant 0 : index
    %8 = vector.load %arg7[%c0_7, %c0_8] : memref<1x1xf32, #tpu.memory_space<vmem>>, vector<1x1xf32>
    %c0_9 = arith.constant 0 : index
    %c0_10 = arith.constant 0 : index
    %9 = vector.load %arg10[%c0_9, %c0_10] : memref<1x1xf32, #tpu.memory_space<vmem>>, vector<1x1xf32>
    %c0_11 = arith.constant 0 : index
    %c0_12 = arith.constant 0 : index
    %c0_13 = arith.constant 0 : index
    %10 = vector.load %arg1[%c0_11, %c0_12, %c0_13] : memref<2x45x45xbf16, #tpu.memory_space<vmem>>, vector<1x45x45xbf16>
    %11 = vector.shape_cast %10 : vector<1x45x45xbf16> to vector<45x45xbf16>
    %c0_14 = arith.constant 0 : index
    %c0_15 = arith.constant 0 : index
    %c0_16 = arith.constant 0 : index
    %12 = vector.load %arg4[%c0_14, %c0_15, %c0_16] : memref<2x1x45xf32, #tpu.memory_space<vmem>>, vector<1x1x45xf32>
    %13 = vector.shape_cast %12 : vector<1x1x45xf32> to vector<1x45xf32>
    %14 = arith.truncf %13 : vector<1x45xf32> to vector<1x45xbf16>
    %c0_17 = arith.constant 0 : index
    %c0_18 = arith.constant 0 : index
    %c0_19 = arith.constant 0 : index
    %15 = vector.load %arg2[%c0_17, %c0_18, %c0_19] : memref<2x45x45xbf16, #tpu.memory_space<vmem>>, vector<1x45x45xbf16>
    %16 = vector.shape_cast %15 : vector<1x45x45xbf16> to vector<45x45xbf16>
    %17 = vector.broadcast %14 : vector<1x45xbf16> to vector<45x45xbf16>
    %18 = arith.mulf %16, %17 : vector<45x45xbf16>
    %c0_20 = arith.constant 0 : index
    %c0_21 = arith.constant 0 : index
    %c0_22 = arith.constant 0 : index
    %19 = vector.load %arg3[%c0_20, %c0_21, %c0_22] : memref<2x45x2xbf16, #tpu.memory_space<vmem>>, vector<1x45x2xbf16>
    %20 = vector.shape_cast %19 : vector<1x45x2xbf16> to vector<45x2xbf16>
    %21 = arith.extf %18 : vector<45x45xbf16> to vector<45x45xf32>
    %cst = arith.constant dense<0.000000e+00> : vector<45xf32>
    %22 = vector.multi_reduction <add>, %21, %cst [1] : vector<45x45xf32> to vector<45xf32>
    %23 = vector.shape_cast %22 : vector<45xf32> to vector<45x1xf32>
    %cst_23 = arith.constant 1.000000e+00 : f32
    %24 = vector.broadcast %cst_23 : f32 to vector<45x1xf32>
    %25 = arith.maximumf %23, %24 : vector<45x1xf32>
    %26 = tpu.reciprocal %25 {approx = true} : vector<45x1xf32> -> vector<45x1xf32>
    %cst_24 = arith.constant dense<0.000000e+00> : vector<45x1xf32>
    %27 = tpu.matmul %20, %1, %cst_24 {dimension_numbers = #tpu.dot_dimension_numbers<[1], [0], [0], [1], [0, 0, 1, 1], [], []>} : vector<45x2xbf16>, vector<2x1xbf16>, vector<45x1xf32> -> vector<45x1xf32>
    %28 = arith.truncf %27 : vector<45x1xf32> to vector<45x1xbf16>
    %cst_25 = arith.constant dense<0.000000e+00> : vector<45x1xf32>
    %29 = tpu.matmul %11, %28, %cst_25 {dimension_numbers = #tpu.dot_dimension_numbers<[1], [0], [0], [1], [0, 0, 1, 1], [], []>} : vector<45x45xbf16>, vector<45x1xbf16>, vector<45x1xf32> -> vector<45x1xf32>
    %30 = arith.mulf %29, %26 : vector<45x1xf32>
    %cst_26 = arith.constant dense<0.000000e+00> : vector<45x1xf32>
    %31 = tpu.matmul %20, %3, %cst_26 {dimension_numbers = #tpu.dot_dimension_numbers<[1], [0], [0], [1], [0, 0, 1, 1], [], []>} : vector<45x2xbf16>, vector<2x1xbf16>, vector<45x1xf32> -> vector<45x1xf32>
    %32 = arith.addf %30, %31 : vector<45x1xf32>
    %33 = vector.broadcast %8 : vector<1x1xf32> to vector<45x1xf32>
    %34 = arith.addf %32, %33 : vector<45x1xf32>
    %c0_27 = arith.constant 0 : index
    %c0_28 = arith.constant 0 : index
    %c0_29 = arith.constant 0 : index
    %35 = vector.load %arg11[%c0_27, %c0_28, %c0_29] : memref<2x45x1xf32, #tpu.memory_space<vmem>>, vector<1x45x1xf32>
    %36 = vector.shape_cast %35 : vector<1x45x1xf32> to vector<45x1xf32>
    %37 = vector.shape_cast %34 : vector<45x1xf32> to vector<1x45x1xf32>
    tpu.vector_store %arg11[%c0_27, %c0_28, %c0_29], %37 {strides = array<i32>} : memref<2x45x1xf32, #tpu.memory_space<vmem>>, vector<1x45x1xf32>,
    %38 = arith.truncf %34 : vector<45x1xf32> to vector<45x1xbf16>
    %cst_30 = arith.constant dense<0.000000e+00> : vector<45x1xf32>
    %39 = tpu.matmul %38, %5, %cst_30 {dimension_numbers = #tpu.dot_dimension_numbers<[1], [0], [0], [1], [0, 0, 1, 1], [], []>} : vector<45x1xbf16>, vector<1x1xbf16>, vector<45x1xf32> -> vector<45x1xf32>
    %40 = arith.truncf %39 : vector<45x1xf32> to vector<45x1xbf16>
    %cst_31 = arith.constant dense<0.000000e+00> : vector<45x1xf32>
    %41 = tpu.matmul %18, %40, %cst_31 {dimension_numbers = #tpu.dot_dimension_numbers<[1], [0], [0], [1], [0, 0, 1, 1], [], []>} : vector<45x45xbf16>, vector<45x1xbf16>, vector<45x1xf32> -> vector<45x1xf32>
    %cst_32 = arith.constant dense<0.000000e+00> : vector<45x1xf32>
    %42 = tpu.matmul %38, %7, %cst_32 {dimension_numbers = #tpu.dot_dimension_numbers<[1], [0], [0], [1], [0, 0, 1, 1], [], []>} : vector<45x1xbf16>, vector<1x1xbf16>, vector<45x1xf32> -> vector<45x1xf32>
    %43 = arith.addf %41, %42 : vector<45x1xf32>
    %44 = vector.broadcast %9 : vector<1x1xf32> to vector<45x1xf32>
    %45 = arith.addf %43, %44 : vector<45x1xf32>
    %c0_33 = arith.constant 0 : index
    %c0_34 = arith.constant 0 : index
    %c0_35 = arith.constant 0 : index
    %46 = vector.load %arg12[%c0_33, %c0_34, %c0_35] : memref<2x45x1xf32, #tpu.memory_space<vmem>>, vector<1x45x1xf32>
    %47 = vector.shape_cast %46 : vector<1x45x1xf32> to vector<45x1xf32>
    %48 = vector.shape_cast %45 : vector<45x1xf32> to vector<1x45x1xf32>
    tpu.vector_store %arg12[%c0_33, %c0_34, %c0_35], %48 {strides = array<i32>} : memref<2x45x1xf32, #tpu.memory_space<vmem>>, vector<1x45x1xf32>,
    %c1 = arith.constant 1 : index
    %c0_36 = arith.constant 0 : index
    %c0_37 = arith.constant 0 : index
    %49 = vector.load %arg1[%c1, %c0_36, %c0_37] : memref<2x45x45xbf16, #tpu.memory_space<vmem>>, vector<1x45x45xbf16>
    %50 = vector.shape_cast %49 : vector<1x45x45xbf16> to vector<45x45xbf16>
    %c1_38 = arith.constant 1 : index
    %c0_39 = arith.constant 0 : index
    %c0_40 = arith.constant 0 : index
    %51 = vector.load %arg4[%c1_38, %c0_39, %c0_40] : memref<2x1x45xf32, #tpu.memory_space<vmem>>, vector<1x1x45xf32>
    %52 = vector.shape_cast %51 : vector<1x1x45xf32> to vector<1x45xf32>
    %53 = arith.truncf %52 : vector<1x45xf32> to vector<1x45xbf16>
    %c1_41 = arith.constant 1 : index
    %c0_42 = arith.constant 0 : index
    %c0_43 = arith.constant 0 : index
    %54 = vector.load %arg2[%c1_41, %c0_42, %c0_43] : memref<2x45x45xbf16, #tpu.memory_space<vmem>>, vector<1x45x45xbf16>
    %55 = vector.shape_cast %54 : vector<1x45x45xbf16> to vector<45x45xbf16>
    %56 = vector.broadcast %53 : vector<1x45xbf16> to vector<45x45xbf16>
    %57 = arith.mulf %55, %56 : vector<45x45xbf16>
    %c1_44 = arith.constant 1 : index
    %c0_45 = arith.constant 0 : index
    %c0_46 = arith.constant 0 : index
    %58 = vector.load %arg3[%c1_44, %c0_45, %c0_46] : memref<2x45x2xbf16, #tpu.memory_space<vmem>>, vector<1x45x2xbf16>
    %59 = vector.shape_cast %58 : vector<1x45x2xbf16> to vector<45x2xbf16>
    %60 = arith.extf %57 : vector<45x45xbf16> to vector<45x45xf32>
    %cst_47 = arith.constant dense<0.000000e+00> : vector<45xf32>
    %61 = vector.multi_reduction <add>, %60, %cst_47 [1] : vector<45x45xf32> to vector<45xf32>
    %62 = vector.shape_cast %61 : vector<45xf32> to vector<45x1xf32>
    %cst_48 = arith.constant 1.000000e+00 : f32
    %63 = vector.broadcast %cst_48 : f32 to vector<45x1xf32>
    %64 = arith.maximumf %62, %63 : vector<45x1xf32>
    %65 = tpu.reciprocal %64 {approx = true} : vector<45x1xf32> -> vector<45x1xf32>
    %cst_49 = arith.constant dense<0.000000e+00> : vector<45x1xf32>
    %66 = tpu.matmul %59, %1, %cst_49 {dimension_numbers = #tpu.dot_dimension_numbers<[1], [0], [0], [1], [0, 0, 1, 1], [], []>} : vector<45x2xbf16>, vector<2x1xbf16>, vector<45x1xf32> -> vector<45x1xf32>
    %67 = arith.truncf %66 : vector<45x1xf32> to vector<45x1xbf16>
    %cst_50 = arith.constant dense<0.000000e+00> : vector<45x1xf32>
    %68 = tpu.matmul %50, %67, %cst_50 {dimension_numbers = #tpu.dot_dimension_numbers<[1], [0], [0], [1], [0, 0, 1, 1], [], []>} : vector<45x45xbf16>, vector<45x1xbf16>, vector<45x1xf32> -> vector<45x1xf32>
    %69 = arith.mulf %68, %65 : vector<45x1xf32>
    %cst_51 = arith.constant dense<0.000000e+00> : vector<45x1xf32>
    %70 = tpu.matmul %59, %3, %cst_51 {dimension_numbers = #tpu.dot_dimension_numbers<[1], [0], [0], [1], [0, 0, 1, 1], [], []>} : vector<45x2xbf16>, vector<2x1xbf16>, vector<45x1xf32> -> vector<45x1xf32>
    %71 = arith.addf %69, %70 : vector<45x1xf32>
    %72 = vector.broadcast %8 : vector<1x1xf32> to vector<45x1xf32>
    %73 = arith.addf %71, %72 : vector<45x1xf32>
    %c1_52 = arith.constant 1 : index
    %c0_53 = arith.constant 0 : index
    %c0_54 = arith.constant 0 : index
    %74 = vector.load %arg11[%c1_52, %c0_53, %c0_54] : memref<2x45x1xf32, #tpu.memory_space<vmem>>, vector<1x45x1xf32>
    %75 = vector.shape_cast %74 : vector<1x45x1xf32> to vector<45x1xf32>
    %76 = vector.shape_cast %73 : vector<45x1xf32> to vector<1x45x1xf32>
    tpu.vector_store %arg11[%c1_52, %c0_53, %c0_54], %76 {strides = array<i32>} : memref<2x45x1xf32, #tpu.memory_space<vmem>>, vector<1x45x1xf32>,
    %77 = arith.truncf %73 : vector<45x1xf32> to vector<45x1xbf16>
    %cst_55 = arith.constant dense<0.000000e+00> : vector<45x1xf32>
    %78 = tpu.matmul %77, %5, %cst_55 {dimension_numbers = #tpu.dot_dimension_numbers<[1], [0], [0], [1], [0, 0, 1, 1], [], []>} : vector<45x1xbf16>, vector<1x1xbf16>, vector<45x1xf32> -> vector<45x1xf32>
    %79 = arith.truncf %78 : vector<45x1xf32> to vector<45x1xbf16>
    %cst_56 = arith.constant dense<0.000000e+00> : vector<45x1xf32>
    %80 = tpu.matmul %57, %79, %cst_56 {dimension_numbers = #tpu.dot_dimension_numbers<[1], [0], [0], [1], [0, 0, 1, 1], [], []>} : vector<45x45xbf16>, vector<45x1xbf16>, vector<45x1xf32> -> vector<45x1xf32>
    %cst_57 = arith.constant dense<0.000000e+00> : vector<45x1xf32>
    %81 = tpu.matmul %77, %7, %cst_57 {dimension_numbers = #tpu.dot_dimension_numbers<[1], [0], [0], [1], [0, 0, 1, 1], [], []>} : vector<45x1xbf16>, vector<1x1xbf16>, vector<45x1xf32> -> vector<45x1xf32>
    %82 = arith.addf %80, %81 : vector<45x1xf32>
    %83 = vector.broadcast %9 : vector<1x1xf32> to vector<45x1xf32>
    %84 = arith.addf %82, %83 : vector<45x1xf32>
    %c1_58 = arith.constant 1 : index
    %c0_59 = arith.constant 0 : index
    %c0_60 = arith.constant 0 : index
    %85 = vector.load %arg12[%c1_58, %c0_59, %c0_60] : memref<2x45x1xf32, #tpu.memory_space<vmem>>, vector<1x45x1xf32>
    %86 = vector.shape_cast %85 : vector<1x45x1xf32> to vector<45x1xf32>
    %87 = vector.shape_cast %84 : vector<45x1xf32> to vector<1x45x1xf32>
    tpu.vector_store %arg12[%c1_58, %c0_59, %c0_60], %87 {strides = array<i32>} : memref<2x45x1xf32, #tpu.memory_space<vmem>>, vector<1x45x1xf32>,
    return
  }
  func.func @transform_0(%arg0: i32) -> (i32, i32, i32) {
    %c0_i32 = arith.constant 0 : i32
    %c0_i32_0 = arith.constant 0 : i32
    %c0_i32_1 = arith.constant 0 : i32
    return %arg0, %c0_i32, %c0_i32_0 : i32, i32, i32
  }
  func.func @transform_1(%arg0: i32) -> (i32, i32, i32) {
    %c0_i32 = arith.constant 0 : i32
    %c0_i32_0 = arith.constant 0 : i32
    %c0_i32_1 = arith.constant 0 : i32
    return %arg0, %c0_i32, %c0_i32_0 : i32, i32, i32
  }
  func.func @transform_2(%arg0: i32) -> (i32, i32, i32) {
    %c0_i32 = arith.constant 0 : i32
    %c0_i32_0 = arith.constant 0 : i32
    %c0_i32_1 = arith.constant 0 : i32
    return %arg0, %c0_i32, %c0_i32_0 : i32, i32, i32
  }
  func.func @transform_3(%arg0: i32) -> (i32, i32, i32) {
    %c0_i32 = arith.constant 0 : i32
    %c0_i32_0 = arith.constant 0 : i32
    %c0_i32_1 = arith.constant 0 : i32
    return %arg0, %c0_i32, %c0_i32_0 : i32, i32, i32
  }
  func.func @transform_4(%arg0: i32) -> (i32, i32) {
    %c0_i32 = arith.constant 0 : i32
    %c0_i32_0 = arith.constant 0 : i32
    %c0_i32_1 = arith.constant 0 : i32
    return %c0_i32, %c0_i32_0 : i32, i32
  }
  func.func @transform_5(%arg0: i32) -> (i32, i32) {
    %c0_i32 = arith.constant 0 : i32
    %c0_i32_0 = arith.constant 0 : i32
    %c0_i32_1 = arith.constant 0 : i32
    return %c0_i32, %c0_i32_0 : i32, i32
  }
  func.func @transform_6(%arg0: i32) -> (i32, i32) {
    %c0_i32 = arith.constant 0 : i32
    %c0_i32_0 = arith.constant 0 : i32
    %c0_i32_1 = arith.constant 0 : i32
    return %c0_i32, %c0_i32_0 : i32, i32
  }
  func.func @transform_7(%arg0: i32) -> (i32, i32) {
    %c0_i32 = arith.constant 0 : i32
    %c0_i32_0 = arith.constant 0 : i32
    %c0_i32_1 = arith.constant 0 : i32
    return %c0_i32, %c0_i32_0 : i32, i32
  }
  func.func @transform_8(%arg0: i32) -> (i32, i32) {
    %c0_i32 = arith.constant 0 : i32
    %c0_i32_0 = arith.constant 0 : i32
    %c0_i32_1 = arith.constant 0 : i32
    return %c0_i32, %c0_i32_0 : i32, i32
  }
  func.func @transform_9(%arg0: i32) -> (i32, i32) {
    %c0_i32 = arith.constant 0 : i32
    %c0_i32_0 = arith.constant 0 : i32
    %c0_i32_1 = arith.constant 0 : i32
    return %c0_i32, %c0_i32_0 : i32, i32
  }
  func.func @transform_10(%arg0: i32) -> (i32, i32, i32) {
    %c0_i32 = arith.constant 0 : i32
    %c0_i32_0 = arith.constant 0 : i32
    %c0_i32_1 = arith.constant 0 : i32
    return %arg0, %c0_i32, %c0_i32_0 : i32, i32, i32
  }
  func.func @transform_11(%arg0: i32) -> (i32, i32, i32) {
    %c0_i32 = arith.constant 0 : i32
    %c0_i32_0 = arith.constant 0 : i32
    %c0_i32_1 = arith.constant 0 : i32
    return %arg0, %c0_i32, %c0_i32_0 : i32, i32, i32
  }
}

module attributes {stable_mosaic.version = 11 : i64} {
  func.func @_mlp_kernel(%arg0: i32, %arg1: memref<2x10xf32, #tpu.memory_space<vmem>>, %arg2: memref<10x100xf32, #tpu.memory_space<vmem>>, %arg3: memref<1x100xf32, #tpu.memory_space<vmem>>, %arg4: memref<100x3xf32, #tpu.memory_space<vmem>>, %arg5: memref<1x3xf32, #tpu.memory_space<vmem>>, %arg6: memref<2x3xf32, #tpu.memory_space<vmem>>) attributes {dimension_semantics = [#tpu.dimension_semantics<arbitrary>], iteration_bounds = array<i64: 1>, scalar_prefetch = 0 : i64, scratch_operands = 0 : i64, tpu.core_type = #tpu.core_type<tc>, window_params = [{pipeline_mode = #tpu.pipeline_mode<synchronous>, transform_indices = @transform_0, window_bounds = array<i64: 2, 10>}, {pipeline_mode = #tpu.pipeline_mode<synchronous>, transform_indices = @transform_1, window_bounds = array<i64: 10, 100>}, {pipeline_mode = #tpu.pipeline_mode<synchronous>, transform_indices = @transform_2, window_bounds = array<i64: 1, 100>}, {pipeline_mode = #tpu.pipeline_mode<synchronous>, transform_indices = @transform_3, window_bounds = array<i64: 100, 3>}, {pipeline_mode = #tpu.pipeline_mode<synchronous>, transform_indices = @transform_4, window_bounds = array<i64: 1, 3>}, {pipeline_mode = #tpu.pipeline_mode<synchronous>, transform_indices = @transform_5, window_bounds = array<i64: 2, 3>}]} {
    %c0 = arith.constant 0 : index
    %c0_0 = arith.constant 0 : index
    %0 = vector.load %arg1[%c0, %c0_0] : memref<2x10xf32, #tpu.memory_space<vmem>>, vector<2x10xf32>
    %c0_1 = arith.constant 0 : index
    %c0_2 = arith.constant 0 : index
    %1 = vector.load %arg2[%c0_1, %c0_2] : memref<10x100xf32, #tpu.memory_space<vmem>>, vector<10x100xf32>
    %cst = arith.constant dense<0.000000e+00> : vector<2x100xf32>
    %2 = tpu.matmul %0, %1, %cst {dimension_numbers = #tpu.dot_dimension_numbers<[1], [0], [0], [1], [0, 0, 1, 1], [], []>} : vector<2x10xf32>, vector<10x100xf32>, vector<2x100xf32> -> vector<2x100xf32>
    %c0_3 = arith.constant 0 : index
    %c0_4 = arith.constant 0 : index
    %3 = vector.load %arg3[%c0_3, %c0_4] : memref<1x100xf32, #tpu.memory_space<vmem>>, vector<1x100xf32>
    %4 = vector.broadcast %3 : vector<1x100xf32> to vector<2x100xf32>
    %5 = arith.addf %2, %4 : vector<2x100xf32>
    %cst_5 = arith.constant 0.000000e+00 : f32
    %6 = vector.broadcast %cst_5 : f32 to vector<2x100xf32>
    %7 = arith.maximumf %5, %6 : vector<2x100xf32>
    %c0_6 = arith.constant 0 : index
    %c0_7 = arith.constant 0 : index
    %8 = vector.load %arg4[%c0_6, %c0_7] : memref<100x3xf32, #tpu.memory_space<vmem>>, vector<100x3xf32>
    %cst_8 = arith.constant dense<0.000000e+00> : vector<2x3xf32>
    %9 = tpu.matmul %7, %8, %cst_8 {dimension_numbers = #tpu.dot_dimension_numbers<[1], [0], [0], [1], [0, 0, 1, 1], [], []>} : vector<2x100xf32>, vector<100x3xf32>, vector<2x3xf32> -> vector<2x3xf32>
    %c0_9 = arith.constant 0 : index
    %c0_10 = arith.constant 0 : index
    %10 = vector.load %arg5[%c0_9, %c0_10] : memref<1x3xf32, #tpu.memory_space<vmem>>, vector<1x3xf32>
    %11 = vector.broadcast %10 : vector<1x3xf32> to vector<2x3xf32>
    %12 = arith.addf %9, %11 : vector<2x3xf32>
    %cst_11 = arith.constant 0.000000e+00 : f32
    %13 = vector.broadcast %cst_11 : f32 to vector<2x3xf32>
    %14 = arith.maximumf %12, %13 : vector<2x3xf32>
    %c0_12 = arith.constant 0 : index
    %c0_13 = arith.constant 0 : index
    %15 = vector.load %arg6[%c0_12, %c0_13] : memref<2x3xf32, #tpu.memory_space<vmem>>, vector<2x3xf32>
    tpu.vector_store %arg6[%c0_12, %c0_13], %14 {strides = array<i32>} : memref<2x3xf32, #tpu.memory_space<vmem>>, vector<2x3xf32>,
    return
  }
  func.func @transform_0(%arg0: i32) -> (i32, i32) {
    %c0_i32 = arith.constant 0 : i32
    %c0_i32_0 = arith.constant 0 : i32
    %c0_i32_1 = arith.constant 0 : i32
    return %c0_i32, %c0_i32_0 : i32, i32
  }
  func.func @transform_1(%arg0: i32) -> (i32, i32) {
    %c0_i32 = arith.constant 0 : i32
    %c0_i32_0 = arith.constant 0 : i32
    %c0_i32_1 = arith.constant 0 : i32
    return %c0_i32, %c0_i32_0 : i32, i32
  }
  func.func @transform_2(%arg0: i32) -> (i32, i32) {
    %c0_i32 = arith.constant 0 : i32
    %c0_i32_0 = arith.constant 0 : i32
    %c0_i32_1 = arith.constant 0 : i32
    return %c0_i32, %c0_i32_0 : i32, i32
  }
  func.func @transform_3(%arg0: i32) -> (i32, i32) {
    %c0_i32 = arith.constant 0 : i32
    %c0_i32_0 = arith.constant 0 : i32
    %c0_i32_1 = arith.constant 0 : i32
    return %c0_i32, %c0_i32_0 : i32, i32
  }
  func.func @transform_4(%arg0: i32) -> (i32, i32) {
    %c0_i32 = arith.constant 0 : i32
    %c0_i32_0 = arith.constant 0 : i32
    %c0_i32_1 = arith.constant 0 : i32
    return %c0_i32, %c0_i32_0 : i32, i32
  }
  func.func @transform_5(%arg0: i32) -> (i32, i32) {
    %c0_i32 = arith.constant 0 : i32
    %c0_i32_0 = arith.constant 0 : i32
    %c0_i32_1 = arith.constant 0 : i32
    return %c0_i32, %c0_i32_0 : i32, i32
  }
}

</mosaic_0001>

<llo_original>
// kernel: align_sage_forward.3
$region0: #{align_sage_forward.3}
  #allocation0 [shape = 'u32[]', space=smem, size = 0x4, offset = 0x4, fixed_abs, tag = 'smem constant byte address 0x4 - core index']
  #allocation1 [shape = 'u32[144,128]{1,0:T(1,128)}', space=vmem, size = 0x12000, scoped, tag = 'internal scratch']
  #allocation2 [shape = 'f32[1,1]{1,0:T(1,128)S(1)}', space=vmem, size = 0x200, scoped, tag = 'scoped memory for align_sage_forward.3']
  %s0 = inlined_call_operand.vmem [shape: bf16[2,45,45], index: 0, kind: input, shape index: {}]
  %s1 = inlined_call_operand.vmem [shape: bf16[2,45,45], index: 1, kind: input, shape index: {}]
  %s2 = inlined_call_operand.vmem [shape: bf16[2,45,4], index: 2, kind: input, shape index: {}]
  %s3 = inlined_call_operand.vmem [shape: f32[2,1,45], index: 3, kind: input, shape index: {}]
  %s4 = inlined_call_operand.vmem [shape: f32[4,2], index: 4, kind: input, shape index: {}]
  %s5 = inlined_call_operand.vmem [shape: f32[4,2], index: 5, kind: input, shape index: {}]
  %s6 = inlined_call_operand.vmem [shape: f32[1,2], index: 6, kind: input, shape index: {}]
  %s7 = inlined_call_operand.vmem [shape: f32[2,1], index: 7, kind: input, shape index: {}]
  %s8 = inlined_call_operand.vmem [shape: f32[2,1], index: 8, kind: input, shape index: {}]
  %s9 = inlined_call_operand.<no memory space> [shape: f32[1,1], index: 9, kind: input, shape index: {}]
  %s10 = inlined_call_operand.vmem [shape: f32[2,45,2], index: 10, kind: output, shape index: {0}]
  %s11 = inlined_call_operand.vmem [shape: f32[2,45,1], index: 11, kind: output, shape index: {1}]
  %12 = xla_tuple %s10, %s11
  %s13 = sld [smem:[#allocation0]]
  $region58: #{align_sage_forward.3} parent=0
    _
  %s15 = ssub.s32 1, %s13
  %s16 = scalar_select 0, %s15, %s13
  %v17 = vstv %s9
  %18 = vst [vmem:[#allocation2] sm:$0x1] %v17
  // Predicated region
  $region2: #{align_sage_forward.3} parent=0 // pred_check
    _
  $region3: #{align_sage_forward.3} parent=0 // pred_check_branch
    %20 = sbr.rel (0) target = $region5
  $region4: #{align_sage_forward.3} parent=0 // pred_region
    _
  $region5: #{align_sage_forward.3} parent=0 // pred_fallthru
    _
  // Predicated region
  $region6: #{align_sage_forward.3} parent=0 // pred_check
    _
  $region7: #{align_sage_forward.3} parent=0 // pred_check_branch
    %22 = sbr.rel (0) target = $region9
  $region8: #{align_sage_forward.3} parent=0 // pred_region
    _
  $region9: #{align_sage_forward.3} parent=0 // pred_fallthru
    _
  // Predicated region
  $region10: #{align_sage_forward.3} parent=0 // pred_check
    _
  $region11: #{align_sage_forward.3} parent=0 // pred_check_branch
    %24 = sbr.rel (0) target = $region13
  $region12: #{align_sage_forward.3} parent=0 // pred_region
    _
  $region13: #{align_sage_forward.3} parent=0 // pred_fallthru
    _
  // Predicated region
  $region14: #{align_sage_forward.3} parent=0 // pred_check
    _
  $region15: #{align_sage_forward.3} parent=0 // pred_check_branch
    %26 = sbr.rel (0) target = $region17
  $region16: #{align_sage_forward.3} parent=0 // pred_region
    _
  $region17: #{align_sage_forward.3} parent=0 // pred_fallthru
    _
  // Predicated region
  $region18: #{align_sage_forward.3} parent=0 // pred_check
    _
  $region19: #{align_sage_forward.3} parent=0 // pred_check_branch
    %28 = sbr.rel (0) target = $region21
  $region20: #{align_sage_forward.3} parent=0 // pred_region
    _
  $region21: #{align_sage_forward.3} parent=0 // pred_fallthru
    _
  // Predicated region
  $region22: #{align_sage_forward.3} parent=0 // pred_check
    _
  $region23: #{align_sage_forward.3} parent=0 // pred_check_branch
    %30 = sbr.rel (0) target = $region25
  $region24: #{align_sage_forward.3} parent=0 // pred_region
    _
  $region25: #{align_sage_forward.3} parent=0 // pred_fallthru
    _
  // Predicated region
  $region26: #{align_sage_forward.3} parent=0 // pred_check
    _
  $region27: #{align_sage_forward.3} parent=0 // pred_check_branch
    %32 = sbr.rel (0) target = $region29
  $region28: #{align_sage_forward.3} parent=0 // pred_region
    _
  $region29: #{align_sage_forward.3} parent=0 // pred_fallthru
    _
  // Predicated region
  $region30: #{align_sage_forward.3} parent=0 // pred_check
    _
  $region31: #{align_sage_forward.3} parent=0 // pred_check_branch
    %34 = sbr.rel (0) target = $region33
  $region32: #{align_sage_forward.3} parent=0 // pred_region
    _
  $region33: #{align_sage_forward.3} parent=0 // pred_fallthru
    _
  // Predicated region
  $region34: #{align_sage_forward.3} parent=0 // pred_check
    _
  $region35: #{align_sage_forward.3} parent=0 // pred_check_branch
    %36 = sbr.rel (0) target = $region37
  $region36: #{align_sage_forward.3} parent=0 // pred_region
    _
  $region37: #{align_sage_forward.3} parent=0 // pred_fallthru
    _
  // Predicated region
  $region38: #{align_sage_forward.3} parent=0 // pred_check
    _
  $region39: #{align_sage_forward.3} parent=0 // pred_check_branch
    %38 = sbr.rel (0) target = $region41
  $region40: #{align_sage_forward.3} parent=0 // pred_region
    _
  $region41: #{align_sage_forward.3} parent=0 // pred_fallthru
    _
  %v40 = vld [vmem:[%s4] sm:$0xf]
  %v41 = vpack.c.bf16 %v40, %v40
  %v42 = vld [vmem:[%s5] sm:$0xf]
  %v43 = vpack.c.bf16 %v42, %v42
  %v44 = vld [vmem:[%s7] sm:$0x3]
  %v45 = vpack.c.bf16 %v44, %v44
  %v46 = vld [vmem:[%s8] sm:$0x3]
  %v47 = vpack.c.bf16 %v46, %v46
  %v48 = vld [vmem:[%s6] sm:$0x1]
  %v49 = vld [vmem:[#allocation2] sm:$0x1]
  %v50 = vld [vmem:[%s0] sm:$0xf]
  %v51 = vld [vmem:[%s0 + $0x4] sm:$0xf]
  %v52 = vld [vmem:[%s0 + $0x8] sm:$0xf]
  %v53 = vld [vmem:[%s0 + $0xc] sm:$0xf]
  %v54 = vld [vmem:[%s0 + $0x10] sm:$0xf]
  %v55 = vld [vmem:[%s0 + $0x14] sm:$0x7]
  %v56 = vld [vmem:[%s3] sm:$0x1]
  %v57 = vpack.c.bf16 %v56, %v56
  %v58 = vld [vmem:[%s1] sm:$0xf]
  %v59 = vld [vmem:[%s1 + $0x4] sm:$0xf]
  %v60 = vld [vmem:[%s1 + $0x8] sm:$0xf]
  %v61 = vld [vmem:[%s1 + $0xc] sm:$0xf]
  %v62 = vld [vmem:[%s1 + $0x10] sm:$0xf]
  %v63 = vld [vmem:[%s1 + $0x14] sm:$0x7]
  %v65 = vpack.i.b16 %v57, %v57
  %v67 = vlaneseq
  %v68 = vshrl.u32 %v67, 7
  %v69 = vsub.s32 0, %v68
  %v70 = vrot.slane %v65, %v69
  %v72 = vunpack.c.l.b16 %v70
  %v73 = vpack.c.b16 %v72, %v72
  %v75 = vmul.bf16 %v58, %v73
  %v76 = vmul.bf16 %v59, %v73
  %v77 = vmul.bf16 %v60, %v73
  %v78 = vmul.bf16 %v61, %v73
  %v79 = vmul.bf16 %v62, %v73
  %v80 = vmul.bf16 %v63, %v73
  %v81 = vld [vmem:[%s2] sm:$0xf]
  %v82 = vld [vmem:[%s2 + $0x4] sm:$0xf]
  %v83 = vld [vmem:[%s2 + $0x8] sm:$0xf]
  %v84 = vld [vmem:[%s2 + $0xc] sm:$0xf]
  %v85 = vld [vmem:[%s2 + $0x10] sm:$0xf]
  %v86 = vld [vmem:[%s2 + $0x14] sm:$0x7]
  %v87 = vunpack.c.l.bf16 %v75
  %v88 = vunpack.c.l.bf16 %v76
  %v89 = vunpack.c.l.bf16 %v77
  %v90 = vunpack.c.l.bf16 %v78
  %v91 = vunpack.c.l.bf16 %v79
  %v92 = vunpack.c.l.bf16 %v80
  %vm93 = vcmask 367616
  %v94 = vsel %vm93, %v87, 0.0
  %95 = vadd.xlane.f32.xlu0 %v94
  %v96 = vpop.xlane.xlu0 %95
  %v97 = vsel %vm93, %v88, 0.0
  %98 = vadd.xlane.f32.xlu0 %v97
  %v99 = vpop.xlane.xlu0 %98
  %v100 = vsel %vm93, %v89, 0.0
  %101 = vadd.xlane.f32.xlu0 %v100
  %v102 = vpop.xlane.xlu0 %101
  %v103 = vsel %vm93, %v90, 0.0
  %104 = vadd.xlane.f32.xlu0 %v103
  %v105 = vpop.xlane.xlu0 %104
  %v106 = vsel %vm93, %v91, 0.0
  %107 = vadd.xlane.f32.xlu0 %v106
  %v108 = vpop.xlane.xlu0 %107
  %vm109 = vcmask 364544
  %v110 = vsel %vm109, %v92, 0.0
  %111 = vadd.xlane.f32.xlu0 %v110
  %v112 = vpop.xlane.xlu0 %111
  %v113 = vmax.f32 %v96, 1.0
  %v114 = vmax.f32 %v99, 1.0
  %v115 = vmax.f32 %v102, 1.0
  %v116 = vmax.f32 %v105, 1.0
  %v117 = vmax.f32 %v108, 1.0
  %v118 = vmax.f32 %v112, 1.0
  %v119 = vrcp.pop %v113
  %v120 = vrcp.pop %v114
  %v121 = vrcp.pop %v115
  %v122 = vrcp.pop %v116
  %v123 = vrcp.pop %v117
  %v124 = vrcp.pop %v118
  %v131 = vunpack.c.l.b16 %v81
  %v132 = vunpack.c.l.b16 %v82
  %v133 = vunpack.c.l.b16 %v83
  %v134 = vunpack.c.l.b16 %v84
  %v135 = vunpack.c.l.b16 %v85
  %v136 = vunpack.c.l.b16 %v86
  %v137 = vpack.c.b16 %v132, %v131
  %v138 = vpack.c.b16 %v134, %v133
  %v139 = vpack.c.b16 %v136, %v135
  %vm140 = vcmask 31744
  %v142 = vsel %vm140, %v137, 0
  %v145 = vsel %vm140, %v138, 0
  %v148 = vsel %vm140, %v139, 0
  %vm150 = vcmask 1041408
  %v152 = vsel %vm150, %v41, 0
  %154 = vmatprep.subr.bf16.mxu0 0
  %155 = vmatpush1.bf16.msra.mxu0 0
  %156 = vmatprep.subr.bf16.mxu0 0
  %157 = vmatpush1.bf16.msra.mxu0 0
  %158 = vmatprep.subr.bf16.mxu0 0
  %159 = vmatpush1.bf16.msra.mxu0 0
  %160 = vmatprep.subr.bf16.mxu0 0
  %161 = vmatpush1.bf16.msra.mxu0 0
  %162 = vmatprep.subr.bf16.mxu0 0
  %163 = vmatpush1.bf16.msra.mxu0 0
  %164 = vmatprep.subr.bf16.mxu0 0
  %165 = vmatpush1.bf16.msra.mxu0 0
  %166 = vmatprep.subr.bf16.mxu0 0
  %167 = vmatpush1.bf16.msra.mxu0 0
  %168 = vmatprep.subr.bf16.mxu0 0
  %169 = vmatpush1.bf16.msra.mxu0 %v152
  %170 = vmatprep.subr.bf16.mxu0 0
  %171 = vmatpush2.bf16.msra.mxu0 0
  %172 = vmatprep.subr.bf16.mxu0 0
  %173 = vmatpush2.bf16.msra.mxu0 0
  %174 = vmatprep.subr.bf16.mxu0 0
  %175 = vmatpush2.bf16.msra.mxu0 0
  %176 = vmatprep.subr.bf16.mxu0 0
  %177 = vmatpush2.bf16.msra.mxu0 0
  %178 = vmatprep.subr.bf16.mxu0 0
  %179 = vmatpush2.bf16.msra.mxu0 0
  %180 = vmatprep.subr.bf16.mxu0 0
  %181 = vmatpush2.bf16.msra.mxu0 0
  %182 = vmatprep.subr.bf16.mxu0 0
  %183 = vmatpush2.bf16.msra.mxu0 0
  %184 = vmatprep.subr.bf16.mxu0 0
  %185 = vmatpush2.bf16.msra.mxu0 0
  %186 = vmatprep.mubr.bf16.mxu0 0
  %187 = vmatmul.mubr.bf16.gmra.mxu0 %v142
  %v188 = vpop.f32.mrf.mxu0
  %v189 = vadd.f32 0.0, %v188
  %v190 = vpop.f32.mrf.mxu0
  %v191 = vpop.f32.mrf.mxu0
  %v192 = vadd.f32 0.0, %v191
  %v193 = vpop.f32.mrf.mxu0
  %194 = vmatprep.mubr.bf16.mxu0 0
  %195 = vmatmul.mubr.bf16.gmra.mxu0 %v145
  %v196 = vpop.f32.mrf.mxu0
  %v197 = vadd.f32 0.0, %v196
  %v198 = vpop.f32.mrf.mxu0
  %v199 = vpop.f32.mrf.mxu0
  %v200 = vadd.f32 0.0, %v199
  %v201 = vpop.f32.mrf.mxu0
  %202 = vmatprep.mubr.bf16.mxu0 0
  %203 = vmatmul.mubr.bf16.gmra.mxu0 %v148
  %v204 = vpop.f32.mrf.mxu0
  %v205 = vadd.f32 0.0, %v204
  %v206 = vpop.f32.mrf.mxu0
  %v207 = vpop.f32.mrf.mxu0
  %v208 = vadd.f32 0.0, %v207
  %v209 = vpop.f32.mrf.mxu0
  %210 = vdwg.mxu0
  %v211 = vpack.c.bf16 %v192, %v189
  %v212 = vpack.c.bf16 %v200, %v197
  %v213 = vpack.c.bf16 %v208, %v205
  %v220 = vunpack.c.l.b16 %v50
  %v221 = vunpack.c.l.b16 %v51
  %v222 = vunpack.c.l.b16 %v52
  %v223 = vunpack.c.l.b16 %v53
  %v224 = vunpack.c.l.b16 %v54
  %v225 = vunpack.c.l.b16 %v55
  %v226 = vpack.c.b16 %v221, %v220
  %v227 = vpack.c.b16 %v223, %v222
  %v228 = vpack.c.b16 %v225, %v224
  %v230 = vsel %vm93, %v226, 0
  %v233 = vsel %vm93, %v227, 0
  %v236 = vsel %vm93, %v228, 0
  %vm238 = vcmask 1045504
  %vm239 = vcmask 1046528
  %v240 = vsel %vm238, 4294967295, 65535
  %v241 = vsel %vm239, %v240, 0
  %v243 = vand.u32 %v213, %v241
  %245 = vmatprep.subr.bf16.mxu0 0
  %246 = vmatpush1.bf16.msra.mxu0 0
  %247 = vmatprep.subr.bf16.mxu0 0
  %248 = vmatpush1.bf16.msra.mxu0 0
  %249 = vmatprep.subr.bf16.mxu0 0
  %250 = vmatpush1.bf16.msra.mxu0 0
  %251 = vmatprep.subr.bf16.mxu0 0
  %252 = vmatpush1.bf16.msra.mxu0 0
  %253 = vmatprep.subr.bf16.mxu0 0
  %254 = vmatpush1.bf16.msra.mxu0 0
  %255 = vmatprep.subr.bf16.mxu0 0
  %256 = vmatpush1.bf16.msra.mxu0 %v243
  %257 = vmatprep.subr.bf16.mxu0 0
  %258 = vmatpush1.bf16.msra.mxu0 %v212
  %259 = vmatprep.subr.bf16.mxu0 0
  %260 = vmatpush1.bf16.msra.mxu0 %v211
  %261 = vmatprep.subr.bf16.mxu0 0
  %262 = vmatpush2.bf16.msra.mxu0 0
  %263 = vmatprep.subr.bf16.mxu0 0
  %264 = vmatpush2.bf16.msra.mxu0 0
  %265 = vmatprep.subr.bf16.mxu0 0
  %266 = vmatpush2.bf16.msra.mxu0 0
  %267 = vmatprep.subr.bf16.mxu0 0
  %268 = vmatpush2.bf16.msra.mxu0 0
  %269 = vmatprep.subr.bf16.mxu0 0
  %270 = vmatpush2.bf16.msra.mxu0 0
  %271 = vmatprep.subr.bf16.mxu0 0
  %272 = vmatpush2.bf16.msra.mxu0 0
  %273 = vmatprep.subr.bf16.mxu0 0
  %274 = vmatpush2.bf16.msra.mxu0 0
  %275 = vmatprep.subr.bf16.mxu0 0
  %276 = vmatpush2.bf16.msra.mxu0 0
  %277 = vmatprep.mubr.bf16.mxu0 0
  %278 = vmatmul.mubr.bf16.gmra.mxu0 %v230
  %v279 = vpop.f32.mrf.mxu0
  %v280 = vadd.f32 0.0, %v279
  %v281 = vpop.f32.mrf.mxu0
  %v282 = vpop.f32.mrf.mxu0
  %v283 = vadd.f32 0.0, %v282
  %v284 = vpop.f32.mrf.mxu0
  %285 = vmatprep.mubr.bf16.mxu0 0
  %286 = vmatmul.mubr.bf16.gmra.mxu0 %v233
  %v287 = vpop.f32.mrf.mxu0
  %v288 = vadd.f32 0.0, %v287
  %v289 = vpop.f32.mrf.mxu0
  %v290 = vpop.f32.mrf.mxu0
  %v291 = vadd.f32 0.0, %v290
  %v292 = vpop.f32.mrf.mxu0
  %293 = vmatprep.mubr.bf16.mxu0 0
  %294 = vmatmul.mubr.bf16.gmra.mxu0 %v236
  %v295 = vpop.f32.mrf.mxu0
  %v296 = vadd.f32 0.0, %v295
  %v297 = vpop.f32.mrf.mxu0
  %v298 = vpop.f32.mrf.mxu0
  %v299 = vadd.f32 0.0, %v298
  %v300 = vpop.f32.mrf.mxu0
  %301 = vdwg.mxu0
  %v302 = vmul.f32 %v280, %v119
  %v303 = vmul.f32 %v283, %v120
  %v304 = vmul.f32 %v288, %v121
  %v305 = vmul.f32 %v291, %v122
  %v306 = vmul.f32 %v296, %v123
  %v307 = vmul.f32 %v299, %v124
  %v309 = vsel %vm150, %v43, 0
  %311 = vmatprep.subr.bf16.mxu0 0
  %312 = vmatpush1.bf16.msra.mxu0 0
  %313 = vmatprep.subr.bf16.mxu0 0
  %314 = vmatpush1.bf16.msra.mxu0 0
  %315 = vmatprep.subr.bf16.mxu0 0
  %316 = vmatpush1.bf16.msra.mxu0 0
  %317 = vmatprep.subr.bf16.mxu0 0
  %318 = vmatpush1.bf16.msra.mxu0 0
  %319 = vmatprep.subr.bf16.mxu0 0
  %320 = vmatpush1.bf16.msra.mxu0 0
  %321 = vmatprep.subr.bf16.mxu0 0
  %322 = vmatpush1.bf16.msra.mxu0 0
  %323 = vmatprep.subr.bf16.mxu0 0
  %324 = vmatpush1.bf16.msra.mxu0 0
  %325 = vmatprep.subr.bf16.mxu0 0
  %326 = vmatpush1.bf16.msra.mxu0 %v309
  %327 = vmatprep.subr.bf16.mxu0 0
  %328 = vmatpush2.bf16.msra.mxu0 0
  %329 = vmatprep.subr.bf16.mxu0 0
  %330 = vmatpush2.bf16.msra.mxu0 0
  %331 = vmatprep.subr.bf16.mxu0 0
  %332 = vmatpush2.bf16.msra.mxu0 0
  %333 = vmatprep.subr.bf16.mxu0 0
  %334 = vmatpush2.bf16.msra.mxu0 0
  %335 = vmatprep.subr.bf16.mxu0 0
  %336 = vmatpush2.bf16.msra.mxu0 0
  %337 = vmatprep.subr.bf16.mxu0 0
  %338 = vmatpush2.bf16.msra.mxu0 0
  %339 = vmatprep.subr.bf16.mxu0 0
  %340 = vmatpush2.bf16.msra.mxu0 0
  %341 = vmatprep.subr.bf16.mxu0 0
  %342 = vmatpush2.bf16.msra.mxu0 0
  %343 = vmatprep.mubr.bf16.mxu0 0
  %344 = vmatmul.mubr.bf16.gmra.mxu0 %v142
  %v345 = vpop.f32.mrf.mxu0
  %v346 = vadd.f32 0.0, %v345
  %v347 = vpop.f32.mrf.mxu0
  %v348 = vpop.f32.mrf.mxu0
  %v349 = vadd.f32 0.0, %v348
  %v350 = vpop.f32.mrf.mxu0
  %351 = vmatprep.mubr.bf16.mxu0 0
  %352 = vmatmul.mubr.bf16.gmra.mxu0 %v145
  %v353 = vpop.f32.mrf.mxu0
  %v354 = vadd.f32 0.0, %v353
  %v355 = vpop.f32.mrf.mxu0
  %v356 = vpop.f32.mrf.mxu0
  %v357 = vadd.f32 0.0, %v356
  %v358 = vpop.f32.mrf.mxu0
  %359 = vmatprep.mubr.bf16.mxu0 0
  %360 = vmatmul.mubr.bf16.gmra.mxu0 %v148
  %v361 = vpop.f32.mrf.mxu0
  %v362 = vadd.f32 0.0, %v361
  %v363 = vpop.f32.mrf.mxu0
  %v364 = vpop.f32.mrf.mxu0
  %v365 = vadd.f32 0.0, %v364
  %v366 = vpop.f32.mrf.mxu0
  %367 = vdwg.mxu0
  %v368 = vadd.f32 %v302, %v346
  %v369 = vadd.f32 %v303, %v349
  %v370 = vadd.f32 %v304, %v354
  %v371 = vadd.f32 %v305, %v357
  %v372 = vadd.f32 %v306, %v362
  %v373 = vadd.f32 %v307, %v365
  %v375 = vlaneseq
  %v376 = vshrl.u32 %v375, 7
  %v377 = vsub.s32 0, %v376
  %v378 = vrot.slane %v48, %v377
  %v380 = vadd.f32 %v368, %v378
  %v381 = vadd.f32 %v369, %v378
  %v382 = vadd.f32 %v370, %v378
  %v383 = vadd.f32 %v371, %v378
  %v384 = vadd.f32 %v372, %v378
  %v385 = vadd.f32 %v373, %v378
  %vm386 = vcmask 15360
  %387 = vst.msk [vmem:[%s10] sm:$0xff] %vm386, %v380
  %388 = vst.msk [vmem:[%s10 + $0x8] sm:$0xff] %vm386, %v381
  %389 = vst.msk [vmem:[%s10 + $0x10] sm:$0xff] %vm386, %v382
  %390 = vst.msk [vmem:[%s10 + $0x18] sm:$0xff] %vm386, %v383
  %391 = vst.msk [vmem:[%s10 + $0x20] sm:$0xff] %vm386, %v384
  %vm392 = vcmask 12288
  %393 = vst.msk [vmem:[%s10 + $0x28] sm:$0x1f] %vm392, %v385
  %v394 = vpack.c.bf16 %v381, %v380
  %v395 = vpack.c.bf16 %v383, %v382
  %v396 = vpack.c.bf16 %v385, %v384
  %v398 = vsel %vm386, %v394, 0
  %v401 = vsel %vm386, %v395, 0
  %v404 = vsel %vm386, %v396, 0
  %vm406 = vcmask 1040384
  %v408 = vsel %vm406, %v45, 0
  %410 = vmatprep.subr.bf16.mxu0 0
  %411 = vmatpush1.bf16.msra.mxu0 0
  %412 = vmatprep.subr.bf16.mxu0 0
  %413 = vmatpush1.bf16.msra.mxu0 0
  %414 = vmatprep.subr.bf16.mxu0 0
  %415 = vmatpush1.bf16.msra.mxu0 0
  %416 = vmatprep.subr.bf16.mxu0 0
  %417 = vmatpush1.bf16.msra.mxu0 0
  %418 = vmatprep.subr.bf16.mxu0 0
  %419 = vmatpush1.bf16.msra.mxu0 0
  %420 = vmatprep.subr.bf16.mxu0 0
  %421 = vmatpush1.bf16.msra.mxu0 0
  %422 = vmatprep.subr.bf16.mxu0 0
  %423 = vmatpush1.bf16.msra.mxu0 0
  %424 = vmatprep.subr.bf16.mxu0 0
  %425 = vmatpush1.bf16.msra.mxu0 %v408
  %426 = vmatprep.subr.bf16.mxu0 0
  %427 = vmatpush2.bf16.msra.mxu0 0
  %428 = vmatprep.subr.bf16.mxu0 0
  %429 = vmatpush2.bf16.msra.mxu0 0
  %430 = vmatprep.subr.bf16.mxu0 0
  %431 = vmatpush2.bf16.msra.mxu0 0
  %432 = vmatprep.subr.bf16.mxu0 0
  %433 = vmatpush2.bf16.msra.mxu0 0
  %434 = vmatprep.subr.bf16.mxu0 0
  %435 = vmatpush2.bf16.msra.mxu0 0
  %436 = vmatprep.subr.bf16.mxu0 0
  %437 = vmatpush2.bf16.msra.mxu0 0
  %438 = vmatprep.subr.bf16.mxu0 0
  %439 = vmatpush2.bf16.msra.mxu0 0
  %440 = vmatprep.subr.bf16.mxu0 0
  %441 = vmatpush2.bf16.msra.mxu0 0
  %442 = vmatprep.mubr.bf16.mxu0 0
  %443 = vmatmul.mubr.bf16.gmra.mxu0 %v398
  %v444 = vpop.f32.mrf.mxu0
  %v445 = vadd.f32 0.0, %v444
  %v446 = vpop.f32.mrf.mxu0
  %v447 = vpop.f32.mrf.mxu0
  %v448 = vadd.f32 0.0, %v447
  %v449 = vpop.f32.mrf.mxu0
  %450 = vmatprep.mubr.bf16.mxu0 0
  %451 = vmatmul.mubr.bf16.gmra.mxu0 %v401
  %v452 = vpop.f32.mrf.mxu0
  %v453 = vadd.f32 0.0, %v452
  %v454 = vpop.f32.mrf.mxu0
  %v455 = vpop.f32.mrf.mxu0
  %v456 = vadd.f32 0.0, %v455
  %v457 = vpop.f32.mrf.mxu0
  %458 = vmatprep.mubr.bf16.mxu0 0
  %459 = vmatmul.mubr.bf16.gmra.mxu0 %v404
  %v460 = vpop.f32.mrf.mxu0
  %v461 = vadd.f32 0.0, %v460
  %v462 = vpop.f32.mrf.mxu0
  %v463 = vpop.f32.mrf.mxu0
  %v464 = vadd.f32 0.0, %v463
  %v465 = vpop.f32.mrf.mxu0
  %466 = vdwg.mxu0
  %v467 = vpack.c.bf16 %v448, %v445
  %v468 = vpack.c.bf16 %v456, %v453
  %v469 = vpack.c.bf16 %v464, %v461
  %v471 = vsel %vm406, %v47, 0
  %473 = vmatprep.subr.bf16.mxu0 0
  %474 = vmatpush1.bf16.msra.mxu0 0
  %475 = vmatprep.subr.bf16.mxu0 0
  %476 = vmatpush1.bf16.msra.mxu0 0
  %477 = vmatprep.subr.bf16.mxu0 0
  %478 = vmatpush1.bf16.msra.mxu0 0
  %479 = vmatprep.subr.bf16.mxu0 0
  %480 = vmatpush1.bf16.msra.mxu0 0
  %481 = vmatprep.subr.bf16.mxu0 0
  %482 = vmatpush1.bf16.msra.mxu0 0
  %483 = vmatprep.subr.bf16.mxu0 0
  %484 = vmatpush1.bf16.msra.mxu0 0
  %485 = vmatprep.subr.bf16.mxu0 0
  %486 = vmatpush1.bf16.msra.mxu0 0
  %487 = vmatprep.subr.bf16.mxu0 0
  %488 = vmatpush1.bf16.msra.mxu0 %v471
  %489 = vmatprep.subr.bf16.mxu0 0
  %490 = vmatpush2.bf16.msra.mxu0 0
  %491 = vmatprep.subr.bf16.mxu0 0
  %492 = vmatpush2.bf16.msra.mxu0 0
  %493 = vmatprep.subr.bf16.mxu0 0
  %494 = vmatpush2.bf16.msra.mxu0 0
  %495 = vmatprep.subr.bf16.mxu0 0
  %496 = vmatpush2.bf16.msra.mxu0 0
  %497 = vmatprep.subr.bf16.mxu0 0
  %498 = vmatpush2.bf16.msra.mxu0 0
  %499 = vmatprep.subr.bf16.mxu0 0
  %500 = vmatpush2.bf16.msra.mxu0 0
  %501 = vmatprep.subr.bf16.mxu0 0
  %502 = vmatpush2.bf16.msra.mxu0 0
  %503 = vmatprep.subr.bf16.mxu0 0
  %504 = vmatpush2.bf16.msra.mxu0 0
  %505 = vmatprep.mubr.bf16.mxu0 0
  %506 = vmatmul.mubr.bf16.gmra.mxu0 %v398
  %v507 = vpop.f32.mrf.mxu0
  %v508 = vadd.f32 0.0, %v507
  %v509 = vpop.f32.mrf.mxu0
  %v510 = vpop.f32.mrf.mxu0
  %v511 = vadd.f32 0.0, %v510
  %v512 = vpop.f32.mrf.mxu0
  %513 = vmatprep.mubr.bf16.mxu0 0
  %514 = vmatmul.mubr.bf16.gmra.mxu0 %v401
  %v515 = vpop.f32.mrf.mxu0
  %v516 = vadd.f32 0.0, %v515
  %v517 = vpop.f32.mrf.mxu0
  %v518 = vpop.f32.mrf.mxu0
  %v519 = vadd.f32 0.0, %v518
  %v520 = vpop.f32.mrf.mxu0
  %521 = vmatprep.mubr.bf16.mxu0 0
  %522 = vmatmul.mubr.bf16.gmra.mxu0 %v404
  %v523 = vpop.f32.mrf.mxu0
  %v524 = vadd.f32 0.0, %v523
  %v525 = vpop.f32.mrf.mxu0
  %v526 = vpop.f32.mrf.mxu0
  %v527 = vadd.f32 0.0, %v526
  %v528 = vpop.f32.mrf.mxu0
  %529 = vdwg.mxu0
  %v536 = vunpack.c.l.b16 %v75
  %v537 = vunpack.c.l.b16 %v76
  %v538 = vunpack.c.l.b16 %v77
  %v539 = vunpack.c.l.b16 %v78
  %v540 = vunpack.c.l.b16 %v79
  %v541 = vunpack.c.l.b16 %v80
  %v542 = vpack.c.b16 %v537, %v536
  %v543 = vpack.c.b16 %v539, %v538
  %v544 = vpack.c.b16 %v541, %v540
  %v546 = vsel %vm93, %v542, 0
  %v549 = vsel %vm93, %v543, 0
  %v552 = vsel %vm93, %v544, 0
  %v555 = vand.u32 %v469, %v241
  %557 = vmatprep.subr.bf16.mxu0 0
  %558 = vmatpush1.bf16.msra.mxu0 0
  %559 = vmatprep.subr.bf16.mxu0 0
  %560 = vmatpush1.bf16.msra.mxu0 0
  %561 = vmatprep.subr.bf16.mxu0 0
  %562 = vmatpush1.bf16.msra.mxu0 0
  %563 = vmatprep.subr.bf16.mxu0 0
  %564 = vmatpush1.bf16.msra.mxu0 0
  %565 = vmatprep.subr.bf16.mxu0 0
  %566 = vmatpush1.bf16.msra.mxu0 0
  %567 = vmatprep.subr.bf16.mxu0 0
  %568 = vmatpush1.bf16.msra.mxu0 %v555
  %569 = vmatprep.subr.bf16.mxu0 0
  %570 = vmatpush1.bf16.msra.mxu0 %v468
  %571 = vmatprep.subr.bf16.mxu0 0
  %572 = vmatpush1.bf16.msra.mxu0 %v467
  %573 = vmatprep.subr.bf16.mxu0 0
  %574 = vmatpush2.bf16.msra.mxu0 0
  %575 = vmatprep.subr.bf16.mxu0 0
  %576 = vmatpush2.bf16.msra.mxu0 0
  %577 = vmatprep.subr.bf16.mxu0 0
  %578 = vmatpush2.bf16.msra.mxu0 0
  %579 = vmatprep.subr.bf16.mxu0 0
  %580 = vmatpush2.bf16.msra.mxu0 0
  %581 = vmatprep.subr.bf16.mxu0 0
  %582 = vmatpush2.bf16.msra.mxu0 0
  %583 = vmatprep.subr.bf16.mxu0 0
  %584 = vmatpush2.bf16.msra.mxu0 0
  %585 = vmatprep.subr.bf16.mxu0 0
  %586 = vmatpush2.bf16.msra.mxu0 0
  %587 = vmatprep.subr.bf16.mxu0 0
  %588 = vmatpush2.bf16.msra.mxu0 0
  %589 = vmatprep.mubr.bf16.mxu0 0
  %590 = vmatmul.mubr.bf16.gmra.mxu0 %v546
  %v591 = vpop.f32.mrf.mxu0
  %v592 = vadd.f32 %v508, %v591
  %v593 = vpop.f32.mrf.mxu0
  %v594 = vpop.f32.mrf.mxu0
  %v595 = vadd.f32 %v511, %v594
  %v596 = vpop.f32.mrf.mxu0
  %597 = vmatprep.mubr.bf16.mxu0 0
  %598 = vmatmul.mubr.bf16.gmra.mxu0 %v549
  %v599 = vpop.f32.mrf.mxu0
  %v600 = vadd.f32 %v516, %v599
  %v601 = vpop.f32.mrf.mxu0
  %v602 = vpop.f32.mrf.mxu0
  %v603 = vadd.f32 %v519, %v602
  %v604 = vpop.f32.mrf.mxu0
  %605 = vmatprep.mubr.bf16.mxu0 0
  %606 = vmatmul.mubr.bf16.gmra.mxu0 %v552
  %v607 = vpop.f32.mrf.mxu0
  %v608 = vadd.f32 %v524, %v607
  %v609 = vpop.f32.mrf.mxu0
  %v610 = vpop.f32.mrf.mxu0
  %v611 = vadd.f32 %v527, %v610
  %v612 = vpop.f32.mrf.mxu0
  %613 = vdwg.mxu0
  %v615 = vlaneseq
  %v616 = vshrl.u32 %v615, 7
  %v617 = vsub.s32 0, %v616
  %v618 = vrot.slane %v49, %v617
  %v620 = vadd.f32 %v592, %v618
  %v621 = vadd.f32 %v595, %v618
  %v622 = vadd.f32 %v600, %v618
  %v623 = vadd.f32 %v603, %v618
  %v624 = vadd.f32 %v608, %v618
  %v625 = vadd.f32 %v611, %v618
  %vm626 = vcmask 7168
  %627 = vst.msk [vmem:[%s11] sm:$0xff] %vm626, %v620
  %628 = vst.msk [vmem:[%s11 + $0x8] sm:$0xff] %vm626, %v621
  %629 = vst.msk [vmem:[%s11 + $0x10] sm:$0xff] %vm626, %v622
  %630 = vst.msk [vmem:[%s11 + $0x18] sm:$0xff] %vm626, %v623
  %631 = vst.msk [vmem:[%s11 + $0x20] sm:$0xff] %vm626, %v624
  %vm632 = vcmask 4096
  %633 = vst.msk [vmem:[%s11 + $0x28] sm:$0x1f] %vm632, %v625
  %s634 = scalar_lea.vmem %s0, 24
  %v635 = vld [vmem:[%s634] sm:$0xf]
  %v636 = vld [vmem:[%s634 + $0x4] sm:$0xf]
  %v637 = vld [vmem:[%s634 + $0x8] sm:$0xf]
  %v638 = vld [vmem:[%s634 + $0xc] sm:$0xf]
  %v639 = vld [vmem:[%s634 + $0x10] sm:$0xf]
  %v640 = vld [vmem:[%s634 + $0x14] sm:$0x7]
  %s641 = scalar_lea.vmem %s3, 1
  %v642 = vld [vmem:[%s641] sm:$0x1]
  %v643 = vpack.c.bf16 %v642, %v642
  %s644 = scalar_lea.vmem %s1, 24
  %v645 = vld [vmem:[%s644] sm:$0xf]
  %v646 = vld [vmem:[%s644 + $0x4] sm:$0xf]
  %v647 = vld [vmem:[%s644 + $0x8] sm:$0xf]
  %v648 = vld [vmem:[%s644 + $0xc] sm:$0xf]
  %v649 = vld [vmem:[%s644 + $0x10] sm:$0xf]
  %v650 = vld [vmem:[%s644 + $0x14] sm:$0x7]
  %v652 = vpack.i.b16 %v643, %v643
  %v654 = vlaneseq
  %v655 = vshrl.u32 %v654, 7
  %v656 = vsub.s32 0, %v655
  %v657 = vrot.slane %v652, %v656
  %v659 = vunpack.c.l.b16 %v657
  %v660 = vpack.c.b16 %v659, %v659
  %v662 = vmul.bf16 %v645, %v660
  %v663 = vmul.bf16 %v646, %v660
  %v664 = vmul.bf16 %v647, %v660
  %v665 = vmul.bf16 %v648, %v660
  %v666 = vmul.bf16 %v649, %v660
  %v667 = vmul.bf16 %v650, %v660
  %s668 = scalar_lea.vmem %s2, 24
  %v669 = vld [vmem:[%s668] sm:$0xf]
  %v670 = vld [vmem:[%s668 + $0x4] sm:$0xf]
  %v671 = vld [vmem:[%s668 + $0x8] sm:$0xf]
  %v672 = vld [vmem:[%s668 + $0xc] sm:$0xf]
  %v673 = vld [vmem:[%s668 + $0x10] sm:$0xf]
  %v674 = vld [vmem:[%s668 + $0x14] sm:$0x7]
  %v675 = vunpack.c.l.bf16 %v662
  %v676 = vunpack.c.l.bf16 %v663
  %v677 = vunpack.c.l.bf16 %v664
  %v678 = vunpack.c.l.bf16 %v665
  %v679 = vunpack.c.l.bf16 %v666
  %v680 = vunpack.c.l.bf16 %v667
  %v681 = vsel %vm93, %v675, 0.0
  %682 = vadd.xlane.f32.xlu0 %v681
  %v683 = vpop.xlane.xlu0 %682
  %v684 = vsel %vm93, %v676, 0.0
  %685 = vadd.xlane.f32.xlu0 %v684
  %v686 = vpop.xlane.xlu0 %685
  %v687 = vsel %vm93, %v677, 0.0
  %688 = vadd.xlane.f32.xlu0 %v687
  %v689 = vpop.xlane.xlu0 %688
  %v690 = vsel %vm93, %v678, 0.0
  %691 = vadd.xlane.f32.xlu0 %v690
  %v692 = vpop.xlane.xlu0 %691
  %v693 = vsel %vm93, %v679, 0.0
  %694 = vadd.xlane.f32.xlu0 %v693
  %v695 = vpop.xlane.xlu0 %694
  %v696 = vsel %vm109, %v680, 0.0
  %697 = vadd.xlane.f32.xlu0 %v696
  %v698 = vpop.xlane.xlu0 %697
  %v699 = vmax.f32 %v683, 1.0
  %v700 = vmax.f32 %v686, 1.0
  %v701 = vmax.f32 %v689, 1.0
  %v702 = vmax.f32 %v692, 1.0
  %v703 = vmax.f32 %v695, 1.0
  %v704 = vmax.f32 %v698, 1.0
  %v705 = vrcp.pop %v699
  %v706 = vrcp.pop %v700
  %v707 = vrcp.pop %v701
  %v708 = vrcp.pop %v702
  %v709 = vrcp.pop %v703
  %v710 = vrcp.pop %v704
  %v717 = vunpack.c.l.b16 %v669
  %v718 = vunpack.c.l.b16 %v670
  %v719 = vunpack.c.l.b16 %v671
  %v720 = vunpack.c.l.b16 %v672
  %v721 = vunpack.c.l.b16 %v673
  %v722 = vunpack.c.l.b16 %v674
  %v723 = vpack.c.b16 %v718, %v717
  %v724 = vpack.c.b16 %v720, %v719
  %v725 = vpack.c.b16 %v722, %v721
  %v727 = vsel %vm140, %v723, 0
  %v730 = vsel %vm140, %v724, 0
  %v733 = vsel %vm140, %v725, 0
  %735 = vmatprep.subr.bf16.mxu0 0
  %736 = vmatpush1.bf16.msra.mxu0 0
  %737 = vmatprep.subr.bf16.mxu0 0
  %738 = vmatpush1.bf16.msra.mxu0 0
  %739 = vmatprep.subr.bf16.mxu0 0
  %740 = vmatpush1.bf16.msra.mxu0 0
  %741 = vmatprep.subr.bf16.mxu0 0
  %742 = vmatpush1.bf16.msra.mxu0 0
  %743 = vmatprep.subr.bf16.mxu0 0
  %744 = vmatpush1.bf16.msra.mxu0 0
  %745 = vmatprep.subr.bf16.mxu0 0
  %746 = vmatpush1.bf16.msra.mxu0 0
  %747 = vmatprep.subr.bf16.mxu0 0
  %748 = vmatpush1.bf16.msra.mxu0 0
  %749 = vmatprep.subr.bf16.mxu0 0
  %750 = vmatpush1.bf16.msra.mxu0 %v152
  %751 = vmatprep.subr.bf16.mxu0 0
  %752 = vmatpush2.bf16.msra.mxu0 0
  %753 = vmatprep.subr.bf16.mxu0 0
  %754 = vmatpush2.bf16.msra.mxu0 0
  %755 = vmatprep.subr.bf16.mxu0 0
  %756 = vmatpush2.bf16.msra.mxu0 0
  %757 = vmatprep.subr.bf16.mxu0 0
  %758 = vmatpush2.bf16.msra.mxu0 0
  %759 = vmatprep.subr.bf16.mxu0 0
  %760 = vmatpush2.bf16.msra.mxu0 0
  %761 = vmatprep.subr.bf16.mxu0 0
  %762 = vmatpush2.bf16.msra.mxu0 0
  %763 = vmatprep.subr.bf16.mxu0 0
  %764 = vmatpush2.bf16.msra.mxu0 0
  %765 = vmatprep.subr.bf16.mxu0 0
  %766 = vmatpush2.bf16.msra.mxu0 0
  %767 = vmatprep.mubr.bf16.mxu0 0
  %768 = vmatmul.mubr.bf16.gmra.mxu0 %v727
  %v769 = vpop.f32.mrf.mxu0
  %v770 = vadd.f32 0.0, %v769
  %v771 = vpop.f32.mrf.mxu0
  %v772 = vpop.f32.mrf.mxu0
  %v773 = vadd.f32 0.0, %v772
  %v774 = vpop.f32.mrf.mxu0
  %775 = vmatprep.mubr.bf16.mxu0 0
  %776 = vmatmul.mubr.bf16.gmra.mxu0 %v730
  %v777 = vpop.f32.mrf.mxu0
  %v778 = vadd.f32 0.0, %v777
  %v779 = vpop.f32.mrf.mxu0
  %v780 = vpop.f32.mrf.mxu0
  %v781 = vadd.f32 0.0, %v780
  %v782 = vpop.f32.mrf.mxu0
  %783 = vmatprep.mubr.bf16.mxu0 0
  %784 = vmatmul.mubr.bf16.gmra.mxu0 %v733
  %v785 = vpop.f32.mrf.mxu0
  %v786 = vadd.f32 0.0, %v785
  %v787 = vpop.f32.mrf.mxu0
  %v788 = vpop.f32.mrf.mxu0
  %v789 = vadd.f32 0.0, %v788
  %v790 = vpop.f32.mrf.mxu0
  %791 = vdwg.mxu0
  %v792 = vpack.c.bf16 %v773, %v770
  %v793 = vpack.c.bf16 %v781, %v778
  %v794 = vpack.c.bf16 %v789, %v786
  %v801 = vunpack.c.l.b16 %v635
  %v802 = vunpack.c.l.b16 %v636
  %v803 = vunpack.c.l.b16 %v637
  %v804 = vunpack.c.l.b16 %v638
  %v805 = vunpack.c.l.b16 %v639
  %v806 = vunpack.c.l.b16 %v640
  %v807 = vpack.c.b16 %v802, %v801
  %v808 = vpack.c.b16 %v804, %v803
  %v809 = vpack.c.b16 %v806, %v805
  %v811 = vsel %vm93, %v807, 0
  %v814 = vsel %vm93, %v808, 0
  %v817 = vsel %vm93, %v809, 0
  %v820 = vand.u32 %v794, %v241
  %822 = vmatprep.subr.bf16.mxu0 0
  %823 = vmatpush1.bf16.msra.mxu0 0
  %824 = vmatprep.subr.bf16.mxu0 0
  %825 = vmatpush1.bf16.msra.mxu0 0
  %826 = vmatprep.subr.bf16.mxu0 0
  %827 = vmatpush1.bf16.msra.mxu0 0
  %828 = vmatprep.subr.bf16.mxu0 0
  %829 = vmatpush1.bf16.msra.mxu0 0
  %830 = vmatprep.subr.bf16.mxu0 0
  %831 = vmatpush1.bf16.msra.mxu0 0
  %832 = vmatprep.subr.bf16.mxu0 0
  %833 = vmatpush1.bf16.msra.mxu0 %v820
  %834 = vmatprep.subr.bf16.mxu0 0
  %835 = vmatpush1.bf16.msra.mxu0 %v793
  %836 = vmatprep.subr.bf16.mxu0 0
  %837 = vmatpush1.bf16.msra.mxu0 %v792
  %838 = vmatprep.subr.bf16.mxu0 0
  %839 = vmatpush2.bf16.msra.mxu0 0
  %840 = vmatprep.subr.bf16.mxu0 0
  %841 = vmatpush2.bf16.msra.mxu0 0
  %842 = vmatprep.subr.bf16.mxu0 0
  %843 = vmatpush2.bf16.msra.mxu0 0
  %844 = vmatprep.subr.bf16.mxu0 0
  %845 = vmatpush2.bf16.msra.mxu0 0
  %846 = vmatprep.subr.bf16.mxu0 0
  %847 = vmatpush2.bf16.msra.mxu0 0
  %848 = vmatprep.subr.bf16.mxu0 0
  %849 = vmatpush2.bf16.msra.mxu0 0
  %850 = vmatprep.subr.bf16.mxu0 0
  %851 = vmatpush2.bf16.msra.mxu0 0
  %852 = vmatprep.subr.bf16.mxu0 0
  %853 = vmatpush2.bf16.msra.mxu0 0
  %854 = vmatprep.mubr.bf16.mxu0 0
  %855 = vmatmul.mubr.bf16.gmra.mxu0 %v811
  %v856 = vpop.f32.mrf.mxu0
  %v857 = vadd.f32 0.0, %v856
  %v858 = vpop.f32.mrf.mxu0
  %v859 = vpop.f32.mrf.mxu0
  %v860 = vadd.f32 0.0, %v859
  %v861 = vpop.f32.mrf.mxu0
  %862 = vmatprep.mubr.bf16.mxu0 0
  %863 = vmatmul.mubr.bf16.gmra.mxu0 %v814
  %v864 = vpop.f32.mrf.mxu0
  %v865 = vadd.f32 0.0, %v864
  %v866 = vpop.f32.mrf.mxu0
  %v867 = vpop.f32.mrf.mxu0
  %v868 = vadd.f32 0.0, %v867
  %v869 = vpop.f32.mrf.mxu0
  %870 = vmatprep.mubr.bf16.mxu0 0
  %871 = vmatmul.mubr.bf16.gmra.mxu0 %v817
  %v872 = vpop.f32.mrf.mxu0
  %v873 = vadd.f32 0.0, %v872
  %v874 = vpop.f32.mrf.mxu0
  %v875 = vpop.f32.mrf.mxu0
  %v876 = vadd.f32 0.0, %v875
  %v877 = vpop.f32.mrf.mxu0
  %878 = vdwg.mxu0
  %v879 = vmul.f32 %v857, %v705
  %v880 = vmul.f32 %v860, %v706
  %v881 = vmul.f32 %v865, %v707
  %v882 = vmul.f32 %v868, %v708
  %v883 = vmul.f32 %v873, %v709
  %v884 = vmul.f32 %v876, %v710
  %885 = vmatprep.subr.bf16.mxu0 0
  %886 = vmatpush1.bf16.msra.mxu0 0
  %887 = vmatprep.subr.bf16.mxu0 0
  %888 = vmatpush1.bf16.msra.mxu0 0
  %889 = vmatprep.subr.bf16.mxu0 0
  %890 = vmatpush1.bf16.msra.mxu0 0
  %891 = vmatprep.subr.bf16.mxu0 0
  %892 = vmatpush1.bf16.msra.mxu0 0
  %893 = vmatprep.subr.bf16.mxu0 0
  %894 = vmatpush1.bf16.msra.mxu0 0
  %895 = vmatprep.subr.bf16.mxu0 0
  %896 = vmatpush1.bf16.msra.mxu0 0
  %897 = vmatprep.subr.bf16.mxu0 0
  %898 = vmatpush1.bf16.msra.mxu0 0
  %899 = vmatprep.subr.bf16.mxu0 0
  %900 = vmatpush1.bf16.msra.mxu0 %v309
  %901 = vmatprep.subr.bf16.mxu0 0
  %902 = vmatpush2.bf16.msra.mxu0 0
  %903 = vmatprep.subr.bf16.mxu0 0
  %904 = vmatpush2.bf16.msra.mxu0 0
  %905 = vmatprep.subr.bf16.mxu0 0
  %906 = vmatpush2.bf16.msra.mxu0 0
  %907 = vmatprep.subr.bf16.mxu0 0
  %908 = vmatpush2.bf16.msra.mxu0 0
  %909 = vmatprep.subr.bf16.mxu0 0
  %910 = vmatpush2.bf16.msra.mxu0 0
  %911 = vmatprep.subr.bf16.mxu0 0
  %912 = vmatpush2.bf16.msra.mxu0 0
  %913 = vmatprep.subr.bf16.mxu0 0
  %914 = vmatpush2.bf16.msra.mxu0 0
  %915 = vmatprep.subr.bf16.mxu0 0
  %916 = vmatpush2.bf16.msra.mxu0 0
  %917 = vmatprep.mubr.bf16.mxu0 0
  %918 = vmatmul.mubr.bf16.gmra.mxu0 %v727
  %v919 = vpop.f32.mrf.mxu0
  %v920 = vadd.f32 0.0, %v919
  %v921 = vpop.f32.mrf.mxu0
  %v922 = vpop.f32.mrf.mxu0
  %v923 = vadd.f32 0.0, %v922
  %v924 = vpop.f32.mrf.mxu0
  %925 = vmatprep.mubr.bf16.mxu0 0
  %926 = vmatmul.mubr.bf16.gmra.mxu0 %v730
  %v927 = vpop.f32.mrf.mxu0
  %v928 = vadd.f32 0.0, %v927
  %v929 = vpop.f32.mrf.mxu0
  %v930 = vpop.f32.mrf.mxu0
  %v931 = vadd.f32 0.0, %v930
  %v932 = vpop.f32.mrf.mxu0
  %933 = vmatprep.mubr.bf16.mxu0 0
  %934 = vmatmul.mubr.bf16.gmra.mxu0 %v733
  %v935 = vpop.f32.mrf.mxu0
  %v936 = vadd.f32 0.0, %v935
  %v937 = vpop.f32.mrf.mxu0
  %v938 = vpop.f32.mrf.mxu0
  %v939 = vadd.f32 0.0, %v938
  %v940 = vpop.f32.mrf.mxu0
  %941 = vdwg.mxu0
  %v942 = vadd.f32 %v879, %v920
  %v943 = vadd.f32 %v880, %v923
  %v944 = vadd.f32 %v881, %v928
  %v945 = vadd.f32 %v882, %v931
  %v946 = vadd.f32 %v883, %v936
  %v947 = vadd.f32 %v884, %v939
  %v948 = vadd.f32 %v942, %v378
  %v949 = vadd.f32 %v943, %v378
  %v950 = vadd.f32 %v944, %v378
  %v951 = vadd.f32 %v945, %v378
  %v952 = vadd.f32 %v946, %v378
  %v953 = vadd.f32 %v947, %v378
  %s954 = scalar_lea.vmem %s10, 48
  %955 = vst.msk [vmem:[%s954] sm:$0xff] %vm386, %v948
  %956 = vst.msk [vmem:[%s954 + $0x8] sm:$0xff] %vm386, %v949
  %957 = vst.msk [vmem:[%s954 + $0x10] sm:$0xff] %vm386, %v950
  %958 = vst.msk [vmem:[%s954 + $0x18] sm:$0xff] %vm386, %v951
  %959 = vst.msk [vmem:[%s954 + $0x20] sm:$0xff] %vm386, %v952
  %960 = vst.msk [vmem:[%s954 + $0x28] sm:$0x1f] %vm392, %v953
  %v961 = vpack.c.bf16 %v949, %v948
  %v962 = vpack.c.bf16 %v951, %v950
  %v963 = vpack.c.bf16 %v953, %v952
  %v965 = vsel %vm386, %v961, 0
  %v968 = vsel %vm386, %v962, 0
  %v971 = vsel %vm386, %v963, 0
  %973 = vmatprep.subr.bf16.mxu0 0
  %974 = vmatpush1.bf16.msra.mxu0 0
  %975 = vmatprep.subr.bf16.mxu0 0
  %976 = vmatpush1.bf16.msra.mxu0 0
  %977 = vmatprep.subr.bf16.mxu0 0
  %978 = vmatpush1.bf16.msra.mxu0 0
  %979 = vmatprep.subr.bf16.mxu0 0
  %980 = vmatpush1.bf16.msra.mxu0 0
  %981 = vmatprep.subr.bf16.mxu0 0
  %982 = vmatpush1.bf16.msra.mxu0 0
  %983 = vmatprep.subr.bf16.mxu0 0
  %984 = vmatpush1.bf16.msra.mxu0 0
  %985 = vmatprep.subr.bf16.mxu0 0
  %986 = vmatpush1.bf16.msra.mxu0 0
  %987 = vmatprep.subr.bf16.mxu0 0
  %988 = vmatpush1.bf16.msra.mxu0 %v408
  %989 = vmatprep.subr.bf16.mxu0 0
  %990 = vmatpush2.bf16.msra.mxu0 0
  %991 = vmatprep.subr.bf16.mxu0 0
  %992 = vmatpush2.bf16.msra.mxu0 0
  %993 = vmatprep.subr.bf16.mxu0 0
  %994 = vmatpush2.bf16.msra.mxu0 0
  %995 = vmatprep.subr.bf16.mxu0 0
  %996 = vmatpush2.bf16.msra.mxu0 0
  %997 = vmatprep.subr.bf16.mxu0 0
  %998 = vmatpush2.bf16.msra.mxu0 0
  %999 = vmatprep.subr.bf16.mxu0 0
  %1000 = vmatpush2.bf16.msra.mxu0 0
  %1001 = vmatprep.subr.bf16.mxu0 0
  %1002 = vmatpush2.bf16.msra.mxu0 0
  %1003 = vmatprep.subr.bf16.mxu0 0
  %1004 = vmatpush2.bf16.msra.mxu0 0
  %1005 = vmatprep.mubr.bf16.mxu0 0
  %1006 = vmatmul.mubr.bf16.gmra.mxu0 %v965
  %v1007 = vpop.f32.mrf.mxu0
  %v1008 = vadd.f32 0.0, %v1007
  %v1009 = vpop.f32.mrf.mxu0
  %v1010 = vpop.f32.mrf.mxu0
  %v1011 = vadd.f32 0.0, %v1010
  %v1012 = vpop.f32.mrf.mxu0
  %1013 = vmatprep.mubr.bf16.mxu0 0
  %1014 = vmatmul.mubr.bf16.gmra.mxu0 %v968
  %v1015 = vpop.f32.mrf.mxu0
  %v1016 = vadd.f32 0.0, %v1015
  %v1017 = vpop.f32.mrf.mxu0
  %v1018 = vpop.f32.mrf.mxu0
  %v1019 = vadd.f32 0.0, %v1018
  %v1020 = vpop.f32.mrf.mxu0
  %1021 = vmatprep.mubr.bf16.mxu0 0
  %1022 = vmatmul.mubr.bf16.gmra.mxu0 %v971
  %v1023 = vpop.f32.mrf.mxu0
  %v1024 = vadd.f32 0.0, %v1023
  %v1025 = vpop.f32.mrf.mxu0
  %v1026 = vpop.f32.mrf.mxu0
  %v1027 = vadd.f32 0.0, %v1026
  %v1028 = vpop.f32.mrf.mxu0
  %1029 = vdwg.mxu0
  %v1030 = vpack.c.bf16 %v1011, %v1008
  %v1031 = vpack.c.bf16 %v1019, %v1016
  %v1032 = vpack.c.bf16 %v1027, %v1024
  %1033 = vmatprep.subr.bf16.mxu0 0
  %1034 = vmatpush1.bf16.msra.mxu0 0
  %1035 = vmatprep.subr.bf16.mxu0 0
  %1036 = vmatpush1.bf16.msra.mxu0 0
  %1037 = vmatprep.subr.bf16.mxu0 0
  %1038 = vmatpush1.bf16.msra.mxu0 0
  %1039 = vmatprep.subr.bf16.mxu0 0
  %1040 = vmatpush1.bf16.msra.mxu0 0
  %1041 = vmatprep.subr.bf16.mxu0 0
  %1042 = vmatpush1.bf16.msra.mxu0 0
  %1043 = vmatprep.subr.bf16.mxu0 0
  %1044 = vmatpush1.bf16.msra.mxu0 0
  %1045 = vmatprep.subr.bf16.mxu0 0
  %1046 = vmatpush1.bf16.msra.mxu0 0
  %1047 = vmatprep.subr.bf16.mxu0 0
  %1048 = vmatpush1.bf16.msra.mxu0 %v471
  %1049 = vmatprep.subr.bf16.mxu0 0
  %1050 = vmatpush2.bf16.msra.mxu0 0
  %1051 = vmatprep.subr.bf16.mxu0 0
  %1052 = vmatpush2.bf16.msra.mxu0 0
  %1053 = vmatprep.subr.bf16.mxu0 0
  %1054 = vmatpush2.bf16.msra.mxu0 0
  %1055 = vmatprep.subr.bf16.mxu0 0
  %1056 = vmatpush2.bf16.msra.mxu0 0
  %1057 = vmatprep.subr.bf16.mxu0 0
  %1058 = vmatpush2.bf16.msra.mxu0 0
  %1059 = vmatprep.subr.bf16.mxu0 0
  %1060 = vmatpush2.bf16.msra.mxu0 0
  %1061 = vmatprep.subr.bf16.mxu0 0
  %1062 = vmatpush2.bf16.msra.mxu0 0
  %1063 = vmatprep.subr.bf16.mxu0 0
  %1064 = vmatpush2.bf16.msra.mxu0 0
  %1065 = vmatprep.mubr.bf16.mxu0 0
  %1066 = vmatmul.mubr.bf16.gmra.mxu0 %v965
  %v1067 = vpop.f32.mrf.mxu0
  %v1068 = vadd.f32 0.0, %v1067
  %v1069 = vpop.f32.mrf.mxu0
  %v1070 = vpop.f32.mrf.mxu0
  %v1071 = vadd.f32 0.0, %v1070
  %v1072 = vpop.f32.mrf.mxu0
  %1073 = vmatprep.mubr.bf16.mxu0 0
  %1074 = vmatmul.mubr.bf16.gmra.mxu0 %v968
  %v1075 = vpop.f32.mrf.mxu0
  %v1076 = vadd.f32 0.0, %v1075
  %v1077 = vpop.f32.mrf.mxu0
  %v1078 = vpop.f32.mrf.mxu0
  %v1079 = vadd.f32 0.0, %v1078
  %v1080 = vpop.f32.mrf.mxu0
  %1081 = vmatprep.mubr.bf16.mxu0 0
  %1082 = vmatmul.mubr.bf16.gmra.mxu0 %v971
  %v1083 = vpop.f32.mrf.mxu0
  %v1084 = vadd.f32 0.0, %v1083
  %v1085 = vpop.f32.mrf.mxu0
  %v1086 = vpop.f32.mrf.mxu0
  %v1087 = vadd.f32 0.0, %v1086
  %v1088 = vpop.f32.mrf.mxu0
  %1089 = vdwg.mxu0
  %v1096 = vunpack.c.l.b16 %v662
  %v1097 = vunpack.c.l.b16 %v663
  %v1098 = vunpack.c.l.b16 %v664
  %v1099 = vunpack.c.l.b16 %v665
  %v1100 = vunpack.c.l.b16 %v666
  %v1101 = vunpack.c.l.b16 %v667
  %v1102 = vpack.c.b16 %v1097, %v1096
  %v1103 = vpack.c.b16 %v1099, %v1098
  %v1104 = vpack.c.b16 %v1101, %v1100
  %v1106 = vsel %vm93, %v1102, 0
  %v1109 = vsel %vm93, %v1103, 0
  %v1112 = vsel %vm93, %v1104, 0
  %v1115 = vand.u32 %v1032, %v241
  %1117 = vmatprep.subr.bf16.mxu0 0
  %1118 = vmatpush1.bf16.msra.mxu0 0
  %1119 = vmatprep.subr.bf16.mxu0 0
  %1120 = vmatpush1.bf16.msra.mxu0 0
  %1121 = vmatprep.subr.bf16.mxu0 0
  %1122 = vmatpush1.bf16.msra.mxu0 0
  %1123 = vmatprep.subr.bf16.mxu0 0
  %1124 = vmatpush1.bf16.msra.mxu0 0
  %1125 = vmatprep.subr.bf16.mxu0 0
  %1126 = vmatpush1.bf16.msra.mxu0 0
  %1127 = vmatprep.subr.bf16.mxu0 0
  %1128 = vmatpush1.bf16.msra.mxu0 %v1115
  %1129 = vmatprep.subr.bf16.mxu0 0
  %1130 = vmatpush1.bf16.msra.mxu0 %v1031
  %1131 = vmatprep.subr.bf16.mxu0 0
  %1132 = vmatpush1.bf16.msra.mxu0 %v1030
  %1133 = vmatprep.subr.bf16.mxu0 0
  %1134 = vmatpush2.bf16.msra.mxu0 0
  %1135 = vmatprep.subr.bf16.mxu0 0
  %1136 = vmatpush2.bf16.msra.mxu0 0
  %1137 = vmatprep.subr.bf16.mxu0 0
  %1138 = vmatpush2.bf16.msra.mxu0 0
  %1139 = vmatprep.subr.bf16.mxu0 0
  %1140 = vmatpush2.bf16.msra.mxu0 0
  %1141 = vmatprep.subr.bf16.mxu0 0
  %1142 = vmatpush2.bf16.msra.mxu0 0
  %1143 = vmatprep.subr.bf16.mxu0 0
  %1144 = vmatpush2.bf16.msra.mxu0 0
  %1145 = vmatprep.subr.bf16.mxu0 0
  %1146 = vmatpush2.bf16.msra.mxu0 0
  %1147 = vmatprep.subr.bf16.mxu0 0
  %1148 = vmatpush2.bf16.msra.mxu0 0
  %1149 = vmatprep.mubr.bf16.mxu0 0
  %1150 = vmatmul.mubr.bf16.gmra.mxu0 %v1106
  %v1151 = vpop.f32.mrf.mxu0
  %v1152 = vadd.f32 %v1068, %v1151
  %v1153 = vpop.f32.mrf.mxu0
  %v1154 = vpop.f32.mrf.mxu0
  %v1155 = vadd.f32 %v1071, %v1154
  %v1156 = vpop.f32.mrf.mxu0
  %1157 = vmatprep.mubr.bf16.mxu0 0
  %1158 = vmatmul.mubr.bf16.gmra.mxu0 %v1109
  %v1159 = vpop.f32.mrf.mxu0
  %v1160 = vadd.f32 %v1076, %v1159
  %v1161 = vpop.f32.mrf.mxu0
  %v1162 = vpop.f32.mrf.mxu0
  %v1163 = vadd.f32 %v1079, %v1162
  %v1164 = vpop.f32.mrf.mxu0
  %1165 = vmatprep.mubr.bf16.mxu0 0
  %1166 = vmatmul.mubr.bf16.gmra.mxu0 %v1112
  %v1167 = vpop.f32.mrf.mxu0
  %v1168 = vadd.f32 %v1084, %v1167
  %v1169 = vpop.f32.mrf.mxu0
  %v1170 = vpop.f32.mrf.mxu0
  %v1171 = vadd.f32 %v1087, %v1170
  %v1172 = vpop.f32.mrf.mxu0
  %1173 = vdwg.mxu0
  %v1174 = vadd.f32 %v1152, %v618
  %v1175 = vadd.f32 %v1155, %v618
  %v1176 = vadd.f32 %v1160, %v618
  %v1177 = vadd.f32 %v1163, %v618
  %v1178 = vadd.f32 %v1168, %v618
  %v1179 = vadd.f32 %v1171, %v618
  %s1180 = scalar_lea.vmem %s11, 48
  %1181 = vst.msk [vmem:[%s1180] sm:$0xff] %vm626, %v1174
  %1182 = vst.msk [vmem:[%s1180 + $0x8] sm:$0xff] %vm626, %v1175
  %1183 = vst.msk [vmem:[%s1180 + $0x10] sm:$0xff] %vm626, %v1176
  %1184 = vst.msk [vmem:[%s1180 + $0x18] sm:$0xff] %vm626, %v1177
  %1185 = vst.msk [vmem:[%s1180 + $0x20] sm:$0xff] %vm626, %v1178
  %1186 = vst.msk [vmem:[%s1180 + $0x28] sm:$0x1f] %vm632, %v1179
  // Predicated region
  $region42: #{align_sage_forward.3} parent=0 // pred_check
    _
  $region43: #{align_sage_forward.3} parent=0 // pred_check_branch
    %1188 = sbr.rel (0) target = $region45
  $region44: #{align_sage_forward.3} parent=0 // pred_region
    _
  $region45: #{align_sage_forward.3} parent=0 // pred_fallthru
    _
  // Predicated region
  $region46: #{align_sage_forward.3} parent=0 // pred_check
    _
  $region47: #{align_sage_forward.3} parent=0 // pred_check_branch
    %1190 = sbr.rel (0) target = $region49
  $region48: #{align_sage_forward.3} parent=0 // pred_region
    _
  $region49: #{align_sage_forward.3} parent=0 // pred_fallthru
    _
  // Predicated region
  $region50: #{align_sage_forward.3} parent=0 // pred_check
    _
  $region51: #{align_sage_forward.3} parent=0 // pred_check_branch
    %1192 = sbr.rel (0) target = $region53
  $region52: #{align_sage_forward.3} parent=0 // pred_region
    _
  $region53: #{align_sage_forward.3} parent=0 // pred_fallthru
    _
  // Predicated region
  $region54: #{align_sage_forward.3} parent=0 // pred_check
    _
  $region55: #{align_sage_forward.3} parent=0 // pred_check_branch
    %1194 = sbr.rel (0) target = $region57
  $region56: #{align_sage_forward.3} parent=0 // pred_region
    _
  $region57: #{align_sage_forward.3} parent=0 // pred_fallthru
    _

// kernel: align_sage_forward.4
$region0: #{align_sage_forward.4}
  #allocation0 [shape = 'u32[]', space=smem, size = 0x4, offset = 0x4, fixed_abs, tag = 'smem constant byte address 0x4 - core index']
  #allocation1 [shape = 'u32[144,128]{1,0:T(1,128)}', space=vmem, size = 0x12000, scoped, tag = 'internal scratch']
  #allocation2 [shape = 'f32[1,1]{1,0:T(1,128)S(1)}', space=vmem, size = 0x200, scoped, tag = 'scoped memory for align_sage_forward.4']
  #allocation3 [shape = 'f32[1,1]{1,0:T(1,128)S(1)}', space=vmem, size = 0x200, scoped, tag = 'scoped memory for align_sage_forward.4']
  #allocation4 [shape = 'f32[1,1]{1,0:T(1,128)S(1)}', space=vmem, size = 0x200, scoped, tag = 'scoped memory for align_sage_forward.4']
  #allocation5 [shape = 'f32[1,1]{1,0:T(1,128)S(1)}', space=vmem, size = 0x200, scoped, tag = 'scoped memory for align_sage_forward.4']
  %s0 = inlined_call_operand.vmem [shape: bf16[2,45,45], index: 0, kind: input, shape index: {}]
  %s1 = inlined_call_operand.vmem [shape: bf16[2,45,45], index: 1, kind: input, shape index: {}]
  %s2 = inlined_call_operand.vmem [shape: bf16[2,45,2], index: 2, kind: input, shape index: {}]
  %s3 = inlined_call_operand.vmem [shape: f32[2,1,45], index: 3, kind: input, shape index: {}]
  %s4 = inlined_call_operand.vmem [shape: f32[2,1], index: 4, kind: input, shape index: {}]
  %s5 = inlined_call_operand.vmem [shape: f32[2,1], index: 5, kind: input, shape index: {}]
  %s6 = inlined_call_operand.<no memory space> [shape: f32[1,1], index: 6, kind: input, shape index: {}]
  %s7 = inlined_call_operand.<no memory space> [shape: f32[1,1], index: 7, kind: input, shape index: {}]
  %s8 = inlined_call_operand.<no memory space> [shape: f32[1,1], index: 8, kind: input, shape index: {}]
  %s9 = inlined_call_operand.<no memory space> [shape: f32[1,1], index: 9, kind: input, shape index: {}]
  %s10 = inlined_call_operand.vmem [shape: f32[2,45,1], index: 10, kind: output, shape index: {0}]
  %s11 = inlined_call_operand.vmem [shape: f32[2,45,1], index: 11, kind: output, shape index: {1}]
  %12 = xla_tuple %s10, %s11
  %s13 = sld [smem:[#allocation0]]
  $region58: #{align_sage_forward.4} parent=0
    _
  %s15 = ssub.s32 1, %s13
  %s16 = scalar_select 0, %s15, %s13
  %v17 = vstv %s6
  %18 = vst [vmem:[#allocation2] sm:$0x1] %v17
  %v19 = vstv %s7
  %20 = vst [vmem:[#allocation3] sm:$0x1] %v19
  %v21 = vstv %s8
  %22 = vst [vmem:[#allocation4] sm:$0x1] %v21
  %v23 = vstv %s9
  %24 = vst [vmem:[#allocation5] sm:$0x1] %v23
  // Predicated region
  $region2: #{align_sage_forward.4} parent=0 // pred_check
    _
  $region3: #{align_sage_forward.4} parent=0 // pred_check_branch
    %26 = sbr.rel (0) target = $region5
  $region4: #{align_sage_forward.4} parent=0 // pred_region
    _
  $region5: #{align_sage_forward.4} parent=0 // pred_fallthru
    _
  // Predicated region
  $region6: #{align_sage_forward.4} parent=0 // pred_check
    _
  $region7: #{align_sage_forward.4} parent=0 // pred_check_branch
    %28 = sbr.rel (0) target = $region9
  $region8: #{align_sage_forward.4} parent=0 // pred_region
    _
  $region9: #{align_sage_forward.4} parent=0 // pred_fallthru
    _
  // Predicated region
  $region10: #{align_sage_forward.4} parent=0 // pred_check
    _
  $region11: #{align_sage_forward.4} parent=0 // pred_check_branch
    %30 = sbr.rel (0) target = $region13
  $region12: #{align_sage_forward.4} parent=0 // pred_region
    _
  $region13: #{align_sage_forward.4} parent=0 // pred_fallthru
    _
  // Predicated region
  $region14: #{align_sage_forward.4} parent=0 // pred_check
    _
  $region15: #{align_sage_forward.4} parent=0 // pred_check_branch
    %32 = sbr.rel (0) target = $region17
  $region16: #{align_sage_forward.4} parent=0 // pred_region
    _
  $region17: #{align_sage_forward.4} parent=0 // pred_fallthru
    _
  // Predicated region
  $region18: #{align_sage_forward.4} parent=0 // pred_check
    _
  $region19: #{align_sage_forward.4} parent=0 // pred_check_branch
    %34 = sbr.rel (0) target = $region21
  $region20: #{align_sage_forward.4} parent=0 // pred_region
    _
  $region21: #{align_sage_forward.4} parent=0 // pred_fallthru
    _
  // Predicated region
  $region22: #{align_sage_forward.4} parent=0 // pred_check
    _
  $region23: #{align_sage_forward.4} parent=0 // pred_check_branch
    %36 = sbr.rel (0) target = $region25
  $region24: #{align_sage_forward.4} parent=0 // pred_region
    _
  $region25: #{align_sage_forward.4} parent=0 // pred_fallthru
    _
  // Predicated region
  $region26: #{align_sage_forward.4} parent=0 // pred_check
    _
  $region27: #{align_sage_forward.4} parent=0 // pred_check_branch
    %38 = sbr.rel (0) target = $region29
  $region28: #{align_sage_forward.4} parent=0 // pred_region
    _
  $region29: #{align_sage_forward.4} parent=0 // pred_fallthru
    _
  // Predicated region
  $region30: #{align_sage_forward.4} parent=0 // pred_check
    _
  $region31: #{align_sage_forward.4} parent=0 // pred_check_branch
    %40 = sbr.rel (0) target = $region33
  $region32: #{align_sage_forward.4} parent=0 // pred_region
    _
  $region33: #{align_sage_forward.4} parent=0 // pred_fallthru
    _
  // Predicated region
  $region34: #{align_sage_forward.4} parent=0 // pred_check
    _
  $region35: #{align_sage_forward.4} parent=0 // pred_check_branch
    %42 = sbr.rel (0) target = $region37
  $region36: #{align_sage_forward.4} parent=0 // pred_region
    _
  $region37: #{align_sage_forward.4} parent=0 // pred_fallthru
    _
  // Predicated region
  $region38: #{align_sage_forward.4} parent=0 // pred_check
    _
  $region39: #{align_sage_forward.4} parent=0 // pred_check_branch
    %44 = sbr.rel (0) target = $region41
  $region40: #{align_sage_forward.4} parent=0 // pred_region
    _
  $region41: #{align_sage_forward.4} parent=0 // pred_fallthru
    _
  %v46 = vld [vmem:[%s4] sm:$0x3]
  %v47 = vpack.c.bf16 %v46, %v46
  %v48 = vld [vmem:[%s5] sm:$0x3]
  %v49 = vpack.c.bf16 %v48, %v48
  %v50 = vld [vmem:[#allocation3] sm:$0x1]
  %v51 = vpack.c.bf16 %v50, %v50
  %v52 = vld [vmem:[#allocation4] sm:$0x1]
  %v53 = vpack.c.bf16 %v52, %v52
  %v54 = vld [vmem:[#allocation2] sm:$0x1]
  %v55 = vld [vmem:[#allocation5] sm:$0x1]
  %v56 = vld [vmem:[%s0] sm:$0xf]
  %v57 = vld [vmem:[%s0 + $0x4] sm:$0xf]
  %v58 = vld [vmem:[%s0 + $0x8] sm:$0xf]
  %v59 = vld [vmem:[%s0 + $0xc] sm:$0xf]
  %v60 = vld [vmem:[%s0 + $0x10] sm:$0xf]
  %v61 = vld [vmem:[%s0 + $0x14] sm:$0x7]
  %v62 = vld [vmem:[%s3] sm:$0x1]
  %v63 = vpack.c.bf16 %v62, %v62
  %v64 = vld [vmem:[%s1] sm:$0xf]
  %v65 = vld [vmem:[%s1 + $0x4] sm:$0xf]
  %v66 = vld [vmem:[%s1 + $0x8] sm:$0xf]
  %v67 = vld [vmem:[%s1 + $0xc] sm:$0xf]
  %v68 = vld [vmem:[%s1 + $0x10] sm:$0xf]
  %v69 = vld [vmem:[%s1 + $0x14] sm:$0x7]
  %v71 = vpack.i.b16 %v63, %v63
  %v73 = vlaneseq
  %v74 = vshrl.u32 %v73, 7
  %v75 = vsub.s32 0, %v74
  %v76 = vrot.slane %v71, %v75
  %v78 = vunpack.c.l.b16 %v76
  %v79 = vpack.c.b16 %v78, %v78
  %v81 = vmul.bf16 %v64, %v79
  %v82 = vmul.bf16 %v65, %v79
  %v83 = vmul.bf16 %v66, %v79
  %v84 = vmul.bf16 %v67, %v79
  %v85 = vmul.bf16 %v68, %v79
  %v86 = vmul.bf16 %v69, %v79
  %v87 = vld [vmem:[%s2] sm:$0xf]
  %v88 = vld [vmem:[%s2 + $0x4] sm:$0xf]
  %v89 = vld [vmem:[%s2 + $0x8] sm:$0xf]
  %v90 = vld [vmem:[%s2 + $0xc] sm:$0xf]
  %v91 = vld [vmem:[%s2 + $0x10] sm:$0xf]
  %v92 = vld [vmem:[%s2 + $0x14] sm:$0x7]
  %v93 = vunpack.c.l.bf16 %v81
  %v94 = vunpack.c.l.bf16 %v82
  %v95 = vunpack.c.l.bf16 %v83
  %v96 = vunpack.c.l.bf16 %v84
  %v97 = vunpack.c.l.bf16 %v85
  %v98 = vunpack.c.l.bf16 %v86
  %vm99 = vcmask 367616
  %v100 = vsel %vm99, %v93, 0.0
  %101 = vadd.xlane.f32.xlu0 %v100
  %v102 = vpop.xlane.xlu0 %101
  %v103 = vsel %vm99, %v94, 0.0
  %104 = vadd.xlane.f32.xlu0 %v103
  %v105 = vpop.xlane.xlu0 %104
  %v106 = vsel %vm99, %v95, 0.0
  %107 = vadd.xlane.f32.xlu0 %v106
  %v108 = vpop.xlane.xlu0 %107
  %v109 = vsel %vm99, %v96, 0.0
  %110 = vadd.xlane.f32.xlu0 %v109
  %v111 = vpop.xlane.xlu0 %110
  %v112 = vsel %vm99, %v97, 0.0
  %113 = vadd.xlane.f32.xlu0 %v112
  %v114 = vpop.xlane.xlu0 %113
  %vm115 = vcmask 364544
  %v116 = vsel %vm115, %v98, 0.0
  %117 = vadd.xlane.f32.xlu0 %v116
  %v118 = vpop.xlane.xlu0 %117
  %v119 = vmax.f32 %v102, 1.0
  %v120 = vmax.f32 %v105, 1.0
  %v121 = vmax.f32 %v108, 1.0
  %v122 = vmax.f32 %v111, 1.0
  %v123 = vmax.f32 %v114, 1.0
  %v124 = vmax.f32 %v118, 1.0
  %v125 = vrcp.pop %v119
  %v126 = vrcp.pop %v120
  %v127 = vrcp.pop %v121
  %v128 = vrcp.pop %v122
  %v129 = vrcp.pop %v123
  %v130 = vrcp.pop %v124
  %v137 = vunpack.c.l.b16 %v87
  %v138 = vunpack.c.l.b16 %v88
  %v139 = vunpack.c.l.b16 %v89
  %v140 = vunpack.c.l.b16 %v90
  %v141 = vunpack.c.l.b16 %v91
  %v142 = vunpack.c.l.b16 %v92
  %v143 = vpack.c.b16 %v138, %v137
  %v144 = vpack.c.b16 %v140, %v139
  %v145 = vpack.c.b16 %v142, %v141
  %vm146 = vcmask 15360
  %v148 = vsel %vm146, %v143, 0
  %v151 = vsel %vm146, %v144, 0
  %v154 = vsel %vm146, %v145, 0
  %vm156 = vcmask 1040384
  %v158 = vsel %vm156, %v47, 0
  %160 = vmatprep.subr.bf16.mxu0 0
  %161 = vmatpush1.bf16.msra.mxu0 0
  %162 = vmatprep.subr.bf16.mxu0 0
  %163 = vmatpush1.bf16.msra.mxu0 0
  %164 = vmatprep.subr.bf16.mxu0 0
  %165 = vmatpush1.bf16.msra.mxu0 0
  %166 = vmatprep.subr.bf16.mxu0 0
  %167 = vmatpush1.bf16.msra.mxu0 0
  %168 = vmatprep.subr.bf16.mxu0 0
  %169 = vmatpush1.bf16.msra.mxu0 0
  %170 = vmatprep.subr.bf16.mxu0 0
  %171 = vmatpush1.bf16.msra.mxu0 0
  %172 = vmatprep.subr.bf16.mxu0 0
  %173 = vmatpush1.bf16.msra.mxu0 0
  %174 = vmatprep.subr.bf16.mxu0 0
  %175 = vmatpush1.bf16.msra.mxu0 %v158
  %176 = vmatprep.subr.bf16.mxu0 0
  %177 = vmatpush2.bf16.msra.mxu0 0
  %178 = vmatprep.subr.bf16.mxu0 0
  %179 = vmatpush2.bf16.msra.mxu0 0
  %180 = vmatprep.subr.bf16.mxu0 0
  %181 = vmatpush2.bf16.msra.mxu0 0
  %182 = vmatprep.subr.bf16.mxu0 0
  %183 = vmatpush2.bf16.msra.mxu0 0
  %184 = vmatprep.subr.bf16.mxu0 0
  %185 = vmatpush2.bf16.msra.mxu0 0
  %186 = vmatprep.subr.bf16.mxu0 0
  %187 = vmatpush2.bf16.msra.mxu0 0
  %188 = vmatprep.subr.bf16.mxu0 0
  %189 = vmatpush2.bf16.msra.mxu0 0
  %190 = vmatprep.subr.bf16.mxu0 0
  %191 = vmatpush2.bf16.msra.mxu0 0
  %192 = vmatprep.mubr.bf16.mxu0 0
  %193 = vmatmul.mubr.bf16.gmra.mxu0 %v148
  %v194 = vpop.f32.mrf.mxu0
  %v195 = vadd.f32 0.0, %v194
  %v196 = vpop.f32.mrf.mxu0
  %v197 = vpop.f32.mrf.mxu0
  %v198 = vadd.f32 0.0, %v197
  %v199 = vpop.f32.mrf.mxu0
  %200 = vmatprep.mubr.bf16.mxu0 0
  %201 = vmatmul.mubr.bf16.gmra.mxu0 %v151
  %v202 = vpop.f32.mrf.mxu0
  %v203 = vadd.f32 0.0, %v202
  %v204 = vpop.f32.mrf.mxu0
  %v205 = vpop.f32.mrf.mxu0
  %v206 = vadd.f32 0.0, %v205
  %v207 = vpop.f32.mrf.mxu0
  %208 = vmatprep.mubr.bf16.mxu0 0
  %209 = vmatmul.mubr.bf16.gmra.mxu0 %v154
  %v210 = vpop.f32.mrf.mxu0
  %v211 = vadd.f32 0.0, %v210
  %v212 = vpop.f32.mrf.mxu0
  %v213 = vpop.f32.mrf.mxu0
  %v214 = vadd.f32 0.0, %v213
  %v215 = vpop.f32.mrf.mxu0
  %216 = vdwg.mxu0
  %v217 = vpack.c.bf16 %v198, %v195
  %v218 = vpack.c.bf16 %v206, %v203
  %v219 = vpack.c.bf16 %v214, %v211
  %v226 = vunpack.c.l.b16 %v56
  %v227 = vunpack.c.l.b16 %v57
  %v228 = vunpack.c.l.b16 %v58
  %v229 = vunpack.c.l.b16 %v59
  %v230 = vunpack.c.l.b16 %v60
  %v231 = vunpack.c.l.b16 %v61
  %v232 = vpack.c.b16 %v227, %v226
  %v233 = vpack.c.b16 %v229, %v228
  %v234 = vpack.c.b16 %v231, %v230
  %v236 = vsel %vm99, %v232, 0
  %v239 = vsel %vm99, %v233, 0
  %v242 = vsel %vm99, %v234, 0
  %vm244 = vcmask 1045504
  %vm245 = vcmask 1046528
  %v246 = vsel %vm244, 4294967295, 65535
  %v247 = vsel %vm245, %v246, 0
  %v249 = vand.u32 %v219, %v247
  %251 = vmatprep.subr.bf16.mxu0 0
  %252 = vmatpush1.bf16.msra.mxu0 0
  %253 = vmatprep.subr.bf16.mxu0 0
  %254 = vmatpush1.bf16.msra.mxu0 0
  %255 = vmatprep.subr.bf16.mxu0 0
  %256 = vmatpush1.bf16.msra.mxu0 0
  %257 = vmatprep.subr.bf16.mxu0 0
  %258 = vmatpush1.bf16.msra.mxu0 0
  %259 = vmatprep.subr.bf16.mxu0 0
  %260 = vmatpush1.bf16.msra.mxu0 0
  %261 = vmatprep.subr.bf16.mxu0 0
  %262 = vmatpush1.bf16.msra.mxu0 %v249
  %263 = vmatprep.subr.bf16.mxu0 0
  %264 = vmatpush1.bf16.msra.mxu0 %v218
  %265 = vmatprep.subr.bf16.mxu0 0
  %266 = vmatpush1.bf16.msra.mxu0 %v217
  %267 = vmatprep.subr.bf16.mxu0 0
  %268 = vmatpush2.bf16.msra.mxu0 0
  %269 = vmatprep.subr.bf16.mxu0 0
  %270 = vmatpush2.bf16.msra.mxu0 0
  %271 = vmatprep.subr.bf16.mxu0 0
  %272 = vmatpush2.bf16.msra.mxu0 0
  %273 = vmatprep.subr.bf16.mxu0 0
  %274 = vmatpush2.bf16.msra.mxu0 0
  %275 = vmatprep.subr.bf16.mxu0 0
  %276 = vmatpush2.bf16.msra.mxu0 0
  %277 = vmatprep.subr.bf16.mxu0 0
  %278 = vmatpush2.bf16.msra.mxu0 0
  %279 = vmatprep.subr.bf16.mxu0 0
  %280 = vmatpush2.bf16.msra.mxu0 0
  %281 = vmatprep.subr.bf16.mxu0 0
  %282 = vmatpush2.bf16.msra.mxu0 0
  %283 = vmatprep.mubr.bf16.mxu0 0
  %284 = vmatmul.mubr.bf16.gmra.mxu0 %v236
  %v285 = vpop.f32.mrf.mxu0
  %v286 = vadd.f32 0.0, %v285
  %v287 = vpop.f32.mrf.mxu0
  %v288 = vpop.f32.mrf.mxu0
  %v289 = vadd.f32 0.0, %v288
  %v290 = vpop.f32.mrf.mxu0
  %291 = vmatprep.mubr.bf16.mxu0 0
  %292 = vmatmul.mubr.bf16.gmra.mxu0 %v239
  %v293 = vpop.f32.mrf.mxu0
  %v294 = vadd.f32 0.0, %v293
  %v295 = vpop.f32.mrf.mxu0
  %v296 = vpop.f32.mrf.mxu0
  %v297 = vadd.f32 0.0, %v296
  %v298 = vpop.f32.mrf.mxu0
  %299 = vmatprep.mubr.bf16.mxu0 0
  %300 = vmatmul.mubr.bf16.gmra.mxu0 %v242
  %v301 = vpop.f32.mrf.mxu0
  %v302 = vadd.f32 0.0, %v301
  %v303 = vpop.f32.mrf.mxu0
  %v304 = vpop.f32.mrf.mxu0
  %v305 = vadd.f32 0.0, %v304
  %v306 = vpop.f32.mrf.mxu0
  %307 = vdwg.mxu0
  %v308 = vmul.f32 %v286, %v125
  %v309 = vmul.f32 %v289, %v126
  %v310 = vmul.f32 %v294, %v127
  %v311 = vmul.f32 %v297, %v128
  %v312 = vmul.f32 %v302, %v129
  %v313 = vmul.f32 %v305, %v130
  %v315 = vsel %vm156, %v49, 0
  %317 = vmatprep.subr.bf16.mxu0 0
  %318 = vmatpush1.bf16.msra.mxu0 0
  %319 = vmatprep.subr.bf16.mxu0 0
  %320 = vmatpush1.bf16.msra.mxu0 0
  %321 = vmatprep.subr.bf16.mxu0 0
  %322 = vmatpush1.bf16.msra.mxu0 0
  %323 = vmatprep.subr.bf16.mxu0 0
  %324 = vmatpush1.bf16.msra.mxu0 0
  %325 = vmatprep.subr.bf16.mxu0 0
  %326 = vmatpush1.bf16.msra.mxu0 0
  %327 = vmatprep.subr.bf16.mxu0 0
  %328 = vmatpush1.bf16.msra.mxu0 0
  %329 = vmatprep.subr.bf16.mxu0 0
  %330 = vmatpush1.bf16.msra.mxu0 0
  %331 = vmatprep.subr.bf16.mxu0 0
  %332 = vmatpush1.bf16.msra.mxu0 %v315
  %333 = vmatprep.subr.bf16.mxu0 0
  %334 = vmatpush2.bf16.msra.mxu0 0
  %335 = vmatprep.subr.bf16.mxu0 0
  %336 = vmatpush2.bf16.msra.mxu0 0
  %337 = vmatprep.subr.bf16.mxu0 0
  %338 = vmatpush2.bf16.msra.mxu0 0
  %339 = vmatprep.subr.bf16.mxu0 0
  %340 = vmatpush2.bf16.msra.mxu0 0
  %341 = vmatprep.subr.bf16.mxu0 0
  %342 = vmatpush2.bf16.msra.mxu0 0
  %343 = vmatprep.subr.bf16.mxu0 0
  %344 = vmatpush2.bf16.msra.mxu0 0
  %345 = vmatprep.subr.bf16.mxu0 0
  %346 = vmatpush2.bf16.msra.mxu0 0
  %347 = vmatprep.subr.bf16.mxu0 0
  %348 = vmatpush2.bf16.msra.mxu0 0
  %349 = vmatprep.mubr.bf16.mxu0 0
  %350 = vmatmul.mubr.bf16.gmra.mxu0 %v148
  %v351 = vpop.f32.mrf.mxu0
  %v352 = vadd.f32 0.0, %v351
  %v353 = vpop.f32.mrf.mxu0
  %v354 = vpop.f32.mrf.mxu0
  %v355 = vadd.f32 0.0, %v354
  %v356 = vpop.f32.mrf.mxu0
  %357 = vmatprep.mubr.bf16.mxu0 0
  %358 = vmatmul.mubr.bf16.gmra.mxu0 %v151
  %v359 = vpop.f32.mrf.mxu0
  %v360 = vadd.f32 0.0, %v359
  %v361 = vpop.f32.mrf.mxu0
  %v362 = vpop.f32.mrf.mxu0
  %v363 = vadd.f32 0.0, %v362
  %v364 = vpop.f32.mrf.mxu0
  %365 = vmatprep.mubr.bf16.mxu0 0
  %366 = vmatmul.mubr.bf16.gmra.mxu0 %v154
  %v367 = vpop.f32.mrf.mxu0
  %v368 = vadd.f32 0.0, %v367
  %v369 = vpop.f32.mrf.mxu0
  %v370 = vpop.f32.mrf.mxu0
  %v371 = vadd.f32 0.0, %v370
  %v372 = vpop.f32.mrf.mxu0
  %373 = vdwg.mxu0
  %v374 = vadd.f32 %v308, %v352
  %v375 = vadd.f32 %v309, %v355
  %v376 = vadd.f32 %v310, %v360
  %v377 = vadd.f32 %v311, %v363
  %v378 = vadd.f32 %v312, %v368
  %v379 = vadd.f32 %v313, %v371
  %v381 = vlaneseq
  %v382 = vshrl.u32 %v381, 7
  %v383 = vsub.s32 0, %v382
  %v384 = vrot.slane %v54, %v383
  %v386 = vadd.f32 %v374, %v384
  %v387 = vadd.f32 %v375, %v384
  %v388 = vadd.f32 %v376, %v384
  %v389 = vadd.f32 %v377, %v384
  %v390 = vadd.f32 %v378, %v384
  %v391 = vadd.f32 %v379, %v384
  %vm392 = vcmask 7168
  %393 = vst.msk [vmem:[%s10] sm:$0xff] %vm392, %v386
  %394 = vst.msk [vmem:[%s10 + $0x8] sm:$0xff] %vm392, %v387
  %395 = vst.msk [vmem:[%s10 + $0x10] sm:$0xff] %vm392, %v388
  %396 = vst.msk [vmem:[%s10 + $0x18] sm:$0xff] %vm392, %v389
  %397 = vst.msk [vmem:[%s10 + $0x20] sm:$0xff] %vm392, %v390
  %vm398 = vcmask 4096
  %399 = vst.msk [vmem:[%s10 + $0x28] sm:$0x1f] %vm398, %v391
  %v400 = vpack.c.bf16 %v387, %v386
  %v401 = vpack.c.bf16 %v389, %v388
  %v402 = vpack.c.bf16 %v391, %v390
  %v404 = vsel %vm392, %v400, 0
  %v407 = vsel %vm392, %v401, 0
  %v410 = vsel %vm392, %v402, 0
  %v412 = vsel 0, 4294967295, 65535
  %v413 = vsel %vm156, %v412, 0
  %v415 = vand.u32 %v51, %v413
  %417 = vmatprep.subr.bf16.mxu0 0
  %418 = vmatpush1.bf16.msra.mxu0 0
  %419 = vmatprep.subr.bf16.mxu0 0
  %420 = vmatpush1.bf16.msra.mxu0 0
  %421 = vmatprep.subr.bf16.mxu0 0
  %422 = vmatpush1.bf16.msra.mxu0 0
  %423 = vmatprep.subr.bf16.mxu0 0
  %424 = vmatpush1.bf16.msra.mxu0 0
  %425 = vmatprep.subr.bf16.mxu0 0
  %426 = vmatpush1.bf16.msra.mxu0 0
  %427 = vmatprep.subr.bf16.mxu0 0
  %428 = vmatpush1.bf16.msra.mxu0 0
  %429 = vmatprep.subr.bf16.mxu0 0
  %430 = vmatpush1.bf16.msra.mxu0 0
  %431 = vmatprep.subr.bf16.mxu0 0
  %432 = vmatpush1.bf16.msra.mxu0 %v415
  %433 = vmatprep.subr.bf16.mxu0 0
  %434 = vmatpush2.bf16.msra.mxu0 0
  %435 = vmatprep.subr.bf16.mxu0 0
  %436 = vmatpush2.bf16.msra.mxu0 0
  %437 = vmatprep.subr.bf16.mxu0 0
  %438 = vmatpush2.bf16.msra.mxu0 0
  %439 = vmatprep.subr.bf16.mxu0 0
  %440 = vmatpush2.bf16.msra.mxu0 0
  %441 = vmatprep.subr.bf16.mxu0 0
  %442 = vmatpush2.bf16.msra.mxu0 0
  %443 = vmatprep.subr.bf16.mxu0 0
  %444 = vmatpush2.bf16.msra.mxu0 0
  %445 = vmatprep.subr.bf16.mxu0 0
  %446 = vmatpush2.bf16.msra.mxu0 0
  %447 = vmatprep.subr.bf16.mxu0 0
  %448 = vmatpush2.bf16.msra.mxu0 0
  %449 = vmatprep.mubr.bf16.mxu0 0
  %450 = vmatmul.mubr.bf16.gmra.mxu0 %v404
  %v451 = vpop.f32.mrf.mxu0
  %v452 = vadd.f32 0.0, %v451
  %v453 = vpop.f32.mrf.mxu0
  %v454 = vpop.f32.mrf.mxu0
  %v455 = vadd.f32 0.0, %v454
  %v456 = vpop.f32.mrf.mxu0
  %457 = vmatprep.mubr.bf16.mxu0 0
  %458 = vmatmul.mubr.bf16.gmra.mxu0 %v407
  %v459 = vpop.f32.mrf.mxu0
  %v460 = vadd.f32 0.0, %v459
  %v461 = vpop.f32.mrf.mxu0
  %v462 = vpop.f32.mrf.mxu0
  %v463 = vadd.f32 0.0, %v462
  %v464 = vpop.f32.mrf.mxu0
  %465 = vmatprep.mubr.bf16.mxu0 0
  %466 = vmatmul.mubr.bf16.gmra.mxu0 %v410
  %v467 = vpop.f32.mrf.mxu0
  %v468 = vadd.f32 0.0, %v467
  %v469 = vpop.f32.mrf.mxu0
  %v470 = vpop.f32.mrf.mxu0
  %v471 = vadd.f32 0.0, %v470
  %v472 = vpop.f32.mrf.mxu0
  %473 = vdwg.mxu0
  %v474 = vpack.c.bf16 %v455, %v452
  %v475 = vpack.c.bf16 %v463, %v460
  %v476 = vpack.c.bf16 %v471, %v468
  %v478 = vand.u32 %v53, %v413
  %480 = vmatprep.subr.bf16.mxu0 0
  %481 = vmatpush1.bf16.msra.mxu0 0
  %482 = vmatprep.subr.bf16.mxu0 0
  %483 = vmatpush1.bf16.msra.mxu0 0
  %484 = vmatprep.subr.bf16.mxu0 0
  %485 = vmatpush1.bf16.msra.mxu0 0
  %486 = vmatprep.subr.bf16.mxu0 0
  %487 = vmatpush1.bf16.msra.mxu0 0
  %488 = vmatprep.subr.bf16.mxu0 0
  %489 = vmatpush1.bf16.msra.mxu0 0
  %490 = vmatprep.subr.bf16.mxu0 0
  %491 = vmatpush1.bf16.msra.mxu0 0
  %492 = vmatprep.subr.bf16.mxu0 0
  %493 = vmatpush1.bf16.msra.mxu0 0
  %494 = vmatprep.subr.bf16.mxu0 0
  %495 = vmatpush1.bf16.msra.mxu0 %v478
  %496 = vmatprep.subr.bf16.mxu0 0
  %497 = vmatpush2.bf16.msra.mxu0 0
  %498 = vmatprep.subr.bf16.mxu0 0
  %499 = vmatpush2.bf16.msra.mxu0 0
  %500 = vmatprep.subr.bf16.mxu0 0
  %501 = vmatpush2.bf16.msra.mxu0 0
  %502 = vmatprep.subr.bf16.mxu0 0
  %503 = vmatpush2.bf16.msra.mxu0 0
  %504 = vmatprep.subr.bf16.mxu0 0
  %505 = vmatpush2.bf16.msra.mxu0 0
  %506 = vmatprep.subr.bf16.mxu0 0
  %507 = vmatpush2.bf16.msra.mxu0 0
  %508 = vmatprep.subr.bf16.mxu0 0
  %509 = vmatpush2.bf16.msra.mxu0 0
  %510 = vmatprep.subr.bf16.mxu0 0
  %511 = vmatpush2.bf16.msra.mxu0 0
  %512 = vmatprep.mubr.bf16.mxu0 0
  %513 = vmatmul.mubr.bf16.gmra.mxu0 %v404
  %v514 = vpop.f32.mrf.mxu0
  %v515 = vadd.f32 0.0, %v514
  %v516 = vpop.f32.mrf.mxu0
  %v517 = vpop.f32.mrf.mxu0
  %v518 = vadd.f32 0.0, %v517
  %v519 = vpop.f32.mrf.mxu0
  %520 = vmatprep.mubr.bf16.mxu0 0
  %521 = vmatmul.mubr.bf16.gmra.mxu0 %v407
  %v522 = vpop.f32.mrf.mxu0
  %v523 = vadd.f32 0.0, %v522
  %v524 = vpop.f32.mrf.mxu0
  %v525 = vpop.f32.mrf.mxu0
  %v526 = vadd.f32 0.0, %v525
  %v527 = vpop.f32.mrf.mxu0
  %528 = vmatprep.mubr.bf16.mxu0 0
  %529 = vmatmul.mubr.bf16.gmra.mxu0 %v410
  %v530 = vpop.f32.mrf.mxu0
  %v531 = vadd.f32 0.0, %v530
  %v532 = vpop.f32.mrf.mxu0
  %v533 = vpop.f32.mrf.mxu0
  %v534 = vadd.f32 0.0, %v533
  %v535 = vpop.f32.mrf.mxu0
  %536 = vdwg.mxu0
  %v543 = vunpack.c.l.b16 %v81
  %v544 = vunpack.c.l.b16 %v82
  %v545 = vunpack.c.l.b16 %v83
  %v546 = vunpack.c.l.b16 %v84
  %v547 = vunpack.c.l.b16 %v85
  %v548 = vunpack.c.l.b16 %v86
  %v549 = vpack.c.b16 %v544, %v543
  %v550 = vpack.c.b16 %v546, %v545
  %v551 = vpack.c.b16 %v548, %v547
  %v553 = vsel %vm99, %v549, 0
  %v556 = vsel %vm99, %v550, 0
  %v559 = vsel %vm99, %v551, 0
  %v562 = vand.u32 %v476, %v247
  %564 = vmatprep.subr.bf16.mxu0 0
  %565 = vmatpush1.bf16.msra.mxu0 0
  %566 = vmatprep.subr.bf16.mxu0 0
  %567 = vmatpush1.bf16.msra.mxu0 0
  %568 = vmatprep.subr.bf16.mxu0 0
  %569 = vmatpush1.bf16.msra.mxu0 0
  %570 = vmatprep.subr.bf16.mxu0 0
  %571 = vmatpush1.bf16.msra.mxu0 0
  %572 = vmatprep.subr.bf16.mxu0 0
  %573 = vmatpush1.bf16.msra.mxu0 0
  %574 = vmatprep.subr.bf16.mxu0 0
  %575 = vmatpush1.bf16.msra.mxu0 %v562
  %576 = vmatprep.subr.bf16.mxu0 0
  %577 = vmatpush1.bf16.msra.mxu0 %v475
  %578 = vmatprep.subr.bf16.mxu0 0
  %579 = vmatpush1.bf16.msra.mxu0 %v474
  %580 = vmatprep.subr.bf16.mxu0 0
  %581 = vmatpush2.bf16.msra.mxu0 0
  %582 = vmatprep.subr.bf16.mxu0 0
  %583 = vmatpush2.bf16.msra.mxu0 0
  %584 = vmatprep.subr.bf16.mxu0 0
  %585 = vmatpush2.bf16.msra.mxu0 0
  %586 = vmatprep.subr.bf16.mxu0 0
  %587 = vmatpush2.bf16.msra.mxu0 0
  %588 = vmatprep.subr.bf16.mxu0 0
  %589 = vmatpush2.bf16.msra.mxu0 0
  %590 = vmatprep.subr.bf16.mxu0 0
  %591 = vmatpush2.bf16.msra.mxu0 0
  %592 = vmatprep.subr.bf16.mxu0 0
  %593 = vmatpush2.bf16.msra.mxu0 0
  %594 = vmatprep.subr.bf16.mxu0 0
  %595 = vmatpush2.bf16.msra.mxu0 0
  %596 = vmatprep.mubr.bf16.mxu0 0
  %597 = vmatmul.mubr.bf16.gmra.mxu0 %v553
  %v598 = vpop.f32.mrf.mxu0
  %v599 = vadd.f32 %v515, %v598
  %v600 = vpop.f32.mrf.mxu0
  %v601 = vpop.f32.mrf.mxu0
  %v602 = vadd.f32 %v518, %v601
  %v603 = vpop.f32.mrf.mxu0
  %604 = vmatprep.mubr.bf16.mxu0 0
  %605 = vmatmul.mubr.bf16.gmra.mxu0 %v556
  %v606 = vpop.f32.mrf.mxu0
  %v607 = vadd.f32 %v523, %v606
  %v608 = vpop.f32.mrf.mxu0
  %v609 = vpop.f32.mrf.mxu0
  %v610 = vadd.f32 %v526, %v609
  %v611 = vpop.f32.mrf.mxu0
  %612 = vmatprep.mubr.bf16.mxu0 0
  %613 = vmatmul.mubr.bf16.gmra.mxu0 %v559
  %v614 = vpop.f32.mrf.mxu0
  %v615 = vadd.f32 %v531, %v614
  %v616 = vpop.f32.mrf.mxu0
  %v617 = vpop.f32.mrf.mxu0
  %v618 = vadd.f32 %v534, %v617
  %v619 = vpop.f32.mrf.mxu0
  %620 = vdwg.mxu0
  %v622 = vlaneseq
  %v623 = vshrl.u32 %v622, 7
  %v624 = vsub.s32 0, %v623
  %v625 = vrot.slane %v55, %v624
  %v627 = vadd.f32 %v599, %v625
  %v628 = vadd.f32 %v602, %v625
  %v629 = vadd.f32 %v607, %v625
  %v630 = vadd.f32 %v610, %v625
  %v631 = vadd.f32 %v615, %v625
  %v632 = vadd.f32 %v618, %v625
  %633 = vst.msk [vmem:[%s11] sm:$0xff] %vm392, %v627
  %634 = vst.msk [vmem:[%s11 + $0x8] sm:$0xff] %vm392, %v628
  %635 = vst.msk [vmem:[%s11 + $0x10] sm:$0xff] %vm392, %v629
  %636 = vst.msk [vmem:[%s11 + $0x18] sm:$0xff] %vm392, %v630
  %637 = vst.msk [vmem:[%s11 + $0x20] sm:$0xff] %vm392, %v631
  %638 = vst.msk [vmem:[%s11 + $0x28] sm:$0x1f] %vm398, %v632
  %s639 = scalar_lea.vmem %s0, 24
  %v640 = vld [vmem:[%s639] sm:$0xf]
  %v641 = vld [vmem:[%s639 + $0x4] sm:$0xf]
  %v642 = vld [vmem:[%s639 + $0x8] sm:$0xf]
  %v643 = vld [vmem:[%s639 + $0xc] sm:$0xf]
  %v644 = vld [vmem:[%s639 + $0x10] sm:$0xf]
  %v645 = vld [vmem:[%s639 + $0x14] sm:$0x7]
  %s646 = scalar_lea.vmem %s3, 1
  %v647 = vld [vmem:[%s646] sm:$0x1]
  %v648 = vpack.c.bf16 %v647, %v647
  %s649 = scalar_lea.vmem %s1, 24
  %v650 = vld [vmem:[%s649] sm:$0xf]
  %v651 = vld [vmem:[%s649 + $0x4] sm:$0xf]
  %v652 = vld [vmem:[%s649 + $0x8] sm:$0xf]
  %v653 = vld [vmem:[%s649 + $0xc] sm:$0xf]
  %v654 = vld [vmem:[%s649 + $0x10] sm:$0xf]
  %v655 = vld [vmem:[%s649 + $0x14] sm:$0x7]
  %v657 = vpack.i.b16 %v648, %v648
  %v659 = vlaneseq
  %v660 = vshrl.u32 %v659, 7
  %v661 = vsub.s32 0, %v660
  %v662 = vrot.slane %v657, %v661
  %v664 = vunpack.c.l.b16 %v662
  %v665 = vpack.c.b16 %v664, %v664
  %v667 = vmul.bf16 %v650, %v665
  %v668 = vmul.bf16 %v651, %v665
  %v669 = vmul.bf16 %v652, %v665
  %v670 = vmul.bf16 %v653, %v665
  %v671 = vmul.bf16 %v654, %v665
  %v672 = vmul.bf16 %v655, %v665
  %s673 = scalar_lea.vmem %s2, 24
  %v674 = vld [vmem:[%s673] sm:$0xf]
  %v675 = vld [vmem:[%s673 + $0x4] sm:$0xf]
  %v676 = vld [vmem:[%s673 + $0x8] sm:$0xf]
  %v677 = vld [vmem:[%s673 + $0xc] sm:$0xf]
  %v678 = vld [vmem:[%s673 + $0x10] sm:$0xf]
  %v679 = vld [vmem:[%s673 + $0x14] sm:$0x7]
  %v680 = vunpack.c.l.bf16 %v667
  %v681 = vunpack.c.l.bf16 %v668
  %v682 = vunpack.c.l.bf16 %v669
  %v683 = vunpack.c.l.bf16 %v670
  %v684 = vunpack.c.l.bf16 %v671
  %v685 = vunpack.c.l.bf16 %v672
  %v686 = vsel %vm99, %v680, 0.0
  %687 = vadd.xlane.f32.xlu0 %v686
  %v688 = vpop.xlane.xlu0 %687
  %v689 = vsel %vm99, %v681, 0.0
  %690 = vadd.xlane.f32.xlu0 %v689
  %v691 = vpop.xlane.xlu0 %690
  %v692 = vsel %vm99, %v682, 0.0
  %693 = vadd.xlane.f32.xlu0 %v692
  %v694 = vpop.xlane.xlu0 %693
  %v695 = vsel %vm99, %v683, 0.0
  %696 = vadd.xlane.f32.xlu0 %v695
  %v697 = vpop.xlane.xlu0 %696
  %v698 = vsel %vm99, %v684, 0.0
  %699 = vadd.xlane.f32.xlu0 %v698
  %v700 = vpop.xlane.xlu0 %699
  %v701 = vsel %vm115, %v685, 0.0
  %702 = vadd.xlane.f32.xlu0 %v701
  %v703 = vpop.xlane.xlu0 %702
  %v704 = vmax.f32 %v688, 1.0
  %v705 = vmax.f32 %v691, 1.0
  %v706 = vmax.f32 %v694, 1.0
  %v707 = vmax.f32 %v697, 1.0
  %v708 = vmax.f32 %v700, 1.0
  %v709 = vmax.f32 %v703, 1.0
  %v710 = vrcp.pop %v704
  %v711 = vrcp.pop %v705
  %v712 = vrcp.pop %v706
  %v713 = vrcp.pop %v707
  %v714 = vrcp.pop %v708
  %v715 = vrcp.pop %v709
  %v722 = vunpack.c.l.b16 %v674
  %v723 = vunpack.c.l.b16 %v675
  %v724 = vunpack.c.l.b16 %v676
  %v725 = vunpack.c.l.b16 %v677
  %v726 = vunpack.c.l.b16 %v678
  %v727 = vunpack.c.l.b16 %v679
  %v728 = vpack.c.b16 %v723, %v722
  %v729 = vpack.c.b16 %v725, %v724
  %v730 = vpack.c.b16 %v727, %v726
  %v732 = vsel %vm146, %v728, 0
  %v735 = vsel %vm146, %v729, 0
  %v738 = vsel %vm146, %v730, 0
  %740 = vmatprep.subr.bf16.mxu0 0
  %741 = vmatpush1.bf16.msra.mxu0 0
  %742 = vmatprep.subr.bf16.mxu0 0
  %743 = vmatpush1.bf16.msra.mxu0 0
  %744 = vmatprep.subr.bf16.mxu0 0
  %745 = vmatpush1.bf16.msra.mxu0 0
  %746 = vmatprep.subr.bf16.mxu0 0
  %747 = vmatpush1.bf16.msra.mxu0 0
  %748 = vmatprep.subr.bf16.mxu0 0
  %749 = vmatpush1.bf16.msra.mxu0 0
  %750 = vmatprep.subr.bf16.mxu0 0
  %751 = vmatpush1.bf16.msra.mxu0 0
  %752 = vmatprep.subr.bf16.mxu0 0
  %753 = vmatpush1.bf16.msra.mxu0 0
  %754 = vmatprep.subr.bf16.mxu0 0
  %755 = vmatpush1.bf16.msra.mxu0 %v158
  %756 = vmatprep.subr.bf16.mxu0 0
  %757 = vmatpush2.bf16.msra.mxu0 0
  %758 = vmatprep.subr.bf16.mxu0 0
  %759 = vmatpush2.bf16.msra.mxu0 0
  %760 = vmatprep.subr.bf16.mxu0 0
  %761 = vmatpush2.bf16.msra.mxu0 0
  %762 = vmatprep.subr.bf16.mxu0 0
  %763 = vmatpush2.bf16.msra.mxu0 0
  %764 = vmatprep.subr.bf16.mxu0 0
  %765 = vmatpush2.bf16.msra.mxu0 0
  %766 = vmatprep.subr.bf16.mxu0 0
  %767 = vmatpush2.bf16.msra.mxu0 0
  %768 = vmatprep.subr.bf16.mxu0 0
  %769 = vmatpush2.bf16.msra.mxu0 0
  %770 = vmatprep.subr.bf16.mxu0 0
  %771 = vmatpush2.bf16.msra.mxu0 0
  %772 = vmatprep.mubr.bf16.mxu0 0
  %773 = vmatmul.mubr.bf16.gmra.mxu0 %v732
  %v774 = vpop.f32.mrf.mxu0
  %v775 = vadd.f32 0.0, %v774
  %v776 = vpop.f32.mrf.mxu0
  %v777 = vpop.f32.mrf.mxu0
  %v778 = vadd.f32 0.0, %v777
  %v779 = vpop.f32.mrf.mxu0
  %780 = vmatprep.mubr.bf16.mxu0 0
  %781 = vmatmul.mubr.bf16.gmra.mxu0 %v735
  %v782 = vpop.f32.mrf.mxu0
  %v783 = vadd.f32 0.0, %v782
  %v784 = vpop.f32.mrf.mxu0
  %v785 = vpop.f32.mrf.mxu0
  %v786 = vadd.f32 0.0, %v785
  %v787 = vpop.f32.mrf.mxu0
  %788 = vmatprep.mubr.bf16.mxu0 0
  %789 = vmatmul.mubr.bf16.gmra.mxu0 %v738
  %v790 = vpop.f32.mrf.mxu0
  %v791 = vadd.f32 0.0, %v790
  %v792 = vpop.f32.mrf.mxu0
  %v793 = vpop.f32.mrf.mxu0
  %v794 = vadd.f32 0.0, %v793
  %v795 = vpop.f32.mrf.mxu0
  %796 = vdwg.mxu0
  %v797 = vpack.c.bf16 %v778, %v775
  %v798 = vpack.c.bf16 %v786, %v783
  %v799 = vpack.c.bf16 %v794, %v791
  %v806 = vunpack.c.l.b16 %v640
  %v807 = vunpack.c.l.b16 %v641
  %v808 = vunpack.c.l.b16 %v642
  %v809 = vunpack.c.l.b16 %v643
  %v810 = vunpack.c.l.b16 %v644
  %v811 = vunpack.c.l.b16 %v645
  %v812 = vpack.c.b16 %v807, %v806
  %v813 = vpack.c.b16 %v809, %v808
  %v814 = vpack.c.b16 %v811, %v810
  %v816 = vsel %vm99, %v812, 0
  %v819 = vsel %vm99, %v813, 0
  %v822 = vsel %vm99, %v814, 0
  %v825 = vand.u32 %v799, %v247
  %827 = vmatprep.subr.bf16.mxu0 0
  %828 = vmatpush1.bf16.msra.mxu0 0
  %829 = vmatprep.subr.bf16.mxu0 0
  %830 = vmatpush1.bf16.msra.mxu0 0
  %831 = vmatprep.subr.bf16.mxu0 0
  %832 = vmatpush1.bf16.msra.mxu0 0
  %833 = vmatprep.subr.bf16.mxu0 0
  %834 = vmatpush1.bf16.msra.mxu0 0
  %835 = vmatprep.subr.bf16.mxu0 0
  %836 = vmatpush1.bf16.msra.mxu0 0
  %837 = vmatprep.subr.bf16.mxu0 0
  %838 = vmatpush1.bf16.msra.mxu0 %v825
  %839 = vmatprep.subr.bf16.mxu0 0
  %840 = vmatpush1.bf16.msra.mxu0 %v798
  %841 = vmatprep.subr.bf16.mxu0 0
  %842 = vmatpush1.bf16.msra.mxu0 %v797
  %843 = vmatprep.subr.bf16.mxu0 0
  %844 = vmatpush2.bf16.msra.mxu0 0
  %845 = vmatprep.subr.bf16.mxu0 0
  %846 = vmatpush2.bf16.msra.mxu0 0
  %847 = vmatprep.subr.bf16.mxu0 0
  %848 = vmatpush2.bf16.msra.mxu0 0
  %849 = vmatprep.subr.bf16.mxu0 0
  %850 = vmatpush2.bf16.msra.mxu0 0
  %851 = vmatprep.subr.bf16.mxu0 0
  %852 = vmatpush2.bf16.msra.mxu0 0
  %853 = vmatprep.subr.bf16.mxu0 0
  %854 = vmatpush2.bf16.msra.mxu0 0
  %855 = vmatprep.subr.bf16.mxu0 0
  %856 = vmatpush2.bf16.msra.mxu0 0
  %857 = vmatprep.subr.bf16.mxu0 0
  %858 = vmatpush2.bf16.msra.mxu0 0
  %859 = vmatprep.mubr.bf16.mxu0 0
  %860 = vmatmul.mubr.bf16.gmra.mxu0 %v816
  %v861 = vpop.f32.mrf.mxu0
  %v862 = vadd.f32 0.0, %v861
  %v863 = vpop.f32.mrf.mxu0
  %v864 = vpop.f32.mrf.mxu0
  %v865 = vadd.f32 0.0, %v864
  %v866 = vpop.f32.mrf.mxu0
  %867 = vmatprep.mubr.bf16.mxu0 0
  %868 = vmatmul.mubr.bf16.gmra.mxu0 %v819
  %v869 = vpop.f32.mrf.mxu0
  %v870 = vadd.f32 0.0, %v869
  %v871 = vpop.f32.mrf.mxu0
  %v872 = vpop.f32.mrf.mxu0
  %v873 = vadd.f32 0.0, %v872
  %v874 = vpop.f32.mrf.mxu0
  %875 = vmatprep.mubr.bf16.mxu0 0
  %876 = vmatmul.mubr.bf16.gmra.mxu0 %v822
  %v877 = vpop.f32.mrf.mxu0
  %v878 = vadd.f32 0.0, %v877
  %v879 = vpop.f32.mrf.mxu0
  %v880 = vpop.f32.mrf.mxu0
  %v881 = vadd.f32 0.0, %v880
  %v882 = vpop.f32.mrf.mxu0
  %883 = vdwg.mxu0
  %v884 = vmul.f32 %v862, %v710
  %v885 = vmul.f32 %v865, %v711
  %v886 = vmul.f32 %v870, %v712
  %v887 = vmul.f32 %v873, %v713
  %v888 = vmul.f32 %v878, %v714
  %v889 = vmul.f32 %v881, %v715
  %890 = vmatprep.subr.bf16.mxu0 0
  %891 = vmatpush1.bf16.msra.mxu0 0
  %892 = vmatprep.subr.bf16.mxu0 0
  %893 = vmatpush1.bf16.msra.mxu0 0
  %894 = vmatprep.subr.bf16.mxu0 0
  %895 = vmatpush1.bf16.msra.mxu0 0
  %896 = vmatprep.subr.bf16.mxu0 0
  %897 = vmatpush1.bf16.msra.mxu0 0
  %898 = vmatprep.subr.bf16.mxu0 0
  %899 = vmatpush1.bf16.msra.mxu0 0
  %900 = vmatprep.subr.bf16.mxu0 0
  %901 = vmatpush1.bf16.msra.mxu0 0
  %902 = vmatprep.subr.bf16.mxu0 0
  %903 = vmatpush1.bf16.msra.mxu0 0
  %904 = vmatprep.subr.bf16.mxu0 0
  %905 = vmatpush1.bf16.msra.mxu0 %v315
  %906 = vmatprep.subr.bf16.mxu0 0
  %907 = vmatpush2.bf16.msra.mxu0 0
  %908 = vmatprep.subr.bf16.mxu0 0
  %909 = vmatpush2.bf16.msra.mxu0 0
  %910 = vmatprep.subr.bf16.mxu0 0
  %911 = vmatpush2.bf16.msra.mxu0 0
  %912 = vmatprep.subr.bf16.mxu0 0
  %913 = vmatpush2.bf16.msra.mxu0 0
  %914 = vmatprep.subr.bf16.mxu0 0
  %915 = vmatpush2.bf16.msra.mxu0 0
  %916 = vmatprep.subr.bf16.mxu0 0
  %917 = vmatpush2.bf16.msra.mxu0 0
  %918 = vmatprep.subr.bf16.mxu0 0
  %919 = vmatpush2.bf16.msra.mxu0 0
  %920 = vmatprep.subr.bf16.mxu0 0
  %921 = vmatpush2.bf16.msra.mxu0 0
  %922 = vmatprep.mubr.bf16.mxu0 0
  %923 = vmatmul.mubr.bf16.gmra.mxu0 %v732
  %v924 = vpop.f32.mrf.mxu0
  %v925 = vadd.f32 0.0, %v924
  %v926 = vpop.f32.mrf.mxu0
  %v927 = vpop.f32.mrf.mxu0
  %v928 = vadd.f32 0.0, %v927
  %v929 = vpop.f32.mrf.mxu0
  %930 = vmatprep.mubr.bf16.mxu0 0
  %931 = vmatmul.mubr.bf16.gmra.mxu0 %v735
  %v932 = vpop.f32.mrf.mxu0
  %v933 = vadd.f32 0.0, %v932
  %v934 = vpop.f32.mrf.mxu0
  %v935 = vpop.f32.mrf.mxu0
  %v936 = vadd.f32 0.0, %v935
  %v937 = vpop.f32.mrf.mxu0
  %938 = vmatprep.mubr.bf16.mxu0 0
  %939 = vmatmul.mubr.bf16.gmra.mxu0 %v738
  %v940 = vpop.f32.mrf.mxu0
  %v941 = vadd.f32 0.0, %v940
  %v942 = vpop.f32.mrf.mxu0
  %v943 = vpop.f32.mrf.mxu0
  %v944 = vadd.f32 0.0, %v943
  %v945 = vpop.f32.mrf.mxu0
  %946 = vdwg.mxu0
  %v947 = vadd.f32 %v884, %v925
  %v948 = vadd.f32 %v885, %v928
  %v949 = vadd.f32 %v886, %v933
  %v950 = vadd.f32 %v887, %v936
  %v951 = vadd.f32 %v888, %v941
  %v952 = vadd.f32 %v889, %v944
  %v953 = vadd.f32 %v947, %v384
  %v954 = vadd.f32 %v948, %v384
  %v955 = vadd.f32 %v949, %v384
  %v956 = vadd.f32 %v950, %v384
  %v957 = vadd.f32 %v951, %v384
  %v958 = vadd.f32 %v952, %v384
  %s959 = scalar_lea.vmem %s10, 48
  %960 = vst.msk [vmem:[%s959] sm:$0xff] %vm392, %v953
  %961 = vst.msk [vmem:[%s959 + $0x8] sm:$0xff] %vm392, %v954
  %962 = vst.msk [vmem:[%s959 + $0x10] sm:$0xff] %vm392, %v955
  %963 = vst.msk [vmem:[%s959 + $0x18] sm:$0xff] %vm392, %v956
  %964 = vst.msk [vmem:[%s959 + $0x20] sm:$0xff] %vm392, %v957
  %965 = vst.msk [vmem:[%s959 + $0x28] sm:$0x1f] %vm398, %v958
  %v966 = vpack.c.bf16 %v954, %v953
  %v967 = vpack.c.bf16 %v956, %v955
  %v968 = vpack.c.bf16 %v958, %v957
  %v970 = vsel %vm392, %v966, 0
  %v973 = vsel %vm392, %v967, 0
  %v976 = vsel %vm392, %v968, 0
  %978 = vmatprep.subr.bf16.mxu0 0
  %979 = vmatpush1.bf16.msra.mxu0 0
  %980 = vmatprep.subr.bf16.mxu0 0
  %981 = vmatpush1.bf16.msra.mxu0 0
  %982 = vmatprep.subr.bf16.mxu0 0
  %983 = vmatpush1.bf16.msra.mxu0 0
  %984 = vmatprep.subr.bf16.mxu0 0
  %985 = vmatpush1.bf16.msra.mxu0 0
  %986 = vmatprep.subr.bf16.mxu0 0
  %987 = vmatpush1.bf16.msra.mxu0 0
  %988 = vmatprep.subr.bf16.mxu0 0
  %989 = vmatpush1.bf16.msra.mxu0 0
  %990 = vmatprep.subr.bf16.mxu0 0
  %991 = vmatpush1.bf16.msra.mxu0 0
  %992 = vmatprep.subr.bf16.mxu0 0
  %993 = vmatpush1.bf16.msra.mxu0 %v415
  %994 = vmatprep.subr.bf16.mxu0 0
  %995 = vmatpush2.bf16.msra.mxu0 0
  %996 = vmatprep.subr.bf16.mxu0 0
  %997 = vmatpush2.bf16.msra.mxu0 0
  %998 = vmatprep.subr.bf16.mxu0 0
  %999 = vmatpush2.bf16.msra.mxu0 0
  %1000 = vmatprep.subr.bf16.mxu0 0
  %1001 = vmatpush2.bf16.msra.mxu0 0
  %1002 = vmatprep.subr.bf16.mxu0 0
  %1003 = vmatpush2.bf16.msra.mxu0 0
  %1004 = vmatprep.subr.bf16.mxu0 0
  %1005 = vmatpush2.bf16.msra.mxu0 0
  %1006 = vmatprep.subr.bf16.mxu0 0
  %1007 = vmatpush2.bf16.msra.mxu0 0
  %1008 = vmatprep.subr.bf16.mxu0 0
  %1009 = vmatpush2.bf16.msra.mxu0 0
  %1010 = vmatprep.mubr.bf16.mxu0 0
  %1011 = vmatmul.mubr.bf16.gmra.mxu0 %v970
  %v1012 = vpop.f32.mrf.mxu0
  %v1013 = vadd.f32 0.0, %v1012
  %v1014 = vpop.f32.mrf.mxu0
  %v1015 = vpop.f32.mrf.mxu0
  %v1016 = vadd.f32 0.0, %v1015
  %v1017 = vpop.f32.mrf.mxu0
  %1018 = vmatprep.mubr.bf16.mxu0 0
  %1019 = vmatmul.mubr.bf16.gmra.mxu0 %v973
  %v1020 = vpop.f32.mrf.mxu0
  %v1021 = vadd.f32 0.0, %v1020
  %v1022 = vpop.f32.mrf.mxu0
  %v1023 = vpop.f32.mrf.mxu0
  %v1024 = vadd.f32 0.0, %v1023
  %v1025 = vpop.f32.mrf.mxu0
  %1026 = vmatprep.mubr.bf16.mxu0 0
  %1027 = vmatmul.mubr.bf16.gmra.mxu0 %v976
  %v1028 = vpop.f32.mrf.mxu0
  %v1029 = vadd.f32 0.0, %v1028
  %v1030 = vpop.f32.mrf.mxu0
  %v1031 = vpop.f32.mrf.mxu0
  %v1032 = vadd.f32 0.0, %v1031
  %v1033 = vpop.f32.mrf.mxu0
  %1034 = vdwg.mxu0
  %v1035 = vpack.c.bf16 %v1016, %v1013
  %v1036 = vpack.c.bf16 %v1024, %v1021
  %v1037 = vpack.c.bf16 %v1032, %v1029
  %1038 = vmatprep.subr.bf16.mxu0 0
  %1039 = vmatpush1.bf16.msra.mxu0 0
  %1040 = vmatprep.subr.bf16.mxu0 0
  %1041 = vmatpush1.bf16.msra.mxu0 0
  %1042 = vmatprep.subr.bf16.mxu0 0
  %1043 = vmatpush1.bf16.msra.mxu0 0
  %1044 = vmatprep.subr.bf16.mxu0 0
  %1045 = vmatpush1.bf16.msra.mxu0 0
  %1046 = vmatprep.subr.bf16.mxu0 0
  %1047 = vmatpush1.bf16.msra.mxu0 0
  %1048 = vmatprep.subr.bf16.mxu0 0
  %1049 = vmatpush1.bf16.msra.mxu0 0
  %1050 = vmatprep.subr.bf16.mxu0 0
  %1051 = vmatpush1.bf16.msra.mxu0 0
  %1052 = vmatprep.subr.bf16.mxu0 0
  %1053 = vmatpush1.bf16.msra.mxu0 %v478
  %1054 = vmatprep.subr.bf16.mxu0 0
  %1055 = vmatpush2.bf16.msra.mxu0 0
  %1056 = vmatprep.subr.bf16.mxu0 0
  %1057 = vmatpush2.bf16.msra.mxu0 0
  %1058 = vmatprep.subr.bf16.mxu0 0
  %1059 = vmatpush2.bf16.msra.mxu0 0
  %1060 = vmatprep.subr.bf16.mxu0 0
  %1061 = vmatpush2.bf16.msra.mxu0 0
  %1062 = vmatprep.subr.bf16.mxu0 0
  %1063 = vmatpush2.bf16.msra.mxu0 0
  %1064 = vmatprep.subr.bf16.mxu0 0
  %1065 = vmatpush2.bf16.msra.mxu0 0
  %1066 = vmatprep.subr.bf16.mxu0 0
  %1067 = vmatpush2.bf16.msra.mxu0 0
  %1068 = vmatprep.subr.bf16.mxu0 0
  %1069 = vmatpush2.bf16.msra.mxu0 0
  %1070 = vmatprep.mubr.bf16.mxu0 0
  %1071 = vmatmul.mubr.bf16.gmra.mxu0 %v970
  %v1072 = vpop.f32.mrf.mxu0
  %v1073 = vadd.f32 0.0, %v1072
  %v1074 = vpop.f32.mrf.mxu0
  %v1075 = vpop.f32.mrf.mxu0
  %v1076 = vadd.f32 0.0, %v1075
  %v1077 = vpop.f32.mrf.mxu0
  %1078 = vmatprep.mubr.bf16.mxu0 0
  %1079 = vmatmul.mubr.bf16.gmra.mxu0 %v973
  %v1080 = vpop.f32.mrf.mxu0
  %v1081 = vadd.f32 0.0, %v1080
  %v1082 = vpop.f32.mrf.mxu0
  %v1083 = vpop.f32.mrf.mxu0
  %v1084 = vadd.f32 0.0, %v1083
  %v1085 = vpop.f32.mrf.mxu0
  %1086 = vmatprep.mubr.bf16.mxu0 0
  %1087 = vmatmul.mubr.bf16.gmra.mxu0 %v976
  %v1088 = vpop.f32.mrf.mxu0
  %v1089 = vadd.f32 0.0, %v1088
  %v1090 = vpop.f32.mrf.mxu0
  %v1091 = vpop.f32.mrf.mxu0
  %v1092 = vadd.f32 0.0, %v1091
  %v1093 = vpop.f32.mrf.mxu0
  %1094 = vdwg.mxu0
  %v1101 = vunpack.c.l.b16 %v667
  %v1102 = vunpack.c.l.b16 %v668
  %v1103 = vunpack.c.l.b16 %v669
  %v1104 = vunpack.c.l.b16 %v670
  %v1105 = vunpack.c.l.b16 %v671
  %v1106 = vunpack.c.l.b16 %v672
  %v1107 = vpack.c.b16 %v1102, %v1101
  %v1108 = vpack.c.b16 %v1104, %v1103
  %v1109 = vpack.c.b16 %v1106, %v1105
  %v1111 = vsel %vm99, %v1107, 0
  %v1114 = vsel %vm99, %v1108, 0
  %v1117 = vsel %vm99, %v1109, 0
  %v1120 = vand.u32 %v1037, %v247
  %1122 = vmatprep.subr.bf16.mxu0 0
  %1123 = vmatpush1.bf16.msra.mxu0 0
  %1124 = vmatprep.subr.bf16.mxu0 0
  %1125 = vmatpush1.bf16.msra.mxu0 0
  %1126 = vmatprep.subr.bf16.mxu0 0
  %1127 = vmatpush1.bf16.msra.mxu0 0
  %1128 = vmatprep.subr.bf16.mxu0 0
  %1129 = vmatpush1.bf16.msra.mxu0 0
  %1130 = vmatprep.subr.bf16.mxu0 0
  %1131 = vmatpush1.bf16.msra.mxu0 0
  %1132 = vmatprep.subr.bf16.mxu0 0
  %1133 = vmatpush1.bf16.msra.mxu0 %v1120
  %1134 = vmatprep.subr.bf16.mxu0 0
  %1135 = vmatpush1.bf16.msra.mxu0 %v1036
  %1136 = vmatprep.subr.bf16.mxu0 0
  %1137 = vmatpush1.bf16.msra.mxu0 %v1035
  %1138 = vmatprep.subr.bf16.mxu0 0
  %1139 = vmatpush2.bf16.msra.mxu0 0
  %1140 = vmatprep.subr.bf16.mxu0 0
  %1141 = vmatpush2.bf16.msra.mxu0 0
  %1142 = vmatprep.subr.bf16.mxu0 0
  %1143 = vmatpush2.bf16.msra.mxu0 0
  %1144 = vmatprep.subr.bf16.mxu0 0
  %1145 = vmatpush2.bf16.msra.mxu0 0
  %1146 = vmatprep.subr.bf16.mxu0 0
  %1147 = vmatpush2.bf16.msra.mxu0 0
  %1148 = vmatprep.subr.bf16.mxu0 0
  %1149 = vmatpush2.bf16.msra.mxu0 0
  %1150 = vmatprep.subr.bf16.mxu0 0
  %1151 = vmatpush2.bf16.msra.mxu0 0
  %1152 = vmatprep.subr.bf16.mxu0 0
  %1153 = vmatpush2.bf16.msra.mxu0 0
  %1154 = vmatprep.mubr.bf16.mxu0 0
  %1155 = vmatmul.mubr.bf16.gmra.mxu0 %v1111
  %v1156 = vpop.f32.mrf.mxu0
  %v1157 = vadd.f32 %v1073, %v1156
  %v1158 = vpop.f32.mrf.mxu0
  %v1159 = vpop.f32.mrf.mxu0
  %v1160 = vadd.f32 %v1076, %v1159
  %v1161 = vpop.f32.mrf.mxu0
  %1162 = vmatprep.mubr.bf16.mxu0 0
  %1163 = vmatmul.mubr.bf16.gmra.mxu0 %v1114
  %v1164 = vpop.f32.mrf.mxu0
  %v1165 = vadd.f32 %v1081, %v1164
  %v1166 = vpop.f32.mrf.mxu0
  %v1167 = vpop.f32.mrf.mxu0
  %v1168 = vadd.f32 %v1084, %v1167
  %v1169 = vpop.f32.mrf.mxu0
  %1170 = vmatprep.mubr.bf16.mxu0 0
  %1171 = vmatmul.mubr.bf16.gmra.mxu0 %v1117
  %v1172 = vpop.f32.mrf.mxu0
  %v1173 = vadd.f32 %v1089, %v1172
  %v1174 = vpop.f32.mrf.mxu0
  %v1175 = vpop.f32.mrf.mxu0
  %v1176 = vadd.f32 %v1092, %v1175
  %v1177 = vpop.f32.mrf.mxu0
  %1178 = vdwg.mxu0
  %v1179 = vadd.f32 %v1157, %v625
  %v1180 = vadd.f32 %v1160, %v625
  %v1181 = vadd.f32 %v1165, %v625
  %v1182 = vadd.f32 %v1168, %v625
  %v1183 = vadd.f32 %v1173, %v625
  %v1184 = vadd.f32 %v1176, %v625
  %s1185 = scalar_lea.vmem %s11, 48
  %1186 = vst.msk [vmem:[%s1185] sm:$0xff] %vm392, %v1179
  %1187 = vst.msk [vmem:[%s1185 + $0x8] sm:$0xff] %vm392, %v1180
  %1188 = vst.msk [vmem:[%s1185 + $0x10] sm:$0xff] %vm392, %v1181
  %1189 = vst.msk [vmem:[%s1185 + $0x18] sm:$0xff] %vm392, %v1182
  %1190 = vst.msk [vmem:[%s1185 + $0x20] sm:$0xff] %vm392, %v1183
  %1191 = vst.msk [vmem:[%s1185 + $0x28] sm:$0x1f] %vm398, %v1184
  // Predicated region
  $region42: #{align_sage_forward.4} parent=0 // pred_check
    _
  $region43: #{align_sage_forward.4} parent=0 // pred_check_branch
    %1193 = sbr.rel (0) target = $region45
  $region44: #{align_sage_forward.4} parent=0 // pred_region
    _
  $region45: #{align_sage_forward.4} parent=0 // pred_fallthru
    _
  // Predicated region
  $region46: #{align_sage_forward.4} parent=0 // pred_check
    _
  $region47: #{align_sage_forward.4} parent=0 // pred_check_branch
    %1195 = sbr.rel (0) target = $region49
  $region48: #{align_sage_forward.4} parent=0 // pred_region
    _
  $region49: #{align_sage_forward.4} parent=0 // pred_fallthru
    _
  // Predicated region
  $region50: #{align_sage_forward.4} parent=0 // pred_check
    _
  $region51: #{align_sage_forward.4} parent=0 // pred_check_branch
    %1197 = sbr.rel (0) target = $region53
  $region52: #{align_sage_forward.4} parent=0 // pred_region
    _
  $region53: #{align_sage_forward.4} parent=0 // pred_fallthru
    _
  // Predicated region
  $region54: #{align_sage_forward.4} parent=0 // pred_check
    _
  $region55: #{align_sage_forward.4} parent=0 // pred_check_branch
    %1199 = sbr.rel (0) target = $region57
  $region56: #{align_sage_forward.4} parent=0 // pred_region
    _
  $region57: #{align_sage_forward.4} parent=0 // pred_fallthru
    _

// kernel: align_sage_forward.5
$region0: #{align_sage_forward.5}
  #allocation0 [shape = 'u32[]', space=smem, size = 0x4, offset = 0x4, fixed_abs, tag = 'smem constant byte address 0x4 - core index']
  #allocation1 [shape = 'u32[144,128]{1,0:T(1,128)}', space=vmem, size = 0x12000, scoped, tag = 'internal scratch']
  %s0 = inlined_call_operand.vmem [shape: f32[2,10], index: 0, kind: input, shape index: {}]
  %s1 = inlined_call_operand.vmem [shape: f32[10,100], index: 1, kind: input, shape index: {}]
  %s2 = inlined_call_operand.vmem [shape: f32[1,100], index: 2, kind: input, shape index: {}]
  %s3 = inlined_call_operand.vmem [shape: f32[100,3], index: 3, kind: input, shape index: {}]
  %s4 = inlined_call_operand.vmem [shape: f32[1,3], index: 4, kind: input, shape index: {}]
  %s5 = inlined_call_operand.hbm [shape: f32[2,3], index: 5, kind: output, shape index: {}]
  %s6 = sld [smem:[#allocation0]]
  $region30: #{align_sage_forward.5} parent=0
    _
  %s8 = ssub.s32 1, %s6
  %s9 = scalar_select 0, %s8, %s6
  $region1: #{align_sage_forward.5} parent=0
    #allocation2 [shape = 'u8[1024]{0}', space=vmem, size = 0x400, scoped, tag = 'output window, operand 0, single buffered']
    #allocation3 [shape = 's32[1]{0}', space=sflag, size = 0x4, scoped, tag = 'scoped memory for align_sage_forward.5']
    %10 = vsyncpa [#allocation3], 0
    // Predicated region
    $region2: #{align_sage_forward.5} parent=1 // pred_check
      _
    $region3: #{align_sage_forward.5} parent=1 // pred_check_branch
      %12 = sbr.rel (0) target = $region5
    $region4: #{align_sage_forward.5} parent=1 // pred_region
      _
    $region5: #{align_sage_forward.5} parent=1 // pred_fallthru
      _
    // Predicated region
    $region6: #{align_sage_forward.5} parent=1 // pred_check
      _
    $region7: #{align_sage_forward.5} parent=1 // pred_check_branch
      %14 = sbr.rel (0) target = $region9
    $region8: #{align_sage_forward.5} parent=1 // pred_region
      _
    $region9: #{align_sage_forward.5} parent=1 // pred_fallthru
      _
    // Predicated region
    $region10: #{align_sage_forward.5} parent=1 // pred_check
      _
    $region11: #{align_sage_forward.5} parent=1 // pred_check_branch
      %16 = sbr.rel (0) target = $region13
    $region12: #{align_sage_forward.5} parent=1 // pred_region
      _
    $region13: #{align_sage_forward.5} parent=1 // pred_fallthru
      _
    // Predicated region
    $region14: #{align_sage_forward.5} parent=1 // pred_check
      _
    $region15: #{align_sage_forward.5} parent=1 // pred_check_branch
      %18 = sbr.rel (0) target = $region17
    $region16: #{align_sage_forward.5} parent=1 // pred_region
      _
    $region17: #{align_sage_forward.5} parent=1 // pred_fallthru
      _
    // Predicated region
    $region18: #{align_sage_forward.5} parent=1 // pred_check
      _
    $region19: #{align_sage_forward.5} parent=1 // pred_check_branch
      %20 = sbr.rel (0) target = $region21
    $region20: #{align_sage_forward.5} parent=1 // pred_region
      _
    $region21: #{align_sage_forward.5} parent=1 // pred_fallthru
      _
    %v21 = vld [vmem:[%s0] sm:$0x3]
    %v22 = vld [vmem:[%s1] sm:$0xff]
    %v23 = vld [vmem:[%s1 + $0x8] sm:$0x3]
    %v24 = vld [vmem:[%s2] sm:$0x1]
    %v26 = vlaneseq
    %v27 = vshrl.u32 %v26, 7
    %v28 = vsub.s32 0, %v27
    %v29 = vrot.slane %v24, %v28
    %vm31 = vcmask 80896
    %v33 = vsel %vm31, %v21, 0
    %vm35 = vcmask 1041408
    %v37 = vsel %vm35, %v23, 0
    %39 = vmatprep.subr.mxu0 0.0
    %40 = vmatpush1.msra.mxu0 0.0
    %41 = vmatprep.subr.mxu0 0.0
    %42 = vmatpush1.msra.mxu0 0.0
    %43 = vmatprep.subr.mxu0 0.0
    %44 = vmatpush1.msra.mxu0 0.0
    %45 = vmatprep.subr.mxu0 0.0
    %46 = vmatpush1.msra.mxu0 0.0
    %47 = vmatprep.subr.mxu0 0.0
    %48 = vmatpush1.msra.mxu0 0.0
    %49 = vmatprep.subr.mxu0 0.0
    %50 = vmatpush1.msra.mxu0 0.0
    %51 = vmatprep.subr.mxu0 0.0
    %52 = vmatpush1.msra.mxu0 0.0
    %53 = vmatprep.subr.mxu0 0.0
    %54 = vmatpush1.msra.mxu0 0.0
    %55 = vmatprep.subr.mxu0 0.0
    %56 = vmatpush1.msra.mxu0 0.0
    %57 = vmatprep.subr.mxu0 0.0
    %58 = vmatpush1.msra.mxu0 0.0
    %59 = vmatprep.subr.mxu0 0.0
    %60 = vmatpush1.msra.mxu0 0.0
    %61 = vmatprep.subr.mxu0 0.0
    %62 = vmatpush1.msra.mxu0 0.0
    %63 = vmatprep.subr.mxu0 0.0
    %64 = vmatpush1.msra.mxu0 0.0
    %65 = vmatprep.subr.mxu0 0.0
    %66 = vmatpush1.msra.mxu0 0.0
    %67 = vmatprep.subr.mxu0 0.0
    %68 = vmatpush1.msra.mxu0 %v37
    %69 = vmatprep.subr.mxu0 0.0
    %70 = vmatpush1.msra.mxu0 %v22
    %71 = vmatprep.subr.mxu0 0.0
    %72 = vmatpush2.msra.mxu0 0.0
    %73 = vmatprep.subr.mxu0 0.0
    %74 = vmatpush2.msra.mxu0 0.0
    %75 = vmatprep.subr.mxu0 0.0
    %76 = vmatpush2.msra.mxu0 0.0
    %77 = vmatprep.subr.mxu0 0.0
    %78 = vmatpush2.msra.mxu0 0.0
    %79 = vmatprep.subr.mxu0 0.0
    %80 = vmatpush2.msra.mxu0 0.0
    %81 = vmatprep.subr.mxu0 0.0
    %82 = vmatpush2.msra.mxu0 0.0
    %83 = vmatprep.subr.mxu0 0.0
    %84 = vmatpush2.msra.mxu0 0.0
    %85 = vmatprep.subr.mxu0 0.0
    %86 = vmatpush2.msra.mxu0 0.0
    %87 = vmatprep.subr.mxu0 0.0
    %88 = vmatpush2.msra.mxu0 0.0
    %89 = vmatprep.subr.mxu0 0.0
    %90 = vmatpush2.msra.mxu0 0.0
    %91 = vmatprep.subr.mxu0 0.0
    %92 = vmatpush2.msra.mxu0 0.0
    %93 = vmatprep.subr.mxu0 0.0
    %94 = vmatpush2.msra.mxu0 0.0
    %95 = vmatprep.subr.mxu0 0.0
    %96 = vmatpush2.msra.mxu0 0.0
    %97 = vmatprep.subr.mxu0 0.0
    %98 = vmatpush2.msra.mxu0 0.0
    %99 = vmatprep.subr.mxu0 0.0
    %100 = vmatpush2.msra.mxu0 0.0
    %101 = vmatprep.subr.mxu0 0.0
    %102 = vmatpush2.msra.mxu0 0.0
    %103 = vmatprep.mubr.f32.mxu0 0.0
    %104 = vmatmul.mubr.f32.gmra.mxu0 %v33
    %v105 = vpop.f32.mrf.mxu0
    %v106 = vadd.f32 %v29, %v105
    %v107 = vpop.f32.mrf.mxu0
    %108 = vdwg.mxu0
    %v109 = vmax.f32 %v106, 0.0
    %v110 = vld [vmem:[%s3] sm:$0xff]
    %v111 = vld [vmem:[%s3 + $0x8] sm:$0xff]
    %v112 = vld [vmem:[%s3 + $0x10] sm:$0xff]
    %v113 = vld [vmem:[%s3 + $0x18] sm:$0xff]
    %v114 = vld [vmem:[%s3 + $0x20] sm:$0xff]
    %v115 = vld [vmem:[%s3 + $0x28] sm:$0xff]
    %v116 = vld [vmem:[%s3 + $0x30] sm:$0xff]
    %v117 = vld [vmem:[%s3 + $0x38] sm:$0xff]
    %v118 = vld [vmem:[%s3 + $0x40] sm:$0xff]
    %v119 = vld [vmem:[%s3 + $0x48] sm:$0xff]
    %v120 = vld [vmem:[%s3 + $0x50] sm:$0xff]
    %v121 = vld [vmem:[%s3 + $0x58] sm:$0xff]
    %v122 = vld [vmem:[%s3 + $0x60] sm:$0xf]
    %v123 = vld [vmem:[%s4] sm:$0x1]
    %v125 = vlaneseq
    %v126 = vshrl.u32 %v125, 7
    %v127 = vsub.s32 0, %v126
    %v128 = vrot.slane %v123, %v127
    %vm130 = vcmask 818176
    %v132 = vsel %vm130, %v109, 0
    %vm134 = vcmask 1043456
    %v136 = vsel %vm134, %v122, 0
    %138 = vmatprep.subr.mxu0 0.0
    %139 = vmatpush1.msra.mxu0 0.0
    %140 = vmatprep.subr.mxu0 0.0
    %141 = vmatpush1.msra.mxu0 0.0
    %142 = vmatprep.subr.mxu0 0.0
    %143 = vmatpush1.msra.mxu0 0.0
    %144 = vmatprep.subr.mxu0 0.0
    %145 = vmatpush1.msra.mxu0 %v136
    %146 = vmatprep.subr.mxu0 0.0
    %147 = vmatpush1.msra.mxu0 %v121
    %148 = vmatprep.subr.mxu0 0.0
    %149 = vmatpush1.msra.mxu0 %v120
    %150 = vmatprep.subr.mxu0 0.0
    %151 = vmatpush1.msra.mxu0 %v119
    %152 = vmatprep.subr.mxu0 0.0
    %153 = vmatpush1.msra.mxu0 %v118
    %154 = vmatprep.subr.mxu0 0.0
    %155 = vmatpush1.msra.mxu0 %v117
    %156 = vmatprep.subr.mxu0 0.0
    %157 = vmatpush1.msra.mxu0 %v116
    %158 = vmatprep.subr.mxu0 0.0
    %159 = vmatpush1.msra.mxu0 %v115
    %160 = vmatprep.subr.mxu0 0.0
    %161 = vmatpush1.msra.mxu0 %v114
    %162 = vmatprep.subr.mxu0 0.0
    %163 = vmatpush1.msra.mxu0 %v113
    %164 = vmatprep.subr.mxu0 0.0
    %165 = vmatpush1.msra.mxu0 %v112
    %166 = vmatprep.subr.mxu0 0.0
    %167 = vmatpush1.msra.mxu0 %v111
    %168 = vmatprep.subr.mxu0 0.0
    %169 = vmatpush1.msra.mxu0 %v110
    %170 = vmatprep.subr.mxu0 0.0
    %171 = vmatpush2.msra.mxu0 0.0
    %172 = vmatprep.subr.mxu0 0.0
    %173 = vmatpush2.msra.mxu0 0.0
    %174 = vmatprep.subr.mxu0 0.0
    %175 = vmatpush2.msra.mxu0 0.0
    %176 = vmatprep.subr.mxu0 0.0
    %177 = vmatpush2.msra.mxu0 0.0
    %178 = vmatprep.subr.mxu0 0.0
    %179 = vmatpush2.msra.mxu0 0.0
    %180 = vmatprep.subr.mxu0 0.0
    %181 = vmatpush2.msra.mxu0 0.0
    %182 = vmatprep.subr.mxu0 0.0
    %183 = vmatpush2.msra.mxu0 0.0
    %184 = vmatprep.subr.mxu0 0.0
    %185 = vmatpush2.msra.mxu0 0.0
    %186 = vmatprep.subr.mxu0 0.0
    %187 = vmatpush2.msra.mxu0 0.0
    %188 = vmatprep.subr.mxu0 0.0
    %189 = vmatpush2.msra.mxu0 0.0
    %190 = vmatprep.subr.mxu0 0.0
    %191 = vmatpush2.msra.mxu0 0.0
    %192 = vmatprep.subr.mxu0 0.0
    %193 = vmatpush2.msra.mxu0 0.0
    %194 = vmatprep.subr.mxu0 0.0
    %195 = vmatpush2.msra.mxu0 0.0
    %196 = vmatprep.subr.mxu0 0.0
    %197 = vmatpush2.msra.mxu0 0.0
    %198 = vmatprep.subr.mxu0 0.0
    %199 = vmatpush2.msra.mxu0 0.0
    %200 = vmatprep.subr.mxu0 0.0
    %201 = vmatpush2.msra.mxu0 0.0
    %202 = vmatprep.mubr.f32.mxu0 0.0
    %203 = vmatmul.mubr.f32.gmra.mxu0 %v132
    %v204 = vpop.f32.mrf.mxu0
    %v205 = vadd.f32 %v128, %v204
    %v206 = vpop.f32.mrf.mxu0
    %207 = vdwg.mxu0
    %v208 = vmax.f32 %v205, 0.0
    %vm209 = vcmask 17408
    %210 = vst.msk [vmem:[#allocation2] sm:$0x3] %vm209, %v208
    // Predicated region
    $region22: #{align_sage_forward.5} parent=1 // pred_check
      _
    $region23: #{align_sage_forward.5} parent=1 // pred_check_branch
      %212 = sbr.rel (0) target = $region25
    $region24: #{align_sage_forward.5} parent=1 // pred_region
      %s214 = ssub.s32 32, 32
      %215 = vsyncadd [#allocation3], %s214
      %s217 = sshll.u32 [#allocation2], 4
      %s218 = int_to_ptr.vmem [resolvable:$true] %s217
      %220 = dma.vmem_to_hbm [thread:$0]  %s218, 32, %s5, [#allocation3]
    $region25: #{align_sage_forward.5} parent=1 // pred_fallthru
      _
    // Predicated region
    $region26: #{align_sage_forward.5} parent=1 // pred_check
      _
    $region27: #{align_sage_forward.5} parent=1 // pred_check_branch
      %222 = sbr.rel (0) target = $region29
    $region28: #{align_sage_forward.5} parent=1 // pred_region
      %223 = dma.done [#allocation3], 32
    $region29: #{align_sage_forward.5} parent=1 // pred_fallthru
      _
    %224 = vsyncpa [#allocation3], 1

</llo_original>
